<compile_context>
chip_gen: v5e
topology: v5e:2x2
jax: 0.10.0
libtpu: 0.0.40
codegen_flags: <defaults>
</compile_context>

<pallas_src>
import functools

import numpy as np
import jax
import jax.numpy as jnp
from jax import lax
from jax.experimental import pallas as pl
from jax.experimental.pallas import tpu as pltpu


# ----------------------------------------------------------------------------
# Helpers (all plain JAX / numpy, trace-time only)
# ----------------------------------------------------------------------------
def _conv_out(h, k, s, p):
    return (h + 2 * p - k) // s + 1


def _im2col_first(x, kh, kw, stride, padding):
    """x: [N, C, H, W] -> patches [K, N*Ho*Wo]; K ordered (c, i, j) (matches a
    flattened OIHW weight), columns ordered (n, oh, ow) n-major.  Runs once on
    the tiny network input; all later layers form patches in-kernel."""
    n, c, h, w = x.shape
    xp = jnp.pad(x, ((0, 0), (0, 0), (padding, padding), (padding, padding)))
    ho = _conv_out(h, kh, stride, padding)
    wo = _conv_out(w, kw, stride, padding)
    cols = []
    for i in range(kh):
        for j in range(kw):
            cols.append(xp[:, :,
                           i:i + (ho - 1) * stride + 1:stride,
                           j:j + (wo - 1) * stride + 1:stride])   # [n,c,ho,wo]
    p = jnp.stack(cols, axis=2)                    # [n, c, kh*kw, ho, wo]
    p = p.reshape(n, c * kh * kw, ho * wo)         # [n, K, M]
    p = jnp.transpose(p, (1, 0, 2)).reshape(c * kh * kw, n * ho * wo)
    return p, ho, wo


def _build_tap_selection(n, h, w, kh, kw, stride, padding):
    """Constant 0/1 matrix S: [n*h*w, kh*kw * n*ho*wo].  Column block t=(i*kw+j)
    maps flattened input positions (n, ih, iw) to output positions (n, oh, ow)
    for kernel tap (i, j); out-of-range taps (zero padding) stay all-zero, so
    padding is handled for free.  Built once with numpy (compile-time const)."""
    ho = _conv_out(h, kh, stride, padding)
    wo = _conv_out(w, kw, stride, padding)
    m_in, m_out = n * h * w, n * ho * wo
    s = np.zeros((m_in, kh * kw, m_out), np.float32)
    for b in range(n):
        for oh in range(ho):
            for ow in range(wo):
                col = b * ho * wo + oh * wo + ow
                for i in range(kh):
                    for j in range(kw):
                        ih = oh * stride + i - padding
                        iw = ow * stride + j - padding
                        if 0 <= ih < h and 0 <= iw < w:
                            s[b * h * w + ih * w + iw, i * kw + j, col] = 1.0
    return s.reshape(m_in, kh * kw * m_out), ho, wo, m_out


# ----------------------------------------------------------------------------
# Single fused Pallas kernel: 4 conv layers + LeakyReLU + (-out).mean()
# ----------------------------------------------------------------------------
def _fused_patchgan_kernel(p1_ref, w1_ref, b1_ref,
                           s2_ref, w2_ref, b2_ref,
                           s3_ref, w3_ref, b3_ref,
                           s4_ref, w4_ref, b4_ref,
                           o_ref, *, m_outs, inv_count, negative_slope):
    def leaky(a):
        return jnp.where(a >= 0, a, negative_slope * a)

    def tap_conv(a_f32, s_ref, w_ref, m_out):
        """conv via in-kernel patch formation:
             P  = bf16(A) @ S            -> [C_in, kh*kw * m_out]   (one MXU pass)
             out = sum_t W_t @ P_t       -> [C_out, m_out]          (f32 accum)"""
        p = jnp.dot(a_f32.astype(jnp.bfloat16), s_ref[...],
                    preferred_element_type=jnp.float32)
        n_taps, c_out, _ = w_ref.shape
        acc = jnp.zeros((c_out, m_out), jnp.float32)
        for t in range(n_taps):                      # static, unrolled
            pt = p[:, t * m_out:(t + 1) * m_out].astype(jnp.bfloat16)
            acc = acc + jnp.dot(w_ref[t], pt, preferred_element_type=jnp.float32)
        return acc

    # Layer 1: wrapper-built patches, single lane-dense matmul ([16,128]x[128,128]).
    a = jnp.dot(w1_ref[...], p1_ref[...], preferred_element_type=jnp.float32)
    a = leaky(a + b1_ref[...])
    # Layers 2-3: patches formed in-kernel, bias + LeakyReLU epilogue in f32.
    a = leaky(tap_conv(a, s2_ref, w2_ref, m_outs[0]) + b2_ref[...])
    a = leaky(tap_conv(a, s3_ref, w3_ref, m_outs[1]) + b3_ref[...])
    # Layer 4 (C_out == 1, no activation), fused with (-out).mean().
    a = tap_conv(a, s4_ref, w4_ref, m_outs[2])       # [1, N*Ho*Wo], no padding
    # mean(conv + b) == mean(conv) + b  (C_out == 1); negate at the end.
    o_ref[0, 0] = -(jnp.sum(a) * inv_count + b4_ref[0, 0])


# ----------------------------------------------------------------------------
# PatchDiscriminator (scaled-down pix2pix-style) + PatchGan loss
# ----------------------------------------------------------------------------
# (c_in, c_out, kernel, stride, padding, leaky_relu?)
_ARCH = [
    (8, 16, 4, 2, 1, True),
    (16, 32, 4, 2, 1, True),
    (32, 64, 4, 1, 1, True),
    (64, 1, 4, 1, 1, False),
]


def init_patch_discriminator_params(key):
    params = []
    for (cin, cout, kk, s, p, act) in _ARCH:
        key, wk = jax.random.split(key)
        w = 0.02 * jax.random.normal(wk, (cout, cin, kk, kk), jnp.float32)
        b = jnp.zeros((cout,), jnp.float32)
        params.append((w, b, s, p, act))
    return params


def patchgan_loss(x, y, params):
    data = jnp.concatenate((x, y), axis=1).astype(jnp.bfloat16)   # [N, Cx+Cy, H, W]
    n = data.shape[0]
    (w1, b1, st1, pd1, _), (w2, b2, st2, pd2, _), \
        (w3, b3, st3, pd3, _), (w4, b4, st4, pd4, _) = params

    # Layer-1 patches (only remaining wrapper-side glue, runs on the raw input).
    patches1, ho1, wo1 = _im2col_first(data, w1.shape[2], w1.shape[3], st1, pd1)
    w1_2d = w1.reshape(w1.shape[0], -1).astype(jnp.bfloat16)

    # Constant tap-selection matrices for the in-kernel layers (numpy, tiny).
    sel2, ho2, wo2, m2 = _build_tap_selection(n, ho1, wo1, w2.shape[2], w2.shape[3], st2, pd2)
    sel3, ho3, wo3, m3 = _build_tap_selection(n, ho2, wo2, w3.shape[2], w3.shape[3], st3, pd3)
    sel4, ho4, wo4, m4 = _build_tap_selection(n, ho3, wo3, w4.shape[2], w4.shape[3], st4, pd4)

    def tap_weights(w):  # [C_out, C_in, kh, kw] -> [kh*kw, C_out, C_in] bf16
        co, ci, kh_, kw_ = w.shape
        return jnp.transpose(w, (2, 3, 0, 1)).reshape(kh_ * kw_, co, ci).astype(jnp.bfloat16)

    inv_count = 1.0 / float(n * w4.shape[0] * ho4 * wo4)   # true global element count

    kernel = functools.partial(_fused_patchgan_kernel, m_outs=(m2, m3, m4),
                               inv_count=inv_count, negative_slope=0.2)
    vmem = pl.BlockSpec(memory_space=pltpu.MemorySpace.VMEM)
    smem = pl.BlockSpec(memory_space=pltpu.MemorySpace.SMEM)

    out = pl.pallas_call(
        kernel,
        out_shape=jax.ShapeDtypeStruct((1, 1), jnp.float32),
        in_specs=[vmem] * 11 + [smem],      # all arrays whole-in-VMEM; b4 scalar in SMEM
        out_specs=smem,
    )(patches1, w1_2d, b1.reshape(-1, 1).astype(jnp.float32),
      jnp.asarray(sel2, jnp.bfloat16), tap_weights(w2), b2.reshape(-1, 1).astype(jnp.float32),
      jnp.asarray(sel3, jnp.bfloat16), tap_weights(w3), b3.reshape(-1, 1).astype(jnp.float32),
      jnp.asarray(sel4, jnp.bfloat16), tap_weights(w4), b4.reshape(1, 1).astype(jnp.float32))
    return out[0, 0]


# ----------------------------------------------------------------------------
# Plain-XLA reference with identical dtypes (for a self-check)
# ----------------------------------------------------------------------------
def reference_loss(x, y, params):
    h = jnp.concatenate((x, y), axis=1).astype(jnp.bfloat16)
    for (w, b, s, p, act) in params:
        out = lax.conv_general_dilated(
            h, w.astype(jnp.bfloat16), (s, s), [(p, p), (p, p)],
            dimension_numbers=('NCHW', 'OIHW', 'NCHW'),
            preferred_element_type=jnp.float32)
        out = out + b.reshape(1, -1, 1, 1)
        if act:
            h = jnp.where(out >= 0, out, 0.2 * out).astype(jnp.bfloat16)
        else:
            h = out
    return jnp.mean(-h)


# ----------------------------------------------------------------------------
if __name__ == "__main__":
    key = jax.random.PRNGKey(0)
    kx, ky, kp = jax.random.split(key, 3)
    x = jax.random.normal(kx, (2, 4, 16, 16), jnp.float32)
    y = jax.random.normal(ky, (2, 4, 16, 16), jnp.float32)
    params = init_patch_discriminator_params(kp)

    loss_fn = jax.jit(lambda a, b: patchgan_loss(a, b, params))
    loss = loss_fn(x, y)
    jax.block_until_ready(loss)
    assert loss.shape == () and loss.dtype == jnp.float32

    ref = jax.jit(lambda a, b: reference_loss(a, b, params))(x, y)
    jax.block_until_ready(ref)
    lv, rv = float(loss), float(ref)
    assert abs(lv - rv) < 1e-4 + 1e-3 * abs(rv), (lv, rv)

    print("KERNEL_OK")
</pallas_src>

<mosaic_0001>
module attributes {stable_mosaic.version = 11 : i64} {
  func.func @_fused_patchgan_kernel(%arg0: memref<128x128xbf16, #tpu.memory_space<vmem>>, %arg1: memref<16x128xbf16, #tpu.memory_space<vmem>>, %arg2: memref<16x1xf32, #tpu.memory_space<vmem>>, %arg3: memref<128x512xbf16, #tpu.memory_space<vmem>>, %arg4: memref<16x32x16xbf16, #tpu.memory_space<vmem>>, %arg5: memref<32x1xf32, #tpu.memory_space<vmem>>, %arg6: memref<32x288xbf16, #tpu.memory_space<vmem>>, %arg7: memref<16x64x32xbf16, #tpu.memory_space<vmem>>, %arg8: memref<64x1xf32, #tpu.memory_space<vmem>>, %arg9: memref<18x128xbf16, #tpu.memory_space<vmem>>, %arg10: memref<16x1x64xbf16, #tpu.memory_space<vmem>>, %arg11: memref<1x1xf32, #tpu.memory_space<smem>>, %arg12: memref<1x1xf32, #tpu.memory_space<smem>>) attributes {dimension_semantics = [], scalar_prefetch = 0 : i64, scratch_operands = 0 : i64, tpu.core_type = #tpu.core_type<tc>} {
    %c0 = arith.constant 0 : index
    %c0_0 = arith.constant 0 : index
    %0 = vector.load %arg1[%c0, %c0_0] : memref<16x128xbf16, #tpu.memory_space<vmem>>, vector<16x128xbf16>
    %c0_1 = arith.constant 0 : index
    %c0_2 = arith.constant 0 : index
    %1 = vector.load %arg0[%c0_1, %c0_2] : memref<128x128xbf16, #tpu.memory_space<vmem>>, vector<128x128xbf16>
    %cst = arith.constant dense<0.000000e+00> : vector<16x128xf32>
    %2 = tpu.matmul %0, %1, %cst {dimension_numbers = #tpu.dot_dimension_numbers<[1], [0], [0], [1], [0, 0, 1, 1], [], []>} : vector<16x128xbf16>, vector<128x128xbf16>, vector<16x128xf32> -> vector<16x128xf32>
    %c0_3 = arith.constant 0 : index
    %c0_4 = arith.constant 0 : index
    %3 = vector.load %arg2[%c0_3, %c0_4] : memref<16x1xf32, #tpu.memory_space<vmem>>, vector<16x1xf32>
    %4 = vector.broadcast %3 : vector<16x1xf32> to vector<16x128xf32>
    %5 = arith.addf %2, %4 : vector<16x128xf32>
    %cst_5 = arith.constant 0.000000e+00 : f32
    %6 = vector.broadcast %cst_5 : f32 to vector<16x128xf32>
    %7 = arith.cmpf oge, %5, %6 : vector<16x128xf32>
    %cst_6 = arith.constant 2.000000e-01 : f32
    %8 = vector.broadcast %cst_6 : f32 to vector<16x128xf32>
    %9 = arith.mulf %8, %5 : vector<16x128xf32>
    %10 = arith.select %7, %5, %9 : vector<16x128xi1>, vector<16x128xf32>
    %11 = arith.truncf %10 : vector<16x128xf32> to vector<16x128xbf16>
    %c0_7 = arith.constant 0 : index
    %c0_8 = arith.constant 0 : index
    %12 = vector.load %arg3[%c0_7, %c0_8] : memref<128x512xbf16, #tpu.memory_space<vmem>>, vector<128x512xbf16>
    %cst_9 = arith.constant dense<0.000000e+00> : vector<16x512xf32>
    %13 = tpu.matmul %11, %12, %cst_9 {dimension_numbers = #tpu.dot_dimension_numbers<[1], [0], [0], [1], [0, 0, 1, 1], [], []>} : vector<16x128xbf16>, vector<128x512xbf16>, vector<16x512xf32> -> vector<16x512xf32>
    %cst_10 = arith.constant 0.000000e+00 : f32
    %14 = vector.broadcast %cst_10 : f32 to vector<32x32xf32>
    %15 = vector.extract_strided_slice %13 {offsets = [0, 0], sizes = [16, 32], strides = [1, 1]} : vector<16x512xf32> to vector<16x32xf32>
    %16 = arith.truncf %15 : vector<16x32xf32> to vector<16x32xbf16>
    %c0_11 = arith.constant 0 : index
    %c0_12 = arith.constant 0 : index
    %c0_13 = arith.constant 0 : index
    %17 = vector.load %arg4[%c0_11, %c0_12, %c0_13] : memref<16x32x16xbf16, #tpu.memory_space<vmem>>, vector<1x32x16xbf16>
    %18 = vector.shape_cast %17 : vector<1x32x16xbf16> to vector<32x16xbf16>
    %cst_14 = arith.constant dense<0.000000e+00> : vector<32x32xf32>
    %19 = tpu.matmul %18, %16, %cst_14 {dimension_numbers = #tpu.dot_dimension_numbers<[1], [0], [0], [1], [0, 0, 1, 1], [], []>} : vector<32x16xbf16>, vector<16x32xbf16>, vector<32x32xf32> -> vector<32x32xf32>
    %20 = arith.addf %14, %19 : vector<32x32xf32>
    %21 = vector.extract_strided_slice %13 {offsets = [0, 32], sizes = [16, 32], strides = [1, 1]} : vector<16x512xf32> to vector<16x32xf32>
    %22 = arith.truncf %21 : vector<16x32xf32> to vector<16x32xbf16>
    %c1 = arith.constant 1 : index
    %c0_15 = arith.constant 0 : index
    %c0_16 = arith.constant 0 : index
    %23 = vector.load %arg4[%c1, %c0_15, %c0_16] : memref<16x32x16xbf16, #tpu.memory_space<vmem>>, vector<1x32x16xbf16>
    %24 = vector.shape_cast %23 : vector<1x32x16xbf16> to vector<32x16xbf16>
    %cst_17 = arith.constant dense<0.000000e+00> : vector<32x32xf32>
    %25 = tpu.matmul %24, %22, %cst_17 {dimension_numbers = #tpu.dot_dimension_numbers<[1], [0], [0], [1], [0, 0, 1, 1], [], []>} : vector<32x16xbf16>, vector<16x32xbf16>, vector<32x32xf32> -> vector<32x32xf32>
    %26 = arith.addf %20, %25 : vector<32x32xf32>
    %27 = vector.extract_strided_slice %13 {offsets = [0, 64], sizes = [16, 32], strides = [1, 1]} : vector<16x512xf32> to vector<16x32xf32>
    %28 = arith.truncf %27 : vector<16x32xf32> to vector<16x32xbf16>
    %c2 = arith.constant 2 : index
    %c0_18 = arith.constant 0 : index
    %c0_19 = arith.constant 0 : index
    %29 = vector.load %arg4[%c2, %c0_18, %c0_19] : memref<16x32x16xbf16, #tpu.memory_space<vmem>>, vector<1x32x16xbf16>
    %30 = vector.shape_cast %29 : vector<1x32x16xbf16> to vector<32x16xbf16>
    %cst_20 = arith.constant dense<0.000000e+00> : vector<32x32xf32>
    %31 = tpu.matmul %30, %28, %cst_20 {dimension_numbers = #tpu.dot_dimension_numbers<[1], [0], [0], [1], [0, 0, 1, 1], [], []>} : vector<32x16xbf16>, vector<16x32xbf16>, vector<32x32xf32> -> vector<32x32xf32>
    %32 = arith.addf %26, %31 : vector<32x32xf32>
    %33 = vector.extract_strided_slice %13 {offsets = [0, 96], sizes = [16, 32], strides = [1, 1]} : vector<16x512xf32> to vector<16x32xf32>
    %34 = arith.truncf %33 : vector<16x32xf32> to vector<16x32xbf16>
    %c3 = arith.constant 3 : index
    %c0_21 = arith.constant 0 : index
    %c0_22 = arith.constant 0 : index
    %35 = vector.load %arg4[%c3, %c0_21, %c0_22] : memref<16x32x16xbf16, #tpu.memory_space<vmem>>, vector<1x32x16xbf16>
    %36 = vector.shape_cast %35 : vector<1x32x16xbf16> to vector<32x16xbf16>
    %cst_23 = arith.constant dense<0.000000e+00> : vector<32x32xf32>
    %37 = tpu.matmul %36, %34, %cst_23 {dimension_numbers = #tpu.dot_dimension_numbers<[1], [0], [0], [1], [0, 0, 1, 1], [], []>} : vector<32x16xbf16>, vector<16x32xbf16>, vector<32x32xf32> -> vector<32x32xf32>
    %38 = arith.addf %32, %37 : vector<32x32xf32>
    %39 = vector.extract_strided_slice %13 {offsets = [0, 128], sizes = [16, 32], strides = [1, 1]} : vector<16x512xf32> to vector<16x32xf32>
    %40 = arith.truncf %39 : vector<16x32xf32> to vector<16x32xbf16>
    %c4 = arith.constant 4 : index
    %c0_24 = arith.constant 0 : index
    %c0_25 = arith.constant 0 : index
    %41 = vector.load %arg4[%c4, %c0_24, %c0_25] : memref<16x32x16xbf16, #tpu.memory_space<vmem>>, vector<1x32x16xbf16>
    %42 = vector.shape_cast %41 : vector<1x32x16xbf16> to vector<32x16xbf16>
    %cst_26 = arith.constant dense<0.000000e+00> : vector<32x32xf32>
    %43 = tpu.matmul %42, %40, %cst_26 {dimension_numbers = #tpu.dot_dimension_numbers<[1], [0], [0], [1], [0, 0, 1, 1], [], []>} : vector<32x16xbf16>, vector<16x32xbf16>, vector<32x32xf32> -> vector<32x32xf32>
    %44 = arith.addf %38, %43 : vector<32x32xf32>
    %45 = vector.extract_strided_slice %13 {offsets = [0, 160], sizes = [16, 32], strides = [1, 1]} : vector<16x512xf32> to vector<16x32xf32>
    %46 = arith.truncf %45 : vector<16x32xf32> to vector<16x32xbf16>
    %c5 = arith.constant 5 : index
    %c0_27 = arith.constant 0 : index
    %c0_28 = arith.constant 0 : index
    %47 = vector.load %arg4[%c5, %c0_27, %c0_28] : memref<16x32x16xbf16, #tpu.memory_space<vmem>>, vector<1x32x16xbf16>
    %48 = vector.shape_cast %47 : vector<1x32x16xbf16> to vector<32x16xbf16>
    %cst_29 = arith.constant dense<0.000000e+00> : vector<32x32xf32>
    %49 = tpu.matmul %48, %46, %cst_29 {dimension_numbers = #tpu.dot_dimension_numbers<[1], [0], [0], [1], [0, 0, 1, 1], [], []>} : vector<32x16xbf16>, vector<16x32xbf16>, vector<32x32xf32> -> vector<32x32xf32>
    %50 = arith.addf %44, %49 : vector<32x32xf32>
    %51 = vector.extract_strided_slice %13 {offsets = [0, 192], sizes = [16, 32], strides = [1, 1]} : vector<16x512xf32> to vector<16x32xf32>
    %52 = arith.truncf %51 : vector<16x32xf32> to vector<16x32xbf16>
    %c6 = arith.constant 6 : index
    %c0_30 = arith.constant 0 : index
    %c0_31 = arith.constant 0 : index
    %53 = vector.load %arg4[%c6, %c0_30, %c0_31] : memref<16x32x16xbf16, #tpu.memory_space<vmem>>, vector<1x32x16xbf16>
    %54 = vector.shape_cast %53 : vector<1x32x16xbf16> to vector<32x16xbf16>
    %cst_32 = arith.constant dense<0.000000e+00> : vector<32x32xf32>
    %55 = tpu.matmul %54, %52, %cst_32 {dimension_numbers = #tpu.dot_dimension_numbers<[1], [0], [0], [1], [0, 0, 1, 1], [], []>} : vector<32x16xbf16>, vector<16x32xbf16>, vector<32x32xf32> -> vector<32x32xf32>
    %56 = arith.addf %50, %55 : vector<32x32xf32>
    %57 = vector.extract_strided_slice %13 {offsets = [0, 224], sizes = [16, 32], strides = [1, 1]} : vector<16x512xf32> to vector<16x32xf32>
    %58 = arith.truncf %57 : vector<16x32xf32> to vector<16x32xbf16>
    %c7 = arith.constant 7 : index
    %c0_33 = arith.constant 0 : index
    %c0_34 = arith.constant 0 : index
    %59 = vector.load %arg4[%c7, %c0_33, %c0_34] : memref<16x32x16xbf16, #tpu.memory_space<vmem>>, vector<1x32x16xbf16>
    %60 = vector.shape_cast %59 : vector<1x32x16xbf16> to vector<32x16xbf16>
    %cst_35 = arith.constant dense<0.000000e+00> : vector<32x32xf32>
    %61 = tpu.matmul %60, %58, %cst_35 {dimension_numbers = #tpu.dot_dimension_numbers<[1], [0], [0], [1], [0, 0, 1, 1], [], []>} : vector<32x16xbf16>, vector<16x32xbf16>, vector<32x32xf32> -> vector<32x32xf32>
    %62 = arith.addf %56, %61 : vector<32x32xf32>
    %63 = vector.extract_strided_slice %13 {offsets = [0, 256], sizes = [16, 32], strides = [1, 1]} : vector<16x512xf32> to vector<16x32xf32>
    %64 = arith.truncf %63 : vector<16x32xf32> to vector<16x32xbf16>
    %c8 = arith.constant 8 : index
    %c0_36 = arith.constant 0 : index
    %c0_37 = arith.constant 0 : index
    %65 = vector.load %arg4[%c8, %c0_36, %c0_37] : memref<16x32x16xbf16, #tpu.memory_space<vmem>>, vector<1x32x16xbf16>
    %66 = vector.shape_cast %65 : vector<1x32x16xbf16> to vector<32x16xbf16>
    %cst_38 = arith.constant dense<0.000000e+00> : vector<32x32xf32>
    %67 = tpu.matmul %66, %64, %cst_38 {dimension_numbers = #tpu.dot_dimension_numbers<[1], [0], [0], [1], [0, 0, 1, 1], [], []>} : vector<32x16xbf16>, vector<16x32xbf16>, vector<32x32xf32> -> vector<32x32xf32>
    %68 = arith.addf %62, %67 : vector<32x32xf32>
    %69 = vector.extract_strided_slice %13 {offsets = [0, 288], sizes = [16, 32], strides = [1, 1]} : vector<16x512xf32> to vector<16x32xf32>
    %70 = arith.truncf %69 : vector<16x32xf32> to vector<16x32xbf16>
    %c9 = arith.constant 9 : index
    %c0_39 = arith.constant 0 : index
    %c0_40 = arith.constant 0 : index
    %71 = vector.load %arg4[%c9, %c0_39, %c0_40] : memref<16x32x16xbf16, #tpu.memory_space<vmem>>, vector<1x32x16xbf16>
    %72 = vector.shape_cast %71 : vector<1x32x16xbf16> to vector<32x16xbf16>
    %cst_41 = arith.constant dense<0.000000e+00> : vector<32x32xf32>
    %73 = tpu.matmul %72, %70, %cst_41 {dimension_numbers = #tpu.dot_dimension_numbers<[1], [0], [0], [1], [0, 0, 1, 1], [], []>} : vector<32x16xbf16>, vector<16x32xbf16>, vector<32x32xf32> -> vector<32x32xf32>
    %74 = arith.addf %68, %73 : vector<32x32xf32>
    %75 = vector.extract_strided_slice %13 {offsets = [0, 320], sizes = [16, 32], strides = [1, 1]} : vector<16x512xf32> to vector<16x32xf32>
    %76 = arith.truncf %75 : vector<16x32xf32> to vector<16x32xbf16>
    %c10 = arith.constant 10 : index
    %c0_42 = arith.constant 0 : index
    %c0_43 = arith.constant 0 : index
    %77 = vector.load %arg4[%c10, %c0_42, %c0_43] : memref<16x32x16xbf16, #tpu.memory_space<vmem>>, vector<1x32x16xbf16>
    %78 = vector.shape_cast %77 : vector<1x32x16xbf16> to vector<32x16xbf16>
    %cst_44 = arith.constant dense<0.000000e+00> : vector<32x32xf32>
    %79 = tpu.matmul %78, %76, %cst_44 {dimension_numbers = #tpu.dot_dimension_numbers<[1], [0], [0], [1], [0, 0, 1, 1], [], []>} : vector<32x16xbf16>, vector<16x32xbf16>, vector<32x32xf32> -> vector<32x32xf32>
    %80 = arith.addf %74, %79 : vector<32x32xf32>
    %81 = vector.extract_strided_slice %13 {offsets = [0, 352], sizes = [16, 32], strides = [1, 1]} : vector<16x512xf32> to vector<16x32xf32>
    %82 = arith.truncf %81 : vector<16x32xf32> to vector<16x32xbf16>
    %c11 = arith.constant 11 : index
    %c0_45 = arith.constant 0 : index
    %c0_46 = arith.constant 0 : index
    %83 = vector.load %arg4[%c11, %c0_45, %c0_46] : memref<16x32x16xbf16, #tpu.memory_space<vmem>>, vector<1x32x16xbf16>
    %84 = vector.shape_cast %83 : vector<1x32x16xbf16> to vector<32x16xbf16>
    %cst_47 = arith.constant dense<0.000000e+00> : vector<32x32xf32>
    %85 = tpu.matmul %84, %82, %cst_47 {dimension_numbers = #tpu.dot_dimension_numbers<[1], [0], [0], [1], [0, 0, 1, 1], [], []>} : vector<32x16xbf16>, vector<16x32xbf16>, vector<32x32xf32> -> vector<32x32xf32>
    %86 = arith.addf %80, %85 : vector<32x32xf32>
    %87 = vector.extract_strided_slice %13 {offsets = [0, 384], sizes = [16, 32], strides = [1, 1]} : vector<16x512xf32> to vector<16x32xf32>
    %88 = arith.truncf %87 : vector<16x32xf32> to vector<16x32xbf16>
    %c12 = arith.constant 12 : index
    %c0_48 = arith.constant 0 : index
    %c0_49 = arith.constant 0 : index
    %89 = vector.load %arg4[%c12, %c0_48, %c0_49] : memref<16x32x16xbf16, #tpu.memory_space<vmem>>, vector<1x32x16xbf16>
    %90 = vector.shape_cast %89 : vector<1x32x16xbf16> to vector<32x16xbf16>
    %cst_50 = arith.constant dense<0.000000e+00> : vector<32x32xf32>
    %91 = tpu.matmul %90, %88, %cst_50 {dimension_numbers = #tpu.dot_dimension_numbers<[1], [0], [0], [1], [0, 0, 1, 1], [], []>} : vector<32x16xbf16>, vector<16x32xbf16>, vector<32x32xf32> -> vector<32x32xf32>
    %92 = arith.addf %86, %91 : vector<32x32xf32>
    %93 = vector.extract_strided_slice %13 {offsets = [0, 416], sizes = [16, 32], strides = [1, 1]} : vector<16x512xf32> to vector<16x32xf32>
    %94 = arith.truncf %93 : vector<16x32xf32> to vector<16x32xbf16>
    %c13 = arith.constant 13 : index
    %c0_51 = arith.constant 0 : index
    %c0_52 = arith.constant 0 : index
    %95 = vector.load %arg4[%c13, %c0_51, %c0_52] : memref<16x32x16xbf16, #tpu.memory_space<vmem>>, vector<1x32x16xbf16>
    %96 = vector.shape_cast %95 : vector<1x32x16xbf16> to vector<32x16xbf16>
    %cst_53 = arith.constant dense<0.000000e+00> : vector<32x32xf32>
    %97 = tpu.matmul %96, %94, %cst_53 {dimension_numbers = #tpu.dot_dimension_numbers<[1], [0], [0], [1], [0, 0, 1, 1], [], []>} : vector<32x16xbf16>, vector<16x32xbf16>, vector<32x32xf32> -> vector<32x32xf32>
    %98 = arith.addf %92, %97 : vector<32x32xf32>
    %99 = vector.extract_strided_slice %13 {offsets = [0, 448], sizes = [16, 32], strides = [1, 1]} : vector<16x512xf32> to vector<16x32xf32>
    %100 = arith.truncf %99 : vector<16x32xf32> to vector<16x32xbf16>
    %c14 = arith.constant 14 : index
    %c0_54 = arith.constant 0 : index
    %c0_55 = arith.constant 0 : index
    %101 = vector.load %arg4[%c14, %c0_54, %c0_55] : memref<16x32x16xbf16, #tpu.memory_space<vmem>>, vector<1x32x16xbf16>
    %102 = vector.shape_cast %101 : vector<1x32x16xbf16> to vector<32x16xbf16>
    %cst_56 = arith.constant dense<0.000000e+00> : vector<32x32xf32>
    %103 = tpu.matmul %102, %100, %cst_56 {dimension_numbers = #tpu.dot_dimension_numbers<[1], [0], [0], [1], [0, 0, 1, 1], [], []>} : vector<32x16xbf16>, vector<16x32xbf16>, vector<32x32xf32> -> vector<32x32xf32>
    %104 = arith.addf %98, %103 : vector<32x32xf32>
    %105 = vector.extract_strided_slice %13 {offsets = [0, 480], sizes = [16, 32], strides = [1, 1]} : vector<16x512xf32> to vector<16x32xf32>
    %106 = arith.truncf %105 : vector<16x32xf32> to vector<16x32xbf16>
    %c15 = arith.constant 15 : index
    %c0_57 = arith.constant 0 : index
    %c0_58 = arith.constant 0 : index
    %107 = vector.load %arg4[%c15, %c0_57, %c0_58] : memref<16x32x16xbf16, #tpu.memory_space<vmem>>, vector<1x32x16xbf16>
    %108 = vector.shape_cast %107 : vector<1x32x16xbf16> to vector<32x16xbf16>
    %cst_59 = arith.constant dense<0.000000e+00> : vector<32x32xf32>
    %109 = tpu.matmul %108, %106, %cst_59 {dimension_numbers = #tpu.dot_dimension_numbers<[1], [0], [0], [1], [0, 0, 1, 1], [], []>} : vector<32x16xbf16>, vector<16x32xbf16>, vector<32x32xf32> -> vector<32x32xf32>
    %110 = arith.addf %104, %109 : vector<32x32xf32>
    %c0_60 = arith.constant 0 : index
    %c0_61 = arith.constant 0 : index
    %111 = vector.load %arg5[%c0_60, %c0_61] : memref<32x1xf32, #tpu.memory_space<vmem>>, vector<32x1xf32>
    %112 = vector.broadcast %111 : vector<32x1xf32> to vector<32x32xf32>
    %113 = arith.addf %110, %112 : vector<32x32xf32>
    %cst_62 = arith.constant 0.000000e+00 : f32
    %114 = vector.broadcast %cst_62 : f32 to vector<32x32xf32>
    %115 = arith.cmpf oge, %113, %114 : vector<32x32xf32>
    %cst_63 = arith.constant 2.000000e-01 : f32
    %116 = vector.broadcast %cst_63 : f32 to vector<32x32xf32>
    %117 = arith.mulf %116, %113 : vector<32x32xf32>
    %118 = arith.select %115, %113, %117 : vector<32x32xi1>, vector<32x32xf32>
    %119 = arith.truncf %118 : vector<32x32xf32> to vector<32x32xbf16>
    %c0_64 = arith.constant 0 : index
    %c0_65 = arith.constant 0 : index
    %120 = vector.load %arg6[%c0_64, %c0_65] : memref<32x288xbf16, #tpu.memory_space<vmem>>, vector<32x288xbf16>
    %cst_66 = arith.constant dense<0.000000e+00> : vector<32x288xf32>
    %121 = tpu.matmul %119, %120, %cst_66 {dimension_numbers = #tpu.dot_dimension_numbers<[1], [0], [0], [1], [0, 0, 1, 1], [], []>} : vector<32x32xbf16>, vector<32x288xbf16>, vector<32x288xf32> -> vector<32x288xf32>
    %cst_67 = arith.constant 0.000000e+00 : f32
    %122 = vector.broadcast %cst_67 : f32 to vector<64x18xf32>
    %123 = vector.extract_strided_slice %121 {offsets = [0, 0], sizes = [32, 18], strides = [1, 1]} : vector<32x288xf32> to vector<32x18xf32>
    %124 = arith.truncf %123 : vector<32x18xf32> to vector<32x18xbf16>
    %c0_68 = arith.constant 0 : index
    %c0_69 = arith.constant 0 : index
    %c0_70 = arith.constant 0 : index
    %125 = vector.load %arg7[%c0_68, %c0_69, %c0_70] : memref<16x64x32xbf16, #tpu.memory_space<vmem>>, vector<1x64x32xbf16>
    %126 = vector.shape_cast %125 : vector<1x64x32xbf16> to vector<64x32xbf16>
    %cst_71 = arith.constant dense<0.000000e+00> : vector<64x18xf32>
    %127 = tpu.matmul %126, %124, %cst_71 {dimension_numbers = #tpu.dot_dimension_numbers<[1], [0], [0], [1], [0, 0, 1, 1], [], []>} : vector<64x32xbf16>, vector<32x18xbf16>, vector<64x18xf32> -> vector<64x18xf32>
    %128 = arith.addf %122, %127 : vector<64x18xf32>
    %129 = vector.extract_strided_slice %121 {offsets = [0, 18], sizes = [32, 18], strides = [1, 1]} : vector<32x288xf32> to vector<32x18xf32>
    %130 = arith.truncf %129 : vector<32x18xf32> to vector<32x18xbf16>
    %c1_72 = arith.constant 1 : index
    %c0_73 = arith.constant 0 : index
    %c0_74 = arith.constant 0 : index
    %131 = vector.load %arg7[%c1_72, %c0_73, %c0_74] : memref<16x64x32xbf16, #tpu.memory_space<vmem>>, vector<1x64x32xbf16>
    %132 = vector.shape_cast %131 : vector<1x64x32xbf16> to vector<64x32xbf16>
    %cst_75 = arith.constant dense<0.000000e+00> : vector<64x18xf32>
    %133 = tpu.matmul %132, %130, %cst_75 {dimension_numbers = #tpu.dot_dimension_numbers<[1], [0], [0], [1], [0, 0, 1, 1], [], []>} : vector<64x32xbf16>, vector<32x18xbf16>, vector<64x18xf32> -> vector<64x18xf32>
    %134 = arith.addf %128, %133 : vector<64x18xf32>
    %135 = vector.extract_strided_slice %121 {offsets = [0, 36], sizes = [32, 18], strides = [1, 1]} : vector<32x288xf32> to vector<32x18xf32>
    %136 = arith.truncf %135 : vector<32x18xf32> to vector<32x18xbf16>
    %c2_76 = arith.constant 2 : index
    %c0_77 = arith.constant 0 : index
    %c0_78 = arith.constant 0 : index
    %137 = vector.load %arg7[%c2_76, %c0_77, %c0_78] : memref<16x64x32xbf16, #tpu.memory_space<vmem>>, vector<1x64x32xbf16>
    %138 = vector.shape_cast %137 : vector<1x64x32xbf16> to vector<64x32xbf16>
    %cst_79 = arith.constant dense<0.000000e+00> : vector<64x18xf32>
    %139 = tpu.matmul %138, %136, %cst_79 {dimension_numbers = #tpu.dot_dimension_numbers<[1], [0], [0], [1], [0, 0, 1, 1], [], []>} : vector<64x32xbf16>, vector<32x18xbf16>, vector<64x18xf32> -> vector<64x18xf32>
    %140 = arith.addf %134, %139 : vector<64x18xf32>
    %141 = vector.extract_strided_slice %121 {offsets = [0, 54], sizes = [32, 18], strides = [1, 1]} : vector<32x288xf32> to vector<32x18xf32>
    %142 = arith.truncf %141 : vector<32x18xf32> to vector<32x18xbf16>
    %c3_80 = arith.constant 3 : index
    %c0_81 = arith.constant 0 : index
    %c0_82 = arith.constant 0 : index
    %143 = vector.load %arg7[%c3_80, %c0_81, %c0_82] : memref<16x64x32xbf16, #tpu.memory_space<vmem>>, vector<1x64x32xbf16>
    %144 = vector.shape_cast %143 : vector<1x64x32xbf16> to vector<64x32xbf16>
    %cst_83 = arith.constant dense<0.000000e+00> : vector<64x18xf32>
    %145 = tpu.matmul %144, %142, %cst_83 {dimension_numbers = #tpu.dot_dimension_numbers<[1], [0], [0], [1], [0, 0, 1, 1], [], []>} : vector<64x32xbf16>, vector<32x18xbf16>, vector<64x18xf32> -> vector<64x18xf32>
    %146 = arith.addf %140, %145 : vector<64x18xf32>
    %147 = vector.extract_strided_slice %121 {offsets = [0, 72], sizes = [32, 18], strides = [1, 1]} : vector<32x288xf32> to vector<32x18xf32>
    %148 = arith.truncf %147 : vector<32x18xf32> to vector<32x18xbf16>
    %c4_84 = arith.constant 4 : index
    %c0_85 = arith.constant 0 : index
    %c0_86 = arith.constant 0 : index
    %149 = vector.load %arg7[%c4_84, %c0_85, %c0_86] : memref<16x64x32xbf16, #tpu.memory_space<vmem>>, vector<1x64x32xbf16>
    %150 = vector.shape_cast %149 : vector<1x64x32xbf16> to vector<64x32xbf16>
    %cst_87 = arith.constant dense<0.000000e+00> : vector<64x18xf32>
    %151 = tpu.matmul %150, %148, %cst_87 {dimension_numbers = #tpu.dot_dimension_numbers<[1], [0], [0], [1], [0, 0, 1, 1], [], []>} : vector<64x32xbf16>, vector<32x18xbf16>, vector<64x18xf32> -> vector<64x18xf32>
    %152 = arith.addf %146, %151 : vector<64x18xf32>
    %153 = vector.extract_strided_slice %121 {offsets = [0, 90], sizes = [32, 18], strides = [1, 1]} : vector<32x288xf32> to vector<32x18xf32>
    %154 = arith.truncf %153 : vector<32x18xf32> to vector<32x18xbf16>
    %c5_88 = arith.constant 5 : index
    %c0_89 = arith.constant 0 : index
    %c0_90 = arith.constant 0 : index
    %155 = vector.load %arg7[%c5_88, %c0_89, %c0_90] : memref<16x64x32xbf16, #tpu.memory_space<vmem>>, vector<1x64x32xbf16>
    %156 = vector.shape_cast %155 : vector<1x64x32xbf16> to vector<64x32xbf16>
    %cst_91 = arith.constant dense<0.000000e+00> : vector<64x18xf32>
    %157 = tpu.matmul %156, %154, %cst_91 {dimension_numbers = #tpu.dot_dimension_numbers<[1], [0], [0], [1], [0, 0, 1, 1], [], []>} : vector<64x32xbf16>, vector<32x18xbf16>, vector<64x18xf32> -> vector<64x18xf32>
    %158 = arith.addf %152, %157 : vector<64x18xf32>
    %159 = vector.extract_strided_slice %121 {offsets = [0, 108], sizes = [32, 18], strides = [1, 1]} : vector<32x288xf32> to vector<32x18xf32>
    %160 = arith.truncf %159 : vector<32x18xf32> to vector<32x18xbf16>
    %c6_92 = arith.constant 6 : index
    %c0_93 = arith.constant 0 : index
    %c0_94 = arith.constant 0 : index
    %161 = vector.load %arg7[%c6_92, %c0_93, %c0_94] : memref<16x64x32xbf16, #tpu.memory_space<vmem>>, vector<1x64x32xbf16>
    %162 = vector.shape_cast %161 : vector<1x64x32xbf16> to vector<64x32xbf16>
    %cst_95 = arith.constant dense<0.000000e+00> : vector<64x18xf32>
    %163 = tpu.matmul %162, %160, %cst_95 {dimension_numbers = #tpu.dot_dimension_numbers<[1], [0], [0], [1], [0, 0, 1, 1], [], []>} : vector<64x32xbf16>, vector<32x18xbf16>, vector<64x18xf32> -> vector<64x18xf32>
    %164 = arith.addf %158, %163 : vector<64x18xf32>
    %165 = vector.extract_strided_slice %121 {offsets = [0, 126], sizes = [32, 18], strides = [1, 1]} : vector<32x288xf32> to vector<32x18xf32>
    %166 = arith.truncf %165 : vector<32x18xf32> to vector<32x18xbf16>
    %c7_96 = arith.constant 7 : index
    %c0_97 = arith.constant 0 : index
    %c0_98 = arith.constant 0 : index
    %167 = vector.load %arg7[%c7_96, %c0_97, %c0_98] : memref<16x64x32xbf16, #tpu.memory_space<vmem>>, vector<1x64x32xbf16>
    %168 = vector.shape_cast %167 : vector<1x64x32xbf16> to vector<64x32xbf16>
    %cst_99 = arith.constant dense<0.000000e+00> : vector<64x18xf32>
    %169 = tpu.matmul %168, %166, %cst_99 {dimension_numbers = #tpu.dot_dimension_numbers<[1], [0], [0], [1], [0, 0, 1, 1], [], []>} : vector<64x32xbf16>, vector<32x18xbf16>, vector<64x18xf32> -> vector<64x18xf32>
    %170 = arith.addf %164, %169 : vector<64x18xf32>
    %171 = vector.extract_strided_slice %121 {offsets = [0, 144], sizes = [32, 18], strides = [1, 1]} : vector<32x288xf32> to vector<32x18xf32>
    %172 = arith.truncf %171 : vector<32x18xf32> to vector<32x18xbf16>
    %c8_100 = arith.constant 8 : index
    %c0_101 = arith.constant 0 : index
    %c0_102 = arith.constant 0 : index
    %173 = vector.load %arg7[%c8_100, %c0_101, %c0_102] : memref<16x64x32xbf16, #tpu.memory_space<vmem>>, vector<1x64x32xbf16>
    %174 = vector.shape_cast %173 : vector<1x64x32xbf16> to vector<64x32xbf16>
    %cst_103 = arith.constant dense<0.000000e+00> : vector<64x18xf32>
    %175 = tpu.matmul %174, %172, %cst_103 {dimension_numbers = #tpu.dot_dimension_numbers<[1], [0], [0], [1], [0, 0, 1, 1], [], []>} : vector<64x32xbf16>, vector<32x18xbf16>, vector<64x18xf32> -> vector<64x18xf32>
    %176 = arith.addf %170, %175 : vector<64x18xf32>
    %177 = vector.extract_strided_slice %121 {offsets = [0, 162], sizes = [32, 18], strides = [1, 1]} : vector<32x288xf32> to vector<32x18xf32>
    %178 = arith.truncf %177 : vector<32x18xf32> to vector<32x18xbf16>
    %c9_104 = arith.constant 9 : index
    %c0_105 = arith.constant 0 : index
    %c0_106 = arith.constant 0 : index
    %179 = vector.load %arg7[%c9_104, %c0_105, %c0_106] : memref<16x64x32xbf16, #tpu.memory_space<vmem>>, vector<1x64x32xbf16>
    %180 = vector.shape_cast %179 : vector<1x64x32xbf16> to vector<64x32xbf16>
    %cst_107 = arith.constant dense<0.000000e+00> : vector<64x18xf32>
    %181 = tpu.matmul %180, %178, %cst_107 {dimension_numbers = #tpu.dot_dimension_numbers<[1], [0], [0], [1], [0, 0, 1, 1], [], []>} : vector<64x32xbf16>, vector<32x18xbf16>, vector<64x18xf32> -> vector<64x18xf32>
    %182 = arith.addf %176, %181 : vector<64x18xf32>
    %183 = vector.extract_strided_slice %121 {offsets = [0, 180], sizes = [32, 18], strides = [1, 1]} : vector<32x288xf32> to vector<32x18xf32>
    %184 = arith.truncf %183 : vector<32x18xf32> to vector<32x18xbf16>
    %c10_108 = arith.constant 10 : index
    %c0_109 = arith.constant 0 : index
    %c0_110 = arith.constant 0 : index
    %185 = vector.load %arg7[%c10_108, %c0_109, %c0_110] : memref<16x64x32xbf16, #tpu.memory_space<vmem>>, vector<1x64x32xbf16>
    %186 = vector.shape_cast %185 : vector<1x64x32xbf16> to vector<64x32xbf16>
    %cst_111 = arith.constant dense<0.000000e+00> : vector<64x18xf32>
    %187 = tpu.matmul %186, %184, %cst_111 {dimension_numbers = #tpu.dot_dimension_numbers<[1], [0], [0], [1], [0, 0, 1, 1], [], []>} : vector<64x32xbf16>, vector<32x18xbf16>, vector<64x18xf32> -> vector<64x18xf32>
    %188 = arith.addf %182, %187 : vector<64x18xf32>
    %189 = vector.extract_strided_slice %121 {offsets = [0, 198], sizes = [32, 18], strides = [1, 1]} : vector<32x288xf32> to vector<32x18xf32>
    %190 = arith.truncf %189 : vector<32x18xf32> to vector<32x18xbf16>
    %c11_112 = arith.constant 11 : index
    %c0_113 = arith.constant 0 : index
    %c0_114 = arith.constant 0 : index
    %191 = vector.load %arg7[%c11_112, %c0_113, %c0_114] : memref<16x64x32xbf16, #tpu.memory_space<vmem>>, vector<1x64x32xbf16>
    %192 = vector.shape_cast %191 : vector<1x64x32xbf16> to vector<64x32xbf16>
    %cst_115 = arith.constant dense<0.000000e+00> : vector<64x18xf32>
    %193 = tpu.matmul %192, %190, %cst_115 {dimension_numbers = #tpu.dot_dimension_numbers<[1], [0], [0], [1], [0, 0, 1, 1], [], []>} : vector<64x32xbf16>, vector<32x18xbf16>, vector<64x18xf32> -> vector<64x18xf32>
    %194 = arith.addf %188, %193 : vector<64x18xf32>
    %195 = vector.extract_strided_slice %121 {offsets = [0, 216], sizes = [32, 18], strides = [1, 1]} : vector<32x288xf32> to vector<32x18xf32>
    %196 = arith.truncf %195 : vector<32x18xf32> to vector<32x18xbf16>
    %c12_116 = arith.constant 12 : index
    %c0_117 = arith.constant 0 : index
    %c0_118 = arith.constant 0 : index
    %197 = vector.load %arg7[%c12_116, %c0_117, %c0_118] : memref<16x64x32xbf16, #tpu.memory_space<vmem>>, vector<1x64x32xbf16>
    %198 = vector.shape_cast %197 : vector<1x64x32xbf16> to vector<64x32xbf16>
    %cst_119 = arith.constant dense<0.000000e+00> : vector<64x18xf32>
    %199 = tpu.matmul %198, %196, %cst_119 {dimension_numbers = #tpu.dot_dimension_numbers<[1], [0], [0], [1], [0, 0, 1, 1], [], []>} : vector<64x32xbf16>, vector<32x18xbf16>, vector<64x18xf32> -> vector<64x18xf32>
    %200 = arith.addf %194, %199 : vector<64x18xf32>
    %201 = vector.extract_strided_slice %121 {offsets = [0, 234], sizes = [32, 18], strides = [1, 1]} : vector<32x288xf32> to vector<32x18xf32>
    %202 = arith.truncf %201 : vector<32x18xf32> to vector<32x18xbf16>
    %c13_120 = arith.constant 13 : index
    %c0_121 = arith.constant 0 : index
    %c0_122 = arith.constant 0 : index
    %203 = vector.load %arg7[%c13_120, %c0_121, %c0_122] : memref<16x64x32xbf16, #tpu.memory_space<vmem>>, vector<1x64x32xbf16>
    %204 = vector.shape_cast %203 : vector<1x64x32xbf16> to vector<64x32xbf16>
    %cst_123 = arith.constant dense<0.000000e+00> : vector<64x18xf32>
    %205 = tpu.matmul %204, %202, %cst_123 {dimension_numbers = #tpu.dot_dimension_numbers<[1], [0], [0], [1], [0, 0, 1, 1], [], []>} : vector<64x32xbf16>, vector<32x18xbf16>, vector<64x18xf32> -> vector<64x18xf32>
    %206 = arith.addf %200, %205 : vector<64x18xf32>
    %207 = vector.extract_strided_slice %121 {offsets = [0, 252], sizes = [32, 18], strides = [1, 1]} : vector<32x288xf32> to vector<32x18xf32>
    %208 = arith.truncf %207 : vector<32x18xf32> to vector<32x18xbf16>
    %c14_124 = arith.constant 14 : index
    %c0_125 = arith.constant 0 : index
    %c0_126 = arith.constant 0 : index
    %209 = vector.load %arg7[%c14_124, %c0_125, %c0_126] : memref<16x64x32xbf16, #tpu.memory_space<vmem>>, vector<1x64x32xbf16>
    %210 = vector.shape_cast %209 : vector<1x64x32xbf16> to vector<64x32xbf16>
    %cst_127 = arith.constant dense<0.000000e+00> : vector<64x18xf32>
    %211 = tpu.matmul %210, %208, %cst_127 {dimension_numbers = #tpu.dot_dimension_numbers<[1], [0], [0], [1], [0, 0, 1, 1], [], []>} : vector<64x32xbf16>, vector<32x18xbf16>, vector<64x18xf32> -> vector<64x18xf32>
    %212 = arith.addf %206, %211 : vector<64x18xf32>
    %213 = vector.extract_strided_slice %121 {offsets = [0, 270], sizes = [32, 18], strides = [1, 1]} : vector<32x288xf32> to vector<32x18xf32>
    %214 = arith.truncf %213 : vector<32x18xf32> to vector<32x18xbf16>
    %c15_128 = arith.constant 15 : index
    %c0_129 = arith.constant 0 : index
    %c0_130 = arith.constant 0 : index
    %215 = vector.load %arg7[%c15_128, %c0_129, %c0_130] : memref<16x64x32xbf16, #tpu.memory_space<vmem>>, vector<1x64x32xbf16>
    %216 = vector.shape_cast %215 : vector<1x64x32xbf16> to vector<64x32xbf16>
    %cst_131 = arith.constant dense<0.000000e+00> : vector<64x18xf32>
    %217 = tpu.matmul %216, %214, %cst_131 {dimension_numbers = #tpu.dot_dimension_numbers<[1], [0], [0], [1], [0, 0, 1, 1], [], []>} : vector<64x32xbf16>, vector<32x18xbf16>, vector<64x18xf32> -> vector<64x18xf32>
    %218 = arith.addf %212, %217 : vector<64x18xf32>
    %c0_132 = arith.constant 0 : index
    %c0_133 = arith.constant 0 : index
    %219 = vector.load %arg8[%c0_132, %c0_133] : memref<64x1xf32, #tpu.memory_space<vmem>>, vector<64x1xf32>
    %220 = vector.broadcast %219 : vector<64x1xf32> to vector<64x18xf32>
    %221 = arith.addf %218, %220 : vector<64x18xf32>
    %cst_134 = arith.constant 0.000000e+00 : f32
    %222 = vector.broadcast %cst_134 : f32 to vector<64x18xf32>
    %223 = arith.cmpf oge, %221, %222 : vector<64x18xf32>
    %cst_135 = arith.constant 2.000000e-01 : f32
    %224 = vector.broadcast %cst_135 : f32 to vector<64x18xf32>
    %225 = arith.mulf %224, %221 : vector<64x18xf32>
    %226 = arith.select %223, %221, %225 : vector<64x18xi1>, vector<64x18xf32>
    %227 = arith.truncf %226 : vector<64x18xf32> to vector<64x18xbf16>
    %c0_136 = arith.constant 0 : index
    %c0_137 = arith.constant 0 : index
    %228 = vector.load %arg9[%c0_136, %c0_137] : memref<18x128xbf16, #tpu.memory_space<vmem>>, vector<18x128xbf16>
    %cst_138 = arith.constant dense<0.000000e+00> : vector<64x128xf32>
    %229 = tpu.matmul %227, %228, %cst_138 {dimension_numbers = #tpu.dot_dimension_numbers<[1], [0], [0], [1], [0, 0, 1, 1], [], []>} : vector<64x18xbf16>, vector<18x128xbf16>, vector<64x128xf32> -> vector<64x128xf32>
    %cst_139 = arith.constant 0.000000e+00 : f32
    %230 = vector.broadcast %cst_139 : f32 to vector<1x8xf32>
    %231 = vector.extract_strided_slice %229 {offsets = [0, 0], sizes = [64, 8], strides = [1, 1]} : vector<64x128xf32> to vector<64x8xf32>
    %232 = arith.truncf %231 : vector<64x8xf32> to vector<64x8xbf16>
    %c0_140 = arith.constant 0 : index
    %c0_141 = arith.constant 0 : index
    %c0_142 = arith.constant 0 : index
    %233 = vector.load %arg10[%c0_140, %c0_141, %c0_142] : memref<16x1x64xbf16, #tpu.memory_space<vmem>>, vector<1x1x64xbf16>
    %234 = vector.shape_cast %233 : vector<1x1x64xbf16> to vector<1x64xbf16>
    %cst_143 = arith.constant dense<0.000000e+00> : vector<1x8xf32>
    %235 = tpu.matmul %234, %232, %cst_143 {dimension_numbers = #tpu.dot_dimension_numbers<[1], [0], [0], [1], [0, 0, 1, 1], [], []>} : vector<1x64xbf16>, vector<64x8xbf16>, vector<1x8xf32> -> vector<1x8xf32>
    %236 = arith.addf %230, %235 : vector<1x8xf32>
    %237 = vector.extract_strided_slice %229 {offsets = [0, 8], sizes = [64, 8], strides = [1, 1]} : vector<64x128xf32> to vector<64x8xf32>
    %238 = arith.truncf %237 : vector<64x8xf32> to vector<64x8xbf16>
    %c1_144 = arith.constant 1 : index
    %c0_145 = arith.constant 0 : index
    %c0_146 = arith.constant 0 : index
    %239 = vector.load %arg10[%c1_144, %c0_145, %c0_146] : memref<16x1x64xbf16, #tpu.memory_space<vmem>>, vector<1x1x64xbf16>
    %240 = vector.shape_cast %239 : vector<1x1x64xbf16> to vector<1x64xbf16>
    %cst_147 = arith.constant dense<0.000000e+00> : vector<1x8xf32>
    %241 = tpu.matmul %240, %238, %cst_147 {dimension_numbers = #tpu.dot_dimension_numbers<[1], [0], [0], [1], [0, 0, 1, 1], [], []>} : vector<1x64xbf16>, vector<64x8xbf16>, vector<1x8xf32> -> vector<1x8xf32>
    %242 = arith.addf %236, %241 : vector<1x8xf32>
    %243 = vector.extract_strided_slice %229 {offsets = [0, 16], sizes = [64, 8], strides = [1, 1]} : vector<64x128xf32> to vector<64x8xf32>
    %244 = arith.truncf %243 : vector<64x8xf32> to vector<64x8xbf16>
    %c2_148 = arith.constant 2 : index
    %c0_149 = arith.constant 0 : index
    %c0_150 = arith.constant 0 : index
    %245 = vector.load %arg10[%c2_148, %c0_149, %c0_150] : memref<16x1x64xbf16, #tpu.memory_space<vmem>>, vector<1x1x64xbf16>
    %246 = vector.shape_cast %245 : vector<1x1x64xbf16> to vector<1x64xbf16>
    %cst_151 = arith.constant dense<0.000000e+00> : vector<1x8xf32>
    %247 = tpu.matmul %246, %244, %cst_151 {dimension_numbers = #tpu.dot_dimension_numbers<[1], [0], [0], [1], [0, 0, 1, 1], [], []>} : vector<1x64xbf16>, vector<64x8xbf16>, vector<1x8xf32> -> vector<1x8xf32>
    %248 = arith.addf %242, %247 : vector<1x8xf32>
    %249 = vector.extract_strided_slice %229 {offsets = [0, 24], sizes = [64, 8], strides = [1, 1]} : vector<64x128xf32> to vector<64x8xf32>
    %250 = arith.truncf %249 : vector<64x8xf32> to vector<64x8xbf16>
    %c3_152 = arith.constant 3 : index
    %c0_153 = arith.constant 0 : index
    %c0_154 = arith.constant 0 : index
    %251 = vector.load %arg10[%c3_152, %c0_153, %c0_154] : memref<16x1x64xbf16, #tpu.memory_space<vmem>>, vector<1x1x64xbf16>
    %252 = vector.shape_cast %251 : vector<1x1x64xbf16> to vector<1x64xbf16>
    %cst_155 = arith.constant dense<0.000000e+00> : vector<1x8xf32>
    %253 = tpu.matmul %252, %250, %cst_155 {dimension_numbers = #tpu.dot_dimension_numbers<[1], [0], [0], [1], [0, 0, 1, 1], [], []>} : vector<1x64xbf16>, vector<64x8xbf16>, vector<1x8xf32> -> vector<1x8xf32>
    %254 = arith.addf %248, %253 : vector<1x8xf32>
    %255 = vector.extract_strided_slice %229 {offsets = [0, 32], sizes = [64, 8], strides = [1, 1]} : vector<64x128xf32> to vector<64x8xf32>
    %256 = arith.truncf %255 : vector<64x8xf32> to vector<64x8xbf16>
    %c4_156 = arith.constant 4 : index
    %c0_157 = arith.constant 0 : index
    %c0_158 = arith.constant 0 : index
    %257 = vector.load %arg10[%c4_156, %c0_157, %c0_158] : memref<16x1x64xbf16, #tpu.memory_space<vmem>>, vector<1x1x64xbf16>
    %258 = vector.shape_cast %257 : vector<1x1x64xbf16> to vector<1x64xbf16>
    %cst_159 = arith.constant dense<0.000000e+00> : vector<1x8xf32>
    %259 = tpu.matmul %258, %256, %cst_159 {dimension_numbers = #tpu.dot_dimension_numbers<[1], [0], [0], [1], [0, 0, 1, 1], [], []>} : vector<1x64xbf16>, vector<64x8xbf16>, vector<1x8xf32> -> vector<1x8xf32>
    %260 = arith.addf %254, %259 : vector<1x8xf32>
    %261 = vector.extract_strided_slice %229 {offsets = [0, 40], sizes = [64, 8], strides = [1, 1]} : vector<64x128xf32> to vector<64x8xf32>
    %262 = arith.truncf %261 : vector<64x8xf32> to vector<64x8xbf16>
    %c5_160 = arith.constant 5 : index
    %c0_161 = arith.constant 0 : index
    %c0_162 = arith.constant 0 : index
    %263 = vector.load %arg10[%c5_160, %c0_161, %c0_162] : memref<16x1x64xbf16, #tpu.memory_space<vmem>>, vector<1x1x64xbf16>
    %264 = vector.shape_cast %263 : vector<1x1x64xbf16> to vector<1x64xbf16>
    %cst_163 = arith.constant dense<0.000000e+00> : vector<1x8xf32>
    %265 = tpu.matmul %264, %262, %cst_163 {dimension_numbers = #tpu.dot_dimension_numbers<[1], [0], [0], [1], [0, 0, 1, 1], [], []>} : vector<1x64xbf16>, vector<64x8xbf16>, vector<1x8xf32> -> vector<1x8xf32>
    %266 = arith.addf %260, %265 : vector<1x8xf32>
    %267 = vector.extract_strided_slice %229 {offsets = [0, 48], sizes = [64, 8], strides = [1, 1]} : vector<64x128xf32> to vector<64x8xf32>
    %268 = arith.truncf %267 : vector<64x8xf32> to vector<64x8xbf16>
    %c6_164 = arith.constant 6 : index
    %c0_165 = arith.constant 0 : index
    %c0_166 = arith.constant 0 : index
    %269 = vector.load %arg10[%c6_164, %c0_165, %c0_166] : memref<16x1x64xbf16, #tpu.memory_space<vmem>>, vector<1x1x64xbf16>
    %270 = vector.shape_cast %269 : vector<1x1x64xbf16> to vector<1x64xbf16>
    %cst_167 = arith.constant dense<0.000000e+00> : vector<1x8xf32>
    %271 = tpu.matmul %270, %268, %cst_167 {dimension_numbers = #tpu.dot_dimension_numbers<[1], [0], [0], [1], [0, 0, 1, 1], [], []>} : vector<1x64xbf16>, vector<64x8xbf16>, vector<1x8xf32> -> vector<1x8xf32>
    %272 = arith.addf %266, %271 : vector<1x8xf32>
    %273 = vector.extract_strided_slice %229 {offsets = [0, 56], sizes = [64, 8], strides = [1, 1]} : vector<64x128xf32> to vector<64x8xf32>
    %274 = arith.truncf %273 : vector<64x8xf32> to vector<64x8xbf16>
    %c7_168 = arith.constant 7 : index
    %c0_169 = arith.constant 0 : index
    %c0_170 = arith.constant 0 : index
    %275 = vector.load %arg10[%c7_168, %c0_169, %c0_170] : memref<16x1x64xbf16, #tpu.memory_space<vmem>>, vector<1x1x64xbf16>
    %276 = vector.shape_cast %275 : vector<1x1x64xbf16> to vector<1x64xbf16>
    %cst_171 = arith.constant dense<0.000000e+00> : vector<1x8xf32>
    %277 = tpu.matmul %276, %274, %cst_171 {dimension_numbers = #tpu.dot_dimension_numbers<[1], [0], [0], [1], [0, 0, 1, 1], [], []>} : vector<1x64xbf16>, vector<64x8xbf16>, vector<1x8xf32> -> vector<1x8xf32>
    %278 = arith.addf %272, %277 : vector<1x8xf32>
    %279 = vector.extract_strided_slice %229 {offsets = [0, 64], sizes = [64, 8], strides = [1, 1]} : vector<64x128xf32> to vector<64x8xf32>
    %280 = arith.truncf %279 : vector<64x8xf32> to vector<64x8xbf16>
    %c8_172 = arith.constant 8 : index
    %c0_173 = arith.constant 0 : index
    %c0_174 = arith.constant 0 : index
    %281 = vector.load %arg10[%c8_172, %c0_173, %c0_174] : memref<16x1x64xbf16, #tpu.memory_space<vmem>>, vector<1x1x64xbf16>
    %282 = vector.shape_cast %281 : vector<1x1x64xbf16> to vector<1x64xbf16>
    %cst_175 = arith.constant dense<0.000000e+00> : vector<1x8xf32>
    %283 = tpu.matmul %282, %280, %cst_175 {dimension_numbers = #tpu.dot_dimension_numbers<[1], [0], [0], [1], [0, 0, 1, 1], [], []>} : vector<1x64xbf16>, vector<64x8xbf16>, vector<1x8xf32> -> vector<1x8xf32>
    %284 = arith.addf %278, %283 : vector<1x8xf32>
    %285 = vector.extract_strided_slice %229 {offsets = [0, 72], sizes = [64, 8], strides = [1, 1]} : vector<64x128xf32> to vector<64x8xf32>
    %286 = arith.truncf %285 : vector<64x8xf32> to vector<64x8xbf16>
    %c9_176 = arith.constant 9 : index
    %c0_177 = arith.constant 0 : index
    %c0_178 = arith.constant 0 : index
    %287 = vector.load %arg10[%c9_176, %c0_177, %c0_178] : memref<16x1x64xbf16, #tpu.memory_space<vmem>>, vector<1x1x64xbf16>
    %288 = vector.shape_cast %287 : vector<1x1x64xbf16> to vector<1x64xbf16>
    %cst_179 = arith.constant dense<0.000000e+00> : vector<1x8xf32>
    %289 = tpu.matmul %288, %286, %cst_179 {dimension_numbers = #tpu.dot_dimension_numbers<[1], [0], [0], [1], [0, 0, 1, 1], [], []>} : vector<1x64xbf16>, vector<64x8xbf16>, vector<1x8xf32> -> vector<1x8xf32>
    %290 = arith.addf %284, %289 : vector<1x8xf32>
    %291 = vector.extract_strided_slice %229 {offsets = [0, 80], sizes = [64, 8], strides = [1, 1]} : vector<64x128xf32> to vector<64x8xf32>
    %292 = arith.truncf %291 : vector<64x8xf32> to vector<64x8xbf16>
    %c10_180 = arith.constant 10 : index
    %c0_181 = arith.constant 0 : index
    %c0_182 = arith.constant 0 : index
    %293 = vector.load %arg10[%c10_180, %c0_181, %c0_182] : memref<16x1x64xbf16, #tpu.memory_space<vmem>>, vector<1x1x64xbf16>
    %294 = vector.shape_cast %293 : vector<1x1x64xbf16> to vector<1x64xbf16>
    %cst_183 = arith.constant dense<0.000000e+00> : vector<1x8xf32>
    %295 = tpu.matmul %294, %292, %cst_183 {dimension_numbers = #tpu.dot_dimension_numbers<[1], [0], [0], [1], [0, 0, 1, 1], [], []>} : vector<1x64xbf16>, vector<64x8xbf16>, vector<1x8xf32> -> vector<1x8xf32>
    %296 = arith.addf %290, %295 : vector<1x8xf32>
    %297 = vector.extract_strided_slice %229 {offsets = [0, 88], sizes = [64, 8], strides = [1, 1]} : vector<64x128xf32> to vector<64x8xf32>
    %298 = arith.truncf %297 : vector<64x8xf32> to vector<64x8xbf16>
    %c11_184 = arith.constant 11 : index
    %c0_185 = arith.constant 0 : index
    %c0_186 = arith.constant 0 : index
    %299 = vector.load %arg10[%c11_184, %c0_185, %c0_186] : memref<16x1x64xbf16, #tpu.memory_space<vmem>>, vector<1x1x64xbf16>
    %300 = vector.shape_cast %299 : vector<1x1x64xbf16> to vector<1x64xbf16>
    %cst_187 = arith.constant dense<0.000000e+00> : vector<1x8xf32>
    %301 = tpu.matmul %300, %298, %cst_187 {dimension_numbers = #tpu.dot_dimension_numbers<[1], [0], [0], [1], [0, 0, 1, 1], [], []>} : vector<1x64xbf16>, vector<64x8xbf16>, vector<1x8xf32> -> vector<1x8xf32>
    %302 = arith.addf %296, %301 : vector<1x8xf32>
    %303 = vector.extract_strided_slice %229 {offsets = [0, 96], sizes = [64, 8], strides = [1, 1]} : vector<64x128xf32> to vector<64x8xf32>
    %304 = arith.truncf %303 : vector<64x8xf32> to vector<64x8xbf16>
    %c12_188 = arith.constant 12 : index
    %c0_189 = arith.constant 0 : index
    %c0_190 = arith.constant 0 : index
    %305 = vector.load %arg10[%c12_188, %c0_189, %c0_190] : memref<16x1x64xbf16, #tpu.memory_space<vmem>>, vector<1x1x64xbf16>
    %306 = vector.shape_cast %305 : vector<1x1x64xbf16> to vector<1x64xbf16>
    %cst_191 = arith.constant dense<0.000000e+00> : vector<1x8xf32>
    %307 = tpu.matmul %306, %304, %cst_191 {dimension_numbers = #tpu.dot_dimension_numbers<[1], [0], [0], [1], [0, 0, 1, 1], [], []>} : vector<1x64xbf16>, vector<64x8xbf16>, vector<1x8xf32> -> vector<1x8xf32>
    %308 = arith.addf %302, %307 : vector<1x8xf32>
    %309 = vector.extract_strided_slice %229 {offsets = [0, 104], sizes = [64, 8], strides = [1, 1]} : vector<64x128xf32> to vector<64x8xf32>
    %310 = arith.truncf %309 : vector<64x8xf32> to vector<64x8xbf16>
    %c13_192 = arith.constant 13 : index
    %c0_193 = arith.constant 0 : index
    %c0_194 = arith.constant 0 : index
    %311 = vector.load %arg10[%c13_192, %c0_193, %c0_194] : memref<16x1x64xbf16, #tpu.memory_space<vmem>>, vector<1x1x64xbf16>
    %312 = vector.shape_cast %311 : vector<1x1x64xbf16> to vector<1x64xbf16>
    %cst_195 = arith.constant dense<0.000000e+00> : vector<1x8xf32>
    %313 = tpu.matmul %312, %310, %cst_195 {dimension_numbers = #tpu.dot_dimension_numbers<[1], [0], [0], [1], [0, 0, 1, 1], [], []>} : vector<1x64xbf16>, vector<64x8xbf16>, vector<1x8xf32> -> vector<1x8xf32>
    %314 = arith.addf %308, %313 : vector<1x8xf32>
    %315 = vector.extract_strided_slice %229 {offsets = [0, 112], sizes = [64, 8], strides = [1, 1]} : vector<64x128xf32> to vector<64x8xf32>
    %316 = arith.truncf %315 : vector<64x8xf32> to vector<64x8xbf16>
    %c14_196 = arith.constant 14 : index
    %c0_197 = arith.constant 0 : index
    %c0_198 = arith.constant 0 : index
    %317 = vector.load %arg10[%c14_196, %c0_197, %c0_198] : memref<16x1x64xbf16, #tpu.memory_space<vmem>>, vector<1x1x64xbf16>
    %318 = vector.shape_cast %317 : vector<1x1x64xbf16> to vector<1x64xbf16>
    %cst_199 = arith.constant dense<0.000000e+00> : vector<1x8xf32>
    %319 = tpu.matmul %318, %316, %cst_199 {dimension_numbers = #tpu.dot_dimension_numbers<[1], [0], [0], [1], [0, 0, 1, 1], [], []>} : vector<1x64xbf16>, vector<64x8xbf16>, vector<1x8xf32> -> vector<1x8xf32>
    %320 = arith.addf %314, %319 : vector<1x8xf32>
    %321 = vector.extract_strided_slice %229 {offsets = [0, 120], sizes = [64, 8], strides = [1, 1]} : vector<64x128xf32> to vector<64x8xf32>
    %322 = arith.truncf %321 : vector<64x8xf32> to vector<64x8xbf16>
    %c15_200 = arith.constant 15 : index
    %c0_201 = arith.constant 0 : index
    %c0_202 = arith.constant 0 : index
    %323 = vector.load %arg10[%c15_200, %c0_201, %c0_202] : memref<16x1x64xbf16, #tpu.memory_space<vmem>>, vector<1x1x64xbf16>
    %324 = vector.shape_cast %323 : vector<1x1x64xbf16> to vector<1x64xbf16>
    %cst_203 = arith.constant dense<0.000000e+00> : vector<1x8xf32>
    %325 = tpu.matmul %324, %322, %cst_203 {dimension_numbers = #tpu.dot_dimension_numbers<[1], [0], [0], [1], [0, 0, 1, 1], [], []>} : vector<1x64xbf16>, vector<64x8xbf16>, vector<1x8xf32> -> vector<1x8xf32>
    %326 = arith.addf %320, %325 : vector<1x8xf32>
    %327 = vector.shape_cast %326 : vector<1x8xf32> to vector<1x1x8xf32>
    %cst_204 = arith.constant dense<0.000000e+00> : vector<1xf32>
    %328 = vector.multi_reduction <add>, %327, %cst_204 [1, 2] : vector<1x1x8xf32> to vector<1xf32>
    %329 = vector.shape_cast %328 : vector<1xf32> to vector<1x1x1xf32>
    %330 = vector.extract %329[0, 0, 0] : f32 from vector<1x1x1xf32>
    %cst_205 = arith.constant 1.250000e-01 : f32
    %331 = arith.mulf %330, %cst_205 : f32
    %c0_206 = arith.constant 0 : index
    %c0_207 = arith.constant 0 : index
    %332 = memref.load %arg11[%c0_206, %c0_207] : memref<1x1xf32, #tpu.memory_space<smem>>
    %333 = arith.addf %331, %332 : f32
    %cst_208 = arith.constant 0.000000e+00 : f32
    %334 = arith.subf %cst_208, %333 : f32
    %c0_209 = arith.constant 0 : index
    %c0_210 = arith.constant 0 : index
    %335 = memref.load %arg12[%c0_209, %c0_210] : memref<1x1xf32, #tpu.memory_space<smem>>
    memref.store %334, %arg12[%c0_209, %c0_210] : memref<1x1xf32, #tpu.memory_space<smem>>
    return
  }
}

</mosaic_0001>

<llo_original>
// kernel: _lambda_.1
$region0: #{_lambda_.1}
  #allocation0 [shape = 'u32[]', space=smem, size = 0x4, offset = 0x4, fixed_abs, tag = 'smem constant byte address 0x4 - core index']
  #allocation1 [shape = 'u32[72,128]{1,0:T(1,128)}', space=vmem, size = 0x9000, scoped, tag = 'internal scratch']
  #allocation2 [shape = 'f32[1,1]{1,0:T(1,128)S(6)}', space=smem, size = 0x200, scoped, tag = 'scoped memory for _lambda_.1']
  %s0 = inlined_call_operand.vmem [shape: bf16[128,128], index: 0, kind: input, shape index: {}]
  %s1 = inlined_call_operand.vmem [shape: bf16[16,128], index: 1, kind: input, shape index: {}]
  %s2 = inlined_call_operand.vmem [shape: f32[16,1], index: 2, kind: input, shape index: {}]
  %s3 = inlined_call_operand.vmem [shape: bf16[128,512], index: 3, kind: input, shape index: {}]
  %s4 = inlined_call_operand.vmem [shape: bf16[16,32,16], index: 4, kind: input, shape index: {}]
  %s5 = inlined_call_operand.vmem [shape: f32[32,1], index: 5, kind: input, shape index: {}]
  %s6 = inlined_call_operand.vmem [shape: bf16[32,288], index: 6, kind: input, shape index: {}]
  %s7 = inlined_call_operand.vmem [shape: bf16[16,64,32], index: 7, kind: input, shape index: {}]
  %s8 = inlined_call_operand.vmem [shape: f32[64,1], index: 8, kind: input, shape index: {}]
  %s9 = inlined_call_operand.vmem [shape: bf16[18,128], index: 9, kind: input, shape index: {}]
  %s10 = inlined_call_operand.vmem [shape: bf16[16,1,64], index: 10, kind: input, shape index: {}]
  %s11 = inlined_call_operand.<no memory space> [shape: f32[1,1], index: 11, kind: input, shape index: {}]
  %s12 = inlined_call_operand.hbm [shape: f32[1,1], index: 12, kind: output, shape index: {}]
  %s13 = sld [smem:[#allocation0]]
  $region58: #{_lambda_.1} parent=0
    _
  %s15 = ssub.s32 1, %s13
  %s16 = scalar_select 0, %s15, %s13
  %17 = sst [smem:[#allocation2]] %s11
  $region1: #{_lambda_.1} parent=0
    #allocation3 [shape = 'u8[512]{0}', space=smem, size = 0x200, scoped, tag = 'output window, operand 0, single buffered']
    #allocation4 [shape = 's32[1]{0}', space=sflag, size = 0x4, scoped, tag = 'scoped memory for _lambda_.1']
    %18 = vsyncpa [#allocation4], 0
    // Predicated region
    $region2: #{_lambda_.1} parent=1 // pred_check
      _
    $region3: #{_lambda_.1} parent=1 // pred_check_branch
      %20 = sbr.rel (0) target = $region5
    $region4: #{_lambda_.1} parent=1 // pred_region
      _
    $region5: #{_lambda_.1} parent=1 // pred_fallthru
      _
    // Predicated region
    $region6: #{_lambda_.1} parent=1 // pred_check
      _
    $region7: #{_lambda_.1} parent=1 // pred_check_branch
      %22 = sbr.rel (0) target = $region9
    $region8: #{_lambda_.1} parent=1 // pred_region
      _
    $region9: #{_lambda_.1} parent=1 // pred_fallthru
      _
    // Predicated region
    $region10: #{_lambda_.1} parent=1 // pred_check
      _
    $region11: #{_lambda_.1} parent=1 // pred_check_branch
      %24 = sbr.rel (0) target = $region13
    $region12: #{_lambda_.1} parent=1 // pred_region
      _
    $region13: #{_lambda_.1} parent=1 // pred_fallthru
      _
    // Predicated region
    $region14: #{_lambda_.1} parent=1 // pred_check
      _
    $region15: #{_lambda_.1} parent=1 // pred_check_branch
      %26 = sbr.rel (0) target = $region17
    $region16: #{_lambda_.1} parent=1 // pred_region
      _
    $region17: #{_lambda_.1} parent=1 // pred_fallthru
      _
    // Predicated region
    $region18: #{_lambda_.1} parent=1 // pred_check
      _
    $region19: #{_lambda_.1} parent=1 // pred_check_branch
      %28 = sbr.rel (0) target = $region21
    $region20: #{_lambda_.1} parent=1 // pred_region
      _
    $region21: #{_lambda_.1} parent=1 // pred_fallthru
      _
    // Predicated region
    $region22: #{_lambda_.1} parent=1 // pred_check
      _
    $region23: #{_lambda_.1} parent=1 // pred_check_branch
      %30 = sbr.rel (0) target = $region25
    $region24: #{_lambda_.1} parent=1 // pred_region
      _
    $region25: #{_lambda_.1} parent=1 // pred_fallthru
      _
    // Predicated region
    $region26: #{_lambda_.1} parent=1 // pred_check
      _
    $region27: #{_lambda_.1} parent=1 // pred_check_branch
      %32 = sbr.rel (0) target = $region29
    $region28: #{_lambda_.1} parent=1 // pred_region
      _
    $region29: #{_lambda_.1} parent=1 // pred_fallthru
      _
    // Predicated region
    $region30: #{_lambda_.1} parent=1 // pred_check
      _
    $region31: #{_lambda_.1} parent=1 // pred_check_branch
      %34 = sbr.rel (0) target = $region33
    $region32: #{_lambda_.1} parent=1 // pred_region
      _
    $region33: #{_lambda_.1} parent=1 // pred_fallthru
      _
    // Predicated region
    $region34: #{_lambda_.1} parent=1 // pred_check
      _
    $region35: #{_lambda_.1} parent=1 // pred_check_branch
      %36 = sbr.rel (0) target = $region37
    $region36: #{_lambda_.1} parent=1 // pred_region
      _
    $region37: #{_lambda_.1} parent=1 // pred_fallthru
      _
    // Predicated region
    $region38: #{_lambda_.1} parent=1 // pred_check
      _
    $region39: #{_lambda_.1} parent=1 // pred_check_branch
      %38 = sbr.rel (0) target = $region41
    $region40: #{_lambda_.1} parent=1 // pred_region
      _
    $region41: #{_lambda_.1} parent=1 // pred_fallthru
      _
    // Predicated region
    $region42: #{_lambda_.1} parent=1 // pred_check
      _
    $region43: #{_lambda_.1} parent=1 // pred_check_branch
      %40 = sbr.rel (0) target = $region45
    $region44: #{_lambda_.1} parent=1 // pred_region
      _
    $region45: #{_lambda_.1} parent=1 // pred_fallthru
      _
    // Predicated region
    $region46: #{_lambda_.1} parent=1 // pred_check
      _
    $region47: #{_lambda_.1} parent=1 // pred_check_branch
      %42 = sbr.rel (0) target = $region49
    $region48: #{_lambda_.1} parent=1 // pred_region
      _
    $region49: #{_lambda_.1} parent=1 // pred_fallthru
      _
    %v44 = vld [vmem:[%s1] sm:$0xf]
    %v45 = vld [vmem:[%s1 + $0x4] sm:$0xf]
    %v46 = vld [vmem:[%s0] sm:$0xf]
    %v47 = vld [vmem:[%s0 + $0x4] sm:$0xf]
    %v48 = vld [vmem:[%s0 + $0x8] sm:$0xf]
    %v49 = vld [vmem:[%s0 + $0xc] sm:$0xf]
    %v50 = vld [vmem:[%s0 + $0x10] sm:$0xf]
    %v51 = vld [vmem:[%s0 + $0x14] sm:$0xf]
    %v52 = vld [vmem:[%s0 + $0x18] sm:$0xf]
    %v53 = vld [vmem:[%s0 + $0x1c] sm:$0xf]
    %v54 = vld [vmem:[%s0 + $0x20] sm:$0xf]
    %v55 = vld [vmem:[%s0 + $0x24] sm:$0xf]
    %v56 = vld [vmem:[%s0 + $0x28] sm:$0xf]
    %v57 = vld [vmem:[%s0 + $0x2c] sm:$0xf]
    %v58 = vld [vmem:[%s0 + $0x30] sm:$0xf]
    %v59 = vld [vmem:[%s0 + $0x34] sm:$0xf]
    %v60 = vld [vmem:[%s0 + $0x38] sm:$0xf]
    %v61 = vld [vmem:[%s0 + $0x3c] sm:$0xf]
    %v62 = vld [vmem:[%s2] sm:$0xff]
    %v63 = vld [vmem:[%s2 + $0x8] sm:$0xff]
    %65 = vset.pattern.permute.xlu0 0
    %66 = vperm.xlu0 %65, %v62
    %v67 = vpop.permute.xlu0 %66
    %70 = vset.pattern.permute.xlu0 0
    %71 = vperm.xlu0 %70, %v63
    %v72 = vpop.permute.xlu0 %71
    %v76 = vunpack.c.l.b16 %v44
    %v77 = vunpack.c.l.b16 %v45
    %v78 = vpack.c.b16 %v77, %v76
    %v96 = vunpack.c.l.b16 %v46
    %v97 = vunpack.c.l.b16 %v47
    %v98 = vunpack.c.l.b16 %v48
    %v99 = vunpack.c.l.b16 %v49
    %v100 = vunpack.c.l.b16 %v50
    %v101 = vunpack.c.l.b16 %v51
    %v102 = vunpack.c.l.b16 %v52
    %v103 = vunpack.c.l.b16 %v53
    %v104 = vunpack.c.l.b16 %v54
    %v105 = vunpack.c.l.b16 %v55
    %v106 = vunpack.c.l.b16 %v56
    %v107 = vunpack.c.l.b16 %v57
    %v108 = vunpack.c.l.b16 %v58
    %v109 = vunpack.c.l.b16 %v59
    %v110 = vunpack.c.l.b16 %v60
    %v111 = vunpack.c.l.b16 %v61
    %v112 = vpack.c.b16 %v97, %v96
    %v113 = vpack.c.b16 %v99, %v98
    %v114 = vpack.c.b16 %v101, %v100
    %v115 = vpack.c.b16 %v103, %v102
    %v116 = vpack.c.b16 %v105, %v104
    %v117 = vpack.c.b16 %v107, %v106
    %v118 = vpack.c.b16 %v109, %v108
    %v119 = vpack.c.b16 %v111, %v110
    %128 = vmatpush.bf16.msra.mxu0 %v119
    %129 = vmatpush.bf16.msra.mxu0 %v118
    %130 = vmatpush.bf16.msra.mxu0 %v117
    %131 = vmatpush.bf16.msra.mxu0 %v116
    %132 = vmatpush.bf16.msra.mxu0 %v115
    %133 = vmatpush.bf16.msra.mxu0 %v114
    %134 = vmatpush.bf16.msra.mxu0 %v113
    %135 = vmatpush.bf16.msra.mxu0 %v112
    %136 = vmatmul.bf16.gmra.mxu0 %v78
    %v137 = vpop.f32.mrf.mxu0
    %v138 = vadd.f32 %v67, %v137
    %v139 = vpop.f32.mrf.mxu0
    %v140 = vadd.f32 %v72, %v139
    %141 = vdwg.mxu0
    %vm142 = vcmp.ge.f32.partialorder %v138, 0.0
    %vm143 = vcmp.ge.f32.partialorder %v140, 0.0
    %v144 = vmul.f32 %v138, 0.2
    %v145 = vmul.f32 %v140, 0.2
    %v146 = vsel %vm142, %v138, %v144
    %v147 = vsel %vm143, %v140, %v145
    %v148 = vpack.c.bf16 %v147, %v146
    %v149 = vld [vmem:[%s3] sm:$0xff]
    %v150 = vld [vmem:[%s3 + $0x8] sm:$0xff]
    %v151 = vld [vmem:[%s3 + $0x10] sm:$0xff]
    %v152 = vld [vmem:[%s3 + $0x18] sm:$0xff]
    %v153 = vld [vmem:[%s3 + $0x20] sm:$0xff]
    %v154 = vld [vmem:[%s3 + $0x28] sm:$0xff]
    %v155 = vld [vmem:[%s3 + $0x30] sm:$0xff]
    %v156 = vld [vmem:[%s3 + $0x38] sm:$0xff]
    %v157 = vld [vmem:[%s3 + $0x40] sm:$0xff]
    %v158 = vld [vmem:[%s3 + $0x48] sm:$0xff]
    %v159 = vld [vmem:[%s3 + $0x50] sm:$0xff]
    %v160 = vld [vmem:[%s3 + $0x58] sm:$0xff]
    %v161 = vld [vmem:[%s3 + $0x60] sm:$0xff]
    %v162 = vld [vmem:[%s3 + $0x68] sm:$0xff]
    %v163 = vld [vmem:[%s3 + $0x70] sm:$0xff]
    %v164 = vld [vmem:[%s3 + $0x78] sm:$0xff]
    %v165 = vld [vmem:[%s3 + $0x80] sm:$0xff]
    %v166 = vld [vmem:[%s3 + $0x88] sm:$0xff]
    %v167 = vld [vmem:[%s3 + $0x90] sm:$0xff]
    %v168 = vld [vmem:[%s3 + $0x98] sm:$0xff]
    %v169 = vld [vmem:[%s3 + $0xa0] sm:$0xff]
    %v170 = vld [vmem:[%s3 + $0xa8] sm:$0xff]
    %v171 = vld [vmem:[%s3 + $0xb0] sm:$0xff]
    %v172 = vld [vmem:[%s3 + $0xb8] sm:$0xff]
    %v173 = vld [vmem:[%s3 + $0xc0] sm:$0xff]
    %v174 = vld [vmem:[%s3 + $0xc8] sm:$0xff]
    %v175 = vld [vmem:[%s3 + $0xd0] sm:$0xff]
    %v176 = vld [vmem:[%s3 + $0xd8] sm:$0xff]
    %v177 = vld [vmem:[%s3 + $0xe0] sm:$0xff]
    %v178 = vld [vmem:[%s3 + $0xe8] sm:$0xff]
    %v179 = vld [vmem:[%s3 + $0xf0] sm:$0xff]
    %v180 = vld [vmem:[%s3 + $0xf8] sm:$0xff]
    %v213 = vunpack.c.l.b16 %v149
    %v214 = vunpack.c.h.b16 %v149
    %v215 = vunpack.c.l.b16 %v150
    %v216 = vunpack.c.h.b16 %v150
    %v217 = vunpack.c.l.b16 %v151
    %v218 = vunpack.c.h.b16 %v151
    %v219 = vunpack.c.l.b16 %v152
    %v220 = vunpack.c.h.b16 %v152
    %v221 = vunpack.c.l.b16 %v153
    %v222 = vunpack.c.h.b16 %v153
    %v223 = vunpack.c.l.b16 %v154
    %v224 = vunpack.c.h.b16 %v154
    %v225 = vunpack.c.l.b16 %v155
    %v226 = vunpack.c.h.b16 %v155
    %v227 = vunpack.c.l.b16 %v156
    %v228 = vunpack.c.h.b16 %v156
    %v229 = vunpack.c.l.b16 %v157
    %v230 = vunpack.c.h.b16 %v157
    %v231 = vunpack.c.l.b16 %v158
    %v232 = vunpack.c.h.b16 %v158
    %v233 = vunpack.c.l.b16 %v159
    %v234 = vunpack.c.h.b16 %v159
    %v235 = vunpack.c.l.b16 %v160
    %v236 = vunpack.c.h.b16 %v160
    %v237 = vunpack.c.l.b16 %v161
    %v238 = vunpack.c.h.b16 %v161
    %v239 = vunpack.c.l.b16 %v162
    %v240 = vunpack.c.h.b16 %v162
    %v241 = vunpack.c.l.b16 %v163
    %v242 = vunpack.c.h.b16 %v163
    %v243 = vunpack.c.l.b16 %v164
    %v244 = vunpack.c.h.b16 %v164
    %v245 = vunpack.c.l.b16 %v165
    %v246 = vunpack.c.h.b16 %v165
    %v247 = vunpack.c.l.b16 %v166
    %v248 = vunpack.c.h.b16 %v166
    %v249 = vunpack.c.l.b16 %v167
    %v250 = vunpack.c.h.b16 %v167
    %v251 = vunpack.c.l.b16 %v168
    %v252 = vunpack.c.h.b16 %v168
    %v253 = vunpack.c.l.b16 %v169
    %v254 = vunpack.c.h.b16 %v169
    %v255 = vunpack.c.l.b16 %v170
    %v256 = vunpack.c.h.b16 %v170
    %v257 = vunpack.c.l.b16 %v171
    %v258 = vunpack.c.h.b16 %v171
    %v259 = vunpack.c.l.b16 %v172
    %v260 = vunpack.c.h.b16 %v172
    %v261 = vunpack.c.l.b16 %v173
    %v262 = vunpack.c.h.b16 %v173
    %v263 = vunpack.c.l.b16 %v174
    %v264 = vunpack.c.h.b16 %v174
    %v265 = vunpack.c.l.b16 %v175
    %v266 = vunpack.c.h.b16 %v175
    %v267 = vunpack.c.l.b16 %v176
    %v268 = vunpack.c.h.b16 %v176
    %v269 = vunpack.c.l.b16 %v177
    %v270 = vunpack.c.h.b16 %v177
    %v271 = vunpack.c.l.b16 %v178
    %v272 = vunpack.c.h.b16 %v178
    %v273 = vunpack.c.l.b16 %v179
    %v274 = vunpack.c.h.b16 %v179
    %v275 = vunpack.c.l.b16 %v180
    %v276 = vunpack.c.h.b16 %v180
    %v277 = vpack.c.b16 %v217, %v213
    %v278 = vpack.c.b16 %v218, %v214
    %v279 = vpack.c.b16 %v219, %v215
    %v280 = vpack.c.b16 %v220, %v216
    %v281 = vpack.c.b16 %v225, %v221
    %v282 = vpack.c.b16 %v226, %v222
    %v283 = vpack.c.b16 %v227, %v223
    %v284 = vpack.c.b16 %v228, %v224
    %v285 = vpack.c.b16 %v233, %v229
    %v286 = vpack.c.b16 %v234, %v230
    %v287 = vpack.c.b16 %v235, %v231
    %v288 = vpack.c.b16 %v236, %v232
    %v289 = vpack.c.b16 %v241, %v237
    %v290 = vpack.c.b16 %v242, %v238
    %v291 = vpack.c.b16 %v243, %v239
    %v292 = vpack.c.b16 %v244, %v240
    %v293 = vpack.c.b16 %v249, %v245
    %v294 = vpack.c.b16 %v250, %v246
    %v295 = vpack.c.b16 %v251, %v247
    %v296 = vpack.c.b16 %v252, %v248
    %v297 = vpack.c.b16 %v257, %v253
    %v298 = vpack.c.b16 %v258, %v254
    %v299 = vpack.c.b16 %v259, %v255
    %v300 = vpack.c.b16 %v260, %v256
    %v301 = vpack.c.b16 %v265, %v261
    %v302 = vpack.c.b16 %v266, %v262
    %v303 = vpack.c.b16 %v267, %v263
    %v304 = vpack.c.b16 %v268, %v264
    %v305 = vpack.c.b16 %v273, %v269
    %v306 = vpack.c.b16 %v274, %v270
    %v307 = vpack.c.b16 %v275, %v271
    %v308 = vpack.c.b16 %v276, %v272
    %341 = vmatpush.bf16.msra.mxu0 %v305
    %342 = vmatpush.bf16.msra.mxu0 %v301
    %343 = vmatpush.bf16.msra.mxu0 %v297
    %344 = vmatpush.bf16.msra.mxu0 %v293
    %345 = vmatpush.bf16.msra.mxu0 %v289
    %346 = vmatpush.bf16.msra.mxu0 %v285
    %347 = vmatpush.bf16.msra.mxu0 %v281
    %348 = vmatpush.bf16.msra.mxu0 %v277
    %349 = vmatmul.bf16.gmra.mxu0 %v148
    %v350 = vpop.f32.mrf.mxu0
    %v351 = vadd.f32 0.0, %v350
    %v352 = vpop.f32.mrf.mxu0
    %v353 = vadd.f32 0.0, %v352
    %354 = vdwg.mxu0
    %355 = vmatpush.bf16.msra.mxu0 %v306
    %356 = vmatpush.bf16.msra.mxu0 %v302
    %357 = vmatpush.bf16.msra.mxu0 %v298
    %358 = vmatpush.bf16.msra.mxu0 %v294
    %359 = vmatpush.bf16.msra.mxu0 %v290
    %360 = vmatpush.bf16.msra.mxu0 %v286
    %361 = vmatpush.bf16.msra.mxu0 %v282
    %362 = vmatpush.bf16.msra.mxu0 %v278
    %363 = vmatmul.bf16.gmra.mxu0 %v148
    %v364 = vpop.f32.mrf.mxu0
    %v365 = vadd.f32 0.0, %v364
    %v366 = vpop.f32.mrf.mxu0
    %v367 = vadd.f32 0.0, %v366
    %368 = vdwg.mxu0
    %369 = vmatpush.bf16.msra.mxu0 %v307
    %370 = vmatpush.bf16.msra.mxu0 %v303
    %371 = vmatpush.bf16.msra.mxu0 %v299
    %372 = vmatpush.bf16.msra.mxu0 %v295
    %373 = vmatpush.bf16.msra.mxu0 %v291
    %374 = vmatpush.bf16.msra.mxu0 %v287
    %375 = vmatpush.bf16.msra.mxu0 %v283
    %376 = vmatpush.bf16.msra.mxu0 %v279
    %377 = vmatmul.bf16.gmra.mxu0 %v148
    %v378 = vpop.f32.mrf.mxu0
    %v379 = vadd.f32 0.0, %v378
    %v380 = vpop.f32.mrf.mxu0
    %v381 = vadd.f32 0.0, %v380
    %382 = vdwg.mxu0
    %383 = vmatpush.bf16.msra.mxu0 %v308
    %384 = vmatpush.bf16.msra.mxu0 %v304
    %385 = vmatpush.bf16.msra.mxu0 %v300
    %386 = vmatpush.bf16.msra.mxu0 %v296
    %387 = vmatpush.bf16.msra.mxu0 %v292
    %388 = vmatpush.bf16.msra.mxu0 %v288
    %389 = vmatpush.bf16.msra.mxu0 %v284
    %390 = vmatpush.bf16.msra.mxu0 %v280
    %391 = vmatmul.bf16.gmra.mxu0 %v148
    %v392 = vpop.f32.mrf.mxu0
    %v393 = vadd.f32 0.0, %v392
    %v394 = vpop.f32.mrf.mxu0
    %v395 = vadd.f32 0.0, %v394
    %396 = vdwg.mxu0
    %v397 = vpack.c.bf16 %v353, %v351
    %v398 = vld [vmem:[%s4] sm:$0xf]
    %v399 = vld [vmem:[%s4 + $0x4] sm:$0xf]
    %v400 = vld [vmem:[%s4 + $0x8] sm:$0xf]
    %v401 = vld [vmem:[%s4 + $0xc] sm:$0xf]
    %s402 = scalar_lea.vmem %s4, 16
    %v403 = vld [vmem:[%s402] sm:$0xf]
    %v404 = vld [vmem:[%s402 + $0x4] sm:$0xf]
    %v405 = vld [vmem:[%s402 + $0x8] sm:$0xf]
    %v406 = vld [vmem:[%s402 + $0xc] sm:$0xf]
    %v411 = vunpack.c.l.b16 %v403
    %v412 = vunpack.c.l.b16 %v404
    %v413 = vunpack.c.l.b16 %v405
    %v414 = vunpack.c.l.b16 %v406
    %v415 = vpack.c.b16 %v412, %v411
    %v416 = vpack.c.b16 %v414, %v413
    %418 = vrot.lane.b32.xlu0 %v397, 96
    %v419 = vpop.permute.xlu0 %418
    %vm421 = vcmask 130048
    %v423 = vsel %vm421, %v415, 0
    %v426 = vsel %vm421, %v416, 0
    %428 = vmatpush.bf16.msra.mxu0 0
    %429 = vmatpush.bf16.msra.mxu0 0
    %430 = vmatpush.bf16.msra.mxu0 0
    %431 = vmatpush.bf16.msra.mxu0 0
    %432 = vmatpush.bf16.msra.mxu0 0
    %433 = vmatpush.bf16.msra.mxu0 0
    %434 = vmatpush.bf16.msra.mxu0 0
    %435 = vmatpush.bf16.msra.mxu0 %v419
    %436 = vmatmul.bf16.gmra.mxu0 %v423
    %v437 = vpop.f32.mrf.mxu0
    %v438 = vadd.f32 0.0, %v437
    %v439 = vpop.f32.mrf.mxu0
    %v440 = vadd.f32 0.0, %v439
    %441 = vmatmul.bf16.gmra.mxu0 %v426
    %v442 = vpop.f32.mrf.mxu0
    %v443 = vadd.f32 0.0, %v442
    %v444 = vpop.f32.mrf.mxu0
    %v445 = vadd.f32 0.0, %v444
    %446 = vdwg.mxu0
    %v451 = vunpack.c.l.b16 %v398
    %v452 = vunpack.c.l.b16 %v399
    %v453 = vunpack.c.l.b16 %v400
    %v454 = vunpack.c.l.b16 %v401
    %v455 = vpack.c.b16 %v452, %v451
    %v456 = vpack.c.b16 %v454, %v453
    %v458 = vsel %vm421, %v455, 0
    %v461 = vsel %vm421, %v456, 0
    %463 = vmatpush.bf16.msra.mxu0 0
    %464 = vmatpush.bf16.msra.mxu0 0
    %465 = vmatpush.bf16.msra.mxu0 0
    %466 = vmatpush.bf16.msra.mxu0 0
    %467 = vmatpush.bf16.msra.mxu0 0
    %468 = vmatpush.bf16.msra.mxu0 0
    %469 = vmatpush.bf16.msra.mxu0 0
    %470 = vmatpush.bf16.msra.mxu0 %v397
    %471 = vmatmul.bf16.gmra.mxu0 %v458
    %v472 = vpop.f32.mrf.mxu0
    %v473 = vadd.f32 %v438, %v472
    %v474 = vpop.f32.mrf.mxu0
    %v475 = vadd.f32 %v440, %v474
    %476 = vmatmul.bf16.gmra.mxu0 %v461
    %v477 = vpop.f32.mrf.mxu0
    %v478 = vadd.f32 %v443, %v477
    %v479 = vpop.f32.mrf.mxu0
    %v480 = vadd.f32 %v445, %v479
    %481 = vdwg.mxu0
    %s482 = scalar_lea.vmem %s4, 32
    %v483 = vld [vmem:[%s482] sm:$0xf]
    %v484 = vld [vmem:[%s482 + $0x4] sm:$0xf]
    %v485 = vld [vmem:[%s482 + $0x8] sm:$0xf]
    %v486 = vld [vmem:[%s482 + $0xc] sm:$0xf]
    %v491 = vunpack.c.l.b16 %v483
    %v492 = vunpack.c.l.b16 %v484
    %v493 = vunpack.c.l.b16 %v485
    %v494 = vunpack.c.l.b16 %v486
    %v495 = vpack.c.b16 %v492, %v491
    %v496 = vpack.c.b16 %v494, %v493
    %497 = vrot.lane.b32.xlu0 %v397, 64
    %v498 = vpop.permute.xlu0 %497
    %v501 = vsel %vm421, %v495, 0
    %v504 = vsel %vm421, %v496, 0
    %506 = vmatpush.bf16.msra.mxu0 0
    %507 = vmatpush.bf16.msra.mxu0 0
    %508 = vmatpush.bf16.msra.mxu0 0
    %509 = vmatpush.bf16.msra.mxu0 0
    %510 = vmatpush.bf16.msra.mxu0 0
    %511 = vmatpush.bf16.msra.mxu0 0
    %512 = vmatpush.bf16.msra.mxu0 0
    %513 = vmatpush.bf16.msra.mxu0 %v498
    %514 = vmatmul.bf16.gmra.mxu0 %v501
    %v515 = vpop.f32.mrf.mxu0
    %v516 = vadd.f32 0.0, %v515
    %v517 = vpop.f32.mrf.mxu0
    %v518 = vadd.f32 0.0, %v517
    %519 = vmatmul.bf16.gmra.mxu0 %v504
    %v520 = vpop.f32.mrf.mxu0
    %v521 = vadd.f32 0.0, %v520
    %v522 = vpop.f32.mrf.mxu0
    %v523 = vadd.f32 0.0, %v522
    %524 = vdwg.mxu0
    %v525 = vadd.f32 %v473, %v516
    %v526 = vadd.f32 %v475, %v518
    %v527 = vadd.f32 %v478, %v521
    %v528 = vadd.f32 %v480, %v523
    %s529 = scalar_lea.vmem %s4, 48
    %v530 = vld [vmem:[%s529] sm:$0xf]
    %v531 = vld [vmem:[%s529 + $0x4] sm:$0xf]
    %v532 = vld [vmem:[%s529 + $0x8] sm:$0xf]
    %v533 = vld [vmem:[%s529 + $0xc] sm:$0xf]
    %v538 = vunpack.c.l.b16 %v530
    %v539 = vunpack.c.l.b16 %v531
    %v540 = vunpack.c.l.b16 %v532
    %v541 = vunpack.c.l.b16 %v533
    %v542 = vpack.c.b16 %v539, %v538
    %v543 = vpack.c.b16 %v541, %v540
    %544 = vrot.lane.b32.xlu0 %v397, 32
    %v545 = vpop.permute.xlu0 %544
    %v548 = vsel %vm421, %v542, 0
    %v551 = vsel %vm421, %v543, 0
    %553 = vmatpush.bf16.msra.mxu0 0
    %554 = vmatpush.bf16.msra.mxu0 0
    %555 = vmatpush.bf16.msra.mxu0 0
    %556 = vmatpush.bf16.msra.mxu0 0
    %557 = vmatpush.bf16.msra.mxu0 0
    %558 = vmatpush.bf16.msra.mxu0 0
    %559 = vmatpush.bf16.msra.mxu0 0
    %560 = vmatpush.bf16.msra.mxu0 %v545
    %561 = vmatmul.bf16.gmra.mxu0 %v548
    %v562 = vpop.f32.mrf.mxu0
    %v563 = vadd.f32 0.0, %v562
    %v564 = vpop.f32.mrf.mxu0
    %v565 = vadd.f32 0.0, %v564
    %566 = vmatmul.bf16.gmra.mxu0 %v551
    %v567 = vpop.f32.mrf.mxu0
    %v568 = vadd.f32 0.0, %v567
    %v569 = vpop.f32.mrf.mxu0
    %v570 = vadd.f32 0.0, %v569
    %571 = vdwg.mxu0
    %v572 = vadd.f32 %v525, %v563
    %v573 = vadd.f32 %v526, %v565
    %v574 = vadd.f32 %v527, %v568
    %v575 = vadd.f32 %v528, %v570
    %v576 = vpack.c.bf16 %v367, %v365
    %s577 = scalar_lea.vmem %s4, 64
    %v578 = vld [vmem:[%s577] sm:$0xf]
    %v579 = vld [vmem:[%s577 + $0x4] sm:$0xf]
    %v580 = vld [vmem:[%s577 + $0x8] sm:$0xf]
    %v581 = vld [vmem:[%s577 + $0xc] sm:$0xf]
    %v586 = vunpack.c.l.b16 %v578
    %v587 = vunpack.c.l.b16 %v579
    %v588 = vunpack.c.l.b16 %v580
    %v589 = vunpack.c.l.b16 %v581
    %v590 = vpack.c.b16 %v587, %v586
    %v591 = vpack.c.b16 %v589, %v588
    %v593 = vsel %vm421, %v590, 0
    %v596 = vsel %vm421, %v591, 0
    %598 = vmatpush.bf16.msra.mxu0 0
    %599 = vmatpush.bf16.msra.mxu0 0
    %600 = vmatpush.bf16.msra.mxu0 0
    %601 = vmatpush.bf16.msra.mxu0 0
    %602 = vmatpush.bf16.msra.mxu0 0
    %603 = vmatpush.bf16.msra.mxu0 0
    %604 = vmatpush.bf16.msra.mxu0 0
    %605 = vmatpush.bf16.msra.mxu0 %v576
    %606 = vmatmul.bf16.gmra.mxu0 %v593
    %v607 = vpop.f32.mrf.mxu0
    %v608 = vadd.f32 0.0, %v607
    %v609 = vpop.f32.mrf.mxu0
    %v610 = vadd.f32 0.0, %v609
    %611 = vmatmul.bf16.gmra.mxu0 %v596
    %v612 = vpop.f32.mrf.mxu0
    %v613 = vadd.f32 0.0, %v612
    %v614 = vpop.f32.mrf.mxu0
    %v615 = vadd.f32 0.0, %v614
    %616 = vdwg.mxu0
    %v617 = vadd.f32 %v572, %v608
    %v618 = vadd.f32 %v573, %v610
    %v619 = vadd.f32 %v574, %v613
    %v620 = vadd.f32 %v575, %v615
    %s621 = scalar_lea.vmem %s4, 80
    %v622 = vld [vmem:[%s621] sm:$0xf]
    %v623 = vld [vmem:[%s621 + $0x4] sm:$0xf]
    %v624 = vld [vmem:[%s621 + $0x8] sm:$0xf]
    %v625 = vld [vmem:[%s621 + $0xc] sm:$0xf]
    %v630 = vunpack.c.l.b16 %v622
    %v631 = vunpack.c.l.b16 %v623
    %v632 = vunpack.c.l.b16 %v624
    %v633 = vunpack.c.l.b16 %v625
    %v634 = vpack.c.b16 %v631, %v630
    %v635 = vpack.c.b16 %v633, %v632
    %637 = vrot.lane.b32.xlu0 %v576, 96
    %v638 = vpop.permute.xlu0 %637
    %v641 = vsel %vm421, %v634, 0
    %v644 = vsel %vm421, %v635, 0
    %646 = vmatpush.bf16.msra.mxu0 0
    %647 = vmatpush.bf16.msra.mxu0 0
    %648 = vmatpush.bf16.msra.mxu0 0
    %649 = vmatpush.bf16.msra.mxu0 0
    %650 = vmatpush.bf16.msra.mxu0 0
    %651 = vmatpush.bf16.msra.mxu0 0
    %652 = vmatpush.bf16.msra.mxu0 0
    %653 = vmatpush.bf16.msra.mxu0 %v638
    %654 = vmatmul.bf16.gmra.mxu0 %v641
    %v655 = vpop.f32.mrf.mxu0
    %v656 = vadd.f32 0.0, %v655
    %v657 = vpop.f32.mrf.mxu0
    %v658 = vadd.f32 0.0, %v657
    %659 = vmatmul.bf16.gmra.mxu0 %v644
    %v660 = vpop.f32.mrf.mxu0
    %v661 = vadd.f32 0.0, %v660
    %v662 = vpop.f32.mrf.mxu0
    %v663 = vadd.f32 0.0, %v662
    %664 = vdwg.mxu0
    %v665 = vadd.f32 %v617, %v656
    %v666 = vadd.f32 %v618, %v658
    %v667 = vadd.f32 %v619, %v661
    %v668 = vadd.f32 %v620, %v663
    %s669 = scalar_lea.vmem %s4, 96
    %v670 = vld [vmem:[%s669] sm:$0xf]
    %v671 = vld [vmem:[%s669 + $0x4] sm:$0xf]
    %v672 = vld [vmem:[%s669 + $0x8] sm:$0xf]
    %v673 = vld [vmem:[%s669 + $0xc] sm:$0xf]
    %v678 = vunpack.c.l.b16 %v670
    %v679 = vunpack.c.l.b16 %v671
    %v680 = vunpack.c.l.b16 %v672
    %v681 = vunpack.c.l.b16 %v673
    %v682 = vpack.c.b16 %v679, %v678
    %v683 = vpack.c.b16 %v681, %v680
    %684 = vrot.lane.b32.xlu0 %v576, 64
    %v685 = vpop.permute.xlu0 %684
    %v688 = vsel %vm421, %v682, 0
    %v691 = vsel %vm421, %v683, 0
    %693 = vmatpush.bf16.msra.mxu0 0
    %694 = vmatpush.bf16.msra.mxu0 0
    %695 = vmatpush.bf16.msra.mxu0 0
    %696 = vmatpush.bf16.msra.mxu0 0
    %697 = vmatpush.bf16.msra.mxu0 0
    %698 = vmatpush.bf16.msra.mxu0 0
    %699 = vmatpush.bf16.msra.mxu0 0
    %700 = vmatpush.bf16.msra.mxu0 %v685
    %701 = vmatmul.bf16.gmra.mxu0 %v688
    %v702 = vpop.f32.mrf.mxu0
    %v703 = vadd.f32 0.0, %v702
    %v704 = vpop.f32.mrf.mxu0
    %v705 = vadd.f32 0.0, %v704
    %706 = vmatmul.bf16.gmra.mxu0 %v691
    %v707 = vpop.f32.mrf.mxu0
    %v708 = vadd.f32 0.0, %v707
    %v709 = vpop.f32.mrf.mxu0
    %v710 = vadd.f32 0.0, %v709
    %711 = vdwg.mxu0
    %v712 = vadd.f32 %v665, %v703
    %v713 = vadd.f32 %v666, %v705
    %v714 = vadd.f32 %v667, %v708
    %v715 = vadd.f32 %v668, %v710
    %s716 = scalar_lea.vmem %s4, 112
    %v717 = vld [vmem:[%s716] sm:$0xf]
    %v718 = vld [vmem:[%s716 + $0x4] sm:$0xf]
    %v719 = vld [vmem:[%s716 + $0x8] sm:$0xf]
    %v720 = vld [vmem:[%s716 + $0xc] sm:$0xf]
    %v725 = vunpack.c.l.b16 %v717
    %v726 = vunpack.c.l.b16 %v718
    %v727 = vunpack.c.l.b16 %v719
    %v728 = vunpack.c.l.b16 %v720
    %v729 = vpack.c.b16 %v726, %v725
    %v730 = vpack.c.b16 %v728, %v727
    %731 = vrot.lane.b32.xlu0 %v576, 32
    %v732 = vpop.permute.xlu0 %731
    %v735 = vsel %vm421, %v729, 0
    %v738 = vsel %vm421, %v730, 0
    %740 = vmatpush.bf16.msra.mxu0 0
    %741 = vmatpush.bf16.msra.mxu0 0
    %742 = vmatpush.bf16.msra.mxu0 0
    %743 = vmatpush.bf16.msra.mxu0 0
    %744 = vmatpush.bf16.msra.mxu0 0
    %745 = vmatpush.bf16.msra.mxu0 0
    %746 = vmatpush.bf16.msra.mxu0 0
    %747 = vmatpush.bf16.msra.mxu0 %v732
    %748 = vmatmul.bf16.gmra.mxu0 %v735
    %v749 = vpop.f32.mrf.mxu0
    %v750 = vadd.f32 0.0, %v749
    %v751 = vpop.f32.mrf.mxu0
    %v752 = vadd.f32 0.0, %v751
    %753 = vmatmul.bf16.gmra.mxu0 %v738
    %v754 = vpop.f32.mrf.mxu0
    %v755 = vadd.f32 0.0, %v754
    %v756 = vpop.f32.mrf.mxu0
    %v757 = vadd.f32 0.0, %v756
    %758 = vdwg.mxu0
    %v759 = vadd.f32 %v712, %v750
    %v760 = vadd.f32 %v713, %v752
    %v761 = vadd.f32 %v714, %v755
    %v762 = vadd.f32 %v715, %v757
    %v763 = vpack.c.bf16 %v381, %v379
    %s764 = scalar_lea.vmem %s4, 128
    %v765 = vld [vmem:[%s764] sm:$0xf]
    %v766 = vld [vmem:[%s764 + $0x4] sm:$0xf]
    %v767 = vld [vmem:[%s764 + $0x8] sm:$0xf]
    %v768 = vld [vmem:[%s764 + $0xc] sm:$0xf]
    %v773 = vunpack.c.l.b16 %v765
    %v774 = vunpack.c.l.b16 %v766
    %v775 = vunpack.c.l.b16 %v767
    %v776 = vunpack.c.l.b16 %v768
    %v777 = vpack.c.b16 %v774, %v773
    %v778 = vpack.c.b16 %v776, %v775
    %v780 = vsel %vm421, %v777, 0
    %v783 = vsel %vm421, %v778, 0
    %785 = vmatpush.bf16.msra.mxu0 0
    %786 = vmatpush.bf16.msra.mxu0 0
    %787 = vmatpush.bf16.msra.mxu0 0
    %788 = vmatpush.bf16.msra.mxu0 0
    %789 = vmatpush.bf16.msra.mxu0 0
    %790 = vmatpush.bf16.msra.mxu0 0
    %791 = vmatpush.bf16.msra.mxu0 0
    %792 = vmatpush.bf16.msra.mxu0 %v763
    %793 = vmatmul.bf16.gmra.mxu0 %v780
    %v794 = vpop.f32.mrf.mxu0
    %v795 = vadd.f32 0.0, %v794
    %v796 = vpop.f32.mrf.mxu0
    %v797 = vadd.f32 0.0, %v796
    %798 = vmatmul.bf16.gmra.mxu0 %v783
    %v799 = vpop.f32.mrf.mxu0
    %v800 = vadd.f32 0.0, %v799
    %v801 = vpop.f32.mrf.mxu0
    %v802 = vadd.f32 0.0, %v801
    %803 = vdwg.mxu0
    %v804 = vadd.f32 %v759, %v795
    %v805 = vadd.f32 %v760, %v797
    %v806 = vadd.f32 %v761, %v800
    %v807 = vadd.f32 %v762, %v802
    %s808 = scalar_lea.vmem %s4, 144
    %v809 = vld [vmem:[%s808] sm:$0xf]
    %v810 = vld [vmem:[%s808 + $0x4] sm:$0xf]
    %v811 = vld [vmem:[%s808 + $0x8] sm:$0xf]
    %v812 = vld [vmem:[%s808 + $0xc] sm:$0xf]
    %v817 = vunpack.c.l.b16 %v809
    %v818 = vunpack.c.l.b16 %v810
    %v819 = vunpack.c.l.b16 %v811
    %v820 = vunpack.c.l.b16 %v812
    %v821 = vpack.c.b16 %v818, %v817
    %v822 = vpack.c.b16 %v820, %v819
    %824 = vrot.lane.b32.xlu0 %v763, 96
    %v825 = vpop.permute.xlu0 %824
    %v828 = vsel %vm421, %v821, 0
    %v831 = vsel %vm421, %v822, 0
    %833 = vmatpush.bf16.msra.mxu0 0
    %834 = vmatpush.bf16.msra.mxu0 0
    %835 = vmatpush.bf16.msra.mxu0 0
    %836 = vmatpush.bf16.msra.mxu0 0
    %837 = vmatpush.bf16.msra.mxu0 0
    %838 = vmatpush.bf16.msra.mxu0 0
    %839 = vmatpush.bf16.msra.mxu0 0
    %840 = vmatpush.bf16.msra.mxu0 %v825
    %841 = vmatmul.bf16.gmra.mxu0 %v828
    %v842 = vpop.f32.mrf.mxu0
    %v843 = vadd.f32 0.0, %v842
    %v844 = vpop.f32.mrf.mxu0
    %v845 = vadd.f32 0.0, %v844
    %846 = vmatmul.bf16.gmra.mxu0 %v831
    %v847 = vpop.f32.mrf.mxu0
    %v848 = vadd.f32 0.0, %v847
    %v849 = vpop.f32.mrf.mxu0
    %v850 = vadd.f32 0.0, %v849
    %851 = vdwg.mxu0
    %v852 = vadd.f32 %v804, %v843
    %v853 = vadd.f32 %v805, %v845
    %v854 = vadd.f32 %v806, %v848
    %v855 = vadd.f32 %v807, %v850
    %s856 = scalar_lea.vmem %s4, 160
    %v857 = vld [vmem:[%s856] sm:$0xf]
    %v858 = vld [vmem:[%s856 + $0x4] sm:$0xf]
    %v859 = vld [vmem:[%s856 + $0x8] sm:$0xf]
    %v860 = vld [vmem:[%s856 + $0xc] sm:$0xf]
    %v865 = vunpack.c.l.b16 %v857
    %v866 = vunpack.c.l.b16 %v858
    %v867 = vunpack.c.l.b16 %v859
    %v868 = vunpack.c.l.b16 %v860
    %v869 = vpack.c.b16 %v866, %v865
    %v870 = vpack.c.b16 %v868, %v867
    %871 = vrot.lane.b32.xlu0 %v763, 64
    %v872 = vpop.permute.xlu0 %871
    %v875 = vsel %vm421, %v869, 0
    %v878 = vsel %vm421, %v870, 0
    %880 = vmatpush.bf16.msra.mxu0 0
    %881 = vmatpush.bf16.msra.mxu0 0
    %882 = vmatpush.bf16.msra.mxu0 0
    %883 = vmatpush.bf16.msra.mxu0 0
    %884 = vmatpush.bf16.msra.mxu0 0
    %885 = vmatpush.bf16.msra.mxu0 0
    %886 = vmatpush.bf16.msra.mxu0 0
    %887 = vmatpush.bf16.msra.mxu0 %v872
    %888 = vmatmul.bf16.gmra.mxu0 %v875
    %v889 = vpop.f32.mrf.mxu0
    %v890 = vadd.f32 0.0, %v889
    %v891 = vpop.f32.mrf.mxu0
    %v892 = vadd.f32 0.0, %v891
    %893 = vmatmul.bf16.gmra.mxu0 %v878
    %v894 = vpop.f32.mrf.mxu0
    %v895 = vadd.f32 0.0, %v894
    %v896 = vpop.f32.mrf.mxu0
    %v897 = vadd.f32 0.0, %v896
    %898 = vdwg.mxu0
    %v899 = vadd.f32 %v852, %v890
    %v900 = vadd.f32 %v853, %v892
    %v901 = vadd.f32 %v854, %v895
    %v902 = vadd.f32 %v855, %v897
    %s903 = scalar_lea.vmem %s4, 176
    %v904 = vld [vmem:[%s903] sm:$0xf]
    %v905 = vld [vmem:[%s903 + $0x4] sm:$0xf]
    %v906 = vld [vmem:[%s903 + $0x8] sm:$0xf]
    %v907 = vld [vmem:[%s903 + $0xc] sm:$0xf]
    %v912 = vunpack.c.l.b16 %v904
    %v913 = vunpack.c.l.b16 %v905
    %v914 = vunpack.c.l.b16 %v906
    %v915 = vunpack.c.l.b16 %v907
    %v916 = vpack.c.b16 %v913, %v912
    %v917 = vpack.c.b16 %v915, %v914
    %918 = vrot.lane.b32.xlu0 %v763, 32
    %v919 = vpop.permute.xlu0 %918
    %v922 = vsel %vm421, %v916, 0
    %v925 = vsel %vm421, %v917, 0
    %927 = vmatpush.bf16.msra.mxu0 0
    %928 = vmatpush.bf16.msra.mxu0 0
    %929 = vmatpush.bf16.msra.mxu0 0
    %930 = vmatpush.bf16.msra.mxu0 0
    %931 = vmatpush.bf16.msra.mxu0 0
    %932 = vmatpush.bf16.msra.mxu0 0
    %933 = vmatpush.bf16.msra.mxu0 0
    %934 = vmatpush.bf16.msra.mxu0 %v919
    %935 = vmatmul.bf16.gmra.mxu0 %v922
    %v936 = vpop.f32.mrf.mxu0
    %v937 = vadd.f32 0.0, %v936
    %v938 = vpop.f32.mrf.mxu0
    %v939 = vadd.f32 0.0, %v938
    %940 = vmatmul.bf16.gmra.mxu0 %v925
    %v941 = vpop.f32.mrf.mxu0
    %v942 = vadd.f32 0.0, %v941
    %v943 = vpop.f32.mrf.mxu0
    %v944 = vadd.f32 0.0, %v943
    %945 = vdwg.mxu0
    %v946 = vadd.f32 %v899, %v937
    %v947 = vadd.f32 %v900, %v939
    %v948 = vadd.f32 %v901, %v942
    %v949 = vadd.f32 %v902, %v944
    %v950 = vpack.c.bf16 %v395, %v393
    %s951 = scalar_lea.vmem %s4, 192
    %v952 = vld [vmem:[%s951] sm:$0xf]
    %v953 = vld [vmem:[%s951 + $0x4] sm:$0xf]
    %v954 = vld [vmem:[%s951 + $0x8] sm:$0xf]
    %v955 = vld [vmem:[%s951 + $0xc] sm:$0xf]
    %v960 = vunpack.c.l.b16 %v952
    %v961 = vunpack.c.l.b16 %v953
    %v962 = vunpack.c.l.b16 %v954
    %v963 = vunpack.c.l.b16 %v955
    %v964 = vpack.c.b16 %v961, %v960
    %v965 = vpack.c.b16 %v963, %v962
    %v967 = vsel %vm421, %v964, 0
    %v970 = vsel %vm421, %v965, 0
    %972 = vmatpush.bf16.msra.mxu0 0
    %973 = vmatpush.bf16.msra.mxu0 0
    %974 = vmatpush.bf16.msra.mxu0 0
    %975 = vmatpush.bf16.msra.mxu0 0
    %976 = vmatpush.bf16.msra.mxu0 0
    %977 = vmatpush.bf16.msra.mxu0 0
    %978 = vmatpush.bf16.msra.mxu0 0
    %979 = vmatpush.bf16.msra.mxu0 %v950
    %980 = vmatmul.bf16.gmra.mxu0 %v967
    %v981 = vpop.f32.mrf.mxu0
    %v982 = vadd.f32 0.0, %v981
    %v983 = vpop.f32.mrf.mxu0
    %v984 = vadd.f32 0.0, %v983
    %985 = vmatmul.bf16.gmra.mxu0 %v970
    %v986 = vpop.f32.mrf.mxu0
    %v987 = vadd.f32 0.0, %v986
    %v988 = vpop.f32.mrf.mxu0
    %v989 = vadd.f32 0.0, %v988
    %990 = vdwg.mxu0
    %v991 = vadd.f32 %v946, %v982
    %v992 = vadd.f32 %v947, %v984
    %v993 = vadd.f32 %v948, %v987
    %v994 = vadd.f32 %v949, %v989
    %s995 = scalar_lea.vmem %s4, 208
    %v996 = vld [vmem:[%s995] sm:$0xf]
    %v997 = vld [vmem:[%s995 + $0x4] sm:$0xf]
    %v998 = vld [vmem:[%s995 + $0x8] sm:$0xf]
    %v999 = vld [vmem:[%s995 + $0xc] sm:$0xf]
    %v1004 = vunpack.c.l.b16 %v996
    %v1005 = vunpack.c.l.b16 %v997
    %v1006 = vunpack.c.l.b16 %v998
    %v1007 = vunpack.c.l.b16 %v999
    %v1008 = vpack.c.b16 %v1005, %v1004
    %v1009 = vpack.c.b16 %v1007, %v1006
    %1011 = vrot.lane.b32.xlu0 %v950, 96
    %v1012 = vpop.permute.xlu0 %1011
    %v1015 = vsel %vm421, %v1008, 0
    %v1018 = vsel %vm421, %v1009, 0
    %1020 = vmatpush.bf16.msra.mxu0 0
    %1021 = vmatpush.bf16.msra.mxu0 0
    %1022 = vmatpush.bf16.msra.mxu0 0
    %1023 = vmatpush.bf16.msra.mxu0 0
    %1024 = vmatpush.bf16.msra.mxu0 0
    %1025 = vmatpush.bf16.msra.mxu0 0
    %1026 = vmatpush.bf16.msra.mxu0 0
    %1027 = vmatpush.bf16.msra.mxu0 %v1012
    %1028 = vmatmul.bf16.gmra.mxu0 %v1015
    %v1029 = vpop.f32.mrf.mxu0
    %v1030 = vadd.f32 0.0, %v1029
    %v1031 = vpop.f32.mrf.mxu0
    %v1032 = vadd.f32 0.0, %v1031
    %1033 = vmatmul.bf16.gmra.mxu0 %v1018
    %v1034 = vpop.f32.mrf.mxu0
    %v1035 = vadd.f32 0.0, %v1034
    %v1036 = vpop.f32.mrf.mxu0
    %v1037 = vadd.f32 0.0, %v1036
    %1038 = vdwg.mxu0
    %v1039 = vadd.f32 %v991, %v1030
    %v1040 = vadd.f32 %v992, %v1032
    %v1041 = vadd.f32 %v993, %v1035
    %v1042 = vadd.f32 %v994, %v1037
    %s1043 = scalar_lea.vmem %s4, 224
    %v1044 = vld [vmem:[%s1043] sm:$0xf]
    %v1045 = vld [vmem:[%s1043 + $0x4] sm:$0xf]
    %v1046 = vld [vmem:[%s1043 + $0x8] sm:$0xf]
    %v1047 = vld [vmem:[%s1043 + $0xc] sm:$0xf]
    %v1052 = vunpack.c.l.b16 %v1044
    %v1053 = vunpack.c.l.b16 %v1045
    %v1054 = vunpack.c.l.b16 %v1046
    %v1055 = vunpack.c.l.b16 %v1047
    %v1056 = vpack.c.b16 %v1053, %v1052
    %v1057 = vpack.c.b16 %v1055, %v1054
    %1058 = vrot.lane.b32.xlu0 %v950, 64
    %v1059 = vpop.permute.xlu0 %1058
    %v1062 = vsel %vm421, %v1056, 0
    %v1065 = vsel %vm421, %v1057, 0
    %1067 = vmatpush.bf16.msra.mxu0 0
    %1068 = vmatpush.bf16.msra.mxu0 0
    %1069 = vmatpush.bf16.msra.mxu0 0
    %1070 = vmatpush.bf16.msra.mxu0 0
    %1071 = vmatpush.bf16.msra.mxu0 0
    %1072 = vmatpush.bf16.msra.mxu0 0
    %1073 = vmatpush.bf16.msra.mxu0 0
    %1074 = vmatpush.bf16.msra.mxu0 %v1059
    %1075 = vmatmul.bf16.gmra.mxu0 %v1062
    %v1076 = vpop.f32.mrf.mxu0
    %v1077 = vadd.f32 0.0, %v1076
    %v1078 = vpop.f32.mrf.mxu0
    %v1079 = vadd.f32 0.0, %v1078
    %1080 = vmatmul.bf16.gmra.mxu0 %v1065
    %v1081 = vpop.f32.mrf.mxu0
    %v1082 = vadd.f32 0.0, %v1081
    %v1083 = vpop.f32.mrf.mxu0
    %v1084 = vadd.f32 0.0, %v1083
    %1085 = vdwg.mxu0
    %v1086 = vadd.f32 %v1039, %v1077
    %v1087 = vadd.f32 %v1040, %v1079
    %v1088 = vadd.f32 %v1041, %v1082
    %v1089 = vadd.f32 %v1042, %v1084
    %s1090 = scalar_lea.vmem %s4, 240
    %v1091 = vld [vmem:[%s1090] sm:$0xf]
    %v1092 = vld [vmem:[%s1090 + $0x4] sm:$0xf]
    %v1093 = vld [vmem:[%s1090 + $0x8] sm:$0xf]
    %v1094 = vld [vmem:[%s1090 + $0xc] sm:$0xf]
    %v1099 = vunpack.c.l.b16 %v1091
    %v1100 = vunpack.c.l.b16 %v1092
    %v1101 = vunpack.c.l.b16 %v1093
    %v1102 = vunpack.c.l.b16 %v1094
    %v1103 = vpack.c.b16 %v1100, %v1099
    %v1104 = vpack.c.b16 %v1102, %v1101
    %1105 = vrot.lane.b32.xlu0 %v950, 32
    %v1106 = vpop.permute.xlu0 %1105
    %v1109 = vsel %vm421, %v1103, 0
    %v1112 = vsel %vm421, %v1104, 0
    %1114 = vmatpush.bf16.msra.mxu0 0
    %1115 = vmatpush.bf16.msra.mxu0 0
    %1116 = vmatpush.bf16.msra.mxu0 0
    %1117 = vmatpush.bf16.msra.mxu0 0
    %1118 = vmatpush.bf16.msra.mxu0 0
    %1119 = vmatpush.bf16.msra.mxu0 0
    %1120 = vmatpush.bf16.msra.mxu0 0
    %1121 = vmatpush.bf16.msra.mxu0 %v1106
    %1122 = vmatmul.bf16.gmra.mxu0 %v1109
    %v1123 = vpop.f32.mrf.mxu0
    %v1124 = vadd.f32 0.0, %v1123
    %v1125 = vpop.f32.mrf.mxu0
    %v1126 = vadd.f32 0.0, %v1125
    %1127 = vmatmul.bf16.gmra.mxu0 %v1112
    %v1128 = vpop.f32.mrf.mxu0
    %v1129 = vadd.f32 0.0, %v1128
    %v1130 = vpop.f32.mrf.mxu0
    %v1131 = vadd.f32 0.0, %v1130
    %1132 = vdwg.mxu0
    %v1133 = vadd.f32 %v1086, %v1124
    %v1134 = vadd.f32 %v1087, %v1126
    %v1135 = vadd.f32 %v1088, %v1129
    %v1136 = vadd.f32 %v1089, %v1131
    %v1137 = vld [vmem:[%s5] sm:$0xff]
    %v1138 = vld [vmem:[%s5 + $0x8] sm:$0xff]
    %v1139 = vld [vmem:[%s5 + $0x10] sm:$0xff]
    %v1140 = vld [vmem:[%s5 + $0x18] sm:$0xff]
    %1142 = vset.pattern.permute.xlu0 0
    %1143 = vperm.xlu0 %1142, %v1137
    %v1144 = vpop.permute.xlu0 %1143
    %1147 = vset.pattern.permute.xlu0 0
    %1148 = vperm.xlu0 %1147, %v1138
    %v1149 = vpop.permute.xlu0 %1148
    %1152 = vset.pattern.permute.xlu0 0
    %1153 = vperm.xlu0 %1152, %v1139
    %v1154 = vpop.permute.xlu0 %1153
    %1157 = vset.pattern.permute.xlu0 0
    %1158 = vperm.xlu0 %1157, %v1140
    %v1159 = vpop.permute.xlu0 %1158
    %v1161 = vadd.f32 %v1133, %v1144
    %v1162 = vadd.f32 %v1134, %v1149
    %v1163 = vadd.f32 %v1135, %v1154
    %v1164 = vadd.f32 %v1136, %v1159
    %vm1165 = vcmp.ge.f32.partialorder %v1161, 0.0
    %vm1166 = vcmp.ge.f32.partialorder %v1162, 0.0
    %vm1167 = vcmp.ge.f32.partialorder %v1163, 0.0
    %vm1168 = vcmp.ge.f32.partialorder %v1164, 0.0
    %v1169 = vmul.f32 %v1161, 0.2
    %v1170 = vmul.f32 %v1162, 0.2
    %v1171 = vmul.f32 %v1163, 0.2
    %v1172 = vmul.f32 %v1164, 0.2
    %v1173 = vsel %vm1165, %v1161, %v1169
    %v1174 = vsel %vm1166, %v1162, %v1170
    %v1175 = vsel %vm1167, %v1163, %v1171
    %v1176 = vsel %vm1168, %v1164, %v1172
    %v1177 = vpack.c.bf16 %v1174, %v1173
    %v1178 = vpack.c.bf16 %v1176, %v1175
    %v1179 = vld [vmem:[%s6] sm:$0xff]
    %v1180 = vld [vmem:[%s6 + $0x8] sm:$0xf]
    %v1181 = vld [vmem:[%s6 + $0xc] sm:$0xff]
    %v1182 = vld [vmem:[%s6 + $0x14] sm:$0xf]
    %v1183 = vld [vmem:[%s6 + $0x18] sm:$0xff]
    %v1184 = vld [vmem:[%s6 + $0x20] sm:$0xf]
    %v1185 = vld [vmem:[%s6 + $0x24] sm:$0xff]
    %v1186 = vld [vmem:[%s6 + $0x2c] sm:$0xf]
    %v1195 = vunpack.c.l.b16 %v1179
    %v1196 = vunpack.c.h.b16 %v1179
    %v1197 = vunpack.c.l.b16 %v1180
    %v1198 = vunpack.c.l.b16 %v1181
    %v1199 = vunpack.c.h.b16 %v1181
    %v1200 = vunpack.c.l.b16 %v1182
    %v1201 = vunpack.c.l.b16 %v1183
    %v1202 = vunpack.c.h.b16 %v1183
    %v1203 = vunpack.c.l.b16 %v1184
    %v1204 = vunpack.c.l.b16 %v1185
    %v1205 = vunpack.c.h.b16 %v1185
    %v1206 = vunpack.c.l.b16 %v1186
    %v1207 = vpack.c.b16 %v1198, %v1195
    %v1208 = vpack.c.b16 %v1199, %v1196
    %v1209 = vpack.c.b16 %v1200, %v1197
    %v1210 = vpack.c.b16 %v1204, %v1201
    %v1211 = vpack.c.b16 %v1205, %v1202
    %v1212 = vpack.c.b16 %v1206, %v1203
    %vm1219 = vcmask 261120
    %v1221 = vsel %vm1219, %v1177, 0
    %v1224 = vsel %vm1219, %v1178, 0
    %1226 = vmatpush.bf16.msra.mxu0 0
    %1227 = vmatpush.bf16.msra.mxu0 0
    %1228 = vmatpush.bf16.msra.mxu0 0
    %1229 = vmatpush.bf16.msra.mxu0 0
    %1230 = vmatpush.bf16.msra.mxu0 0
    %1231 = vmatpush.bf16.msra.mxu0 0
    %1232 = vmatpush.bf16.msra.mxu0 %v1210
    %1233 = vmatpush.bf16.msra.mxu0 %v1207
    %1234 = vmatmul.bf16.gmra.mxu0 %v1221
    %v1235 = vpop.f32.mrf.mxu0
    %v1236 = vadd.f32 0.0, %v1235
    %v1237 = vpop.f32.mrf.mxu0
    %v1238 = vadd.f32 0.0, %v1237
    %1239 = vmatmul.bf16.gmra.mxu0 %v1224
    %v1240 = vpop.f32.mrf.mxu0
    %v1241 = vadd.f32 0.0, %v1240
    %v1242 = vpop.f32.mrf.mxu0
    %v1243 = vadd.f32 0.0, %v1242
    %1244 = vdwg.mxu0
    %1245 = vmatpush.bf16.msra.mxu0 0
    %1246 = vmatpush.bf16.msra.mxu0 0
    %1247 = vmatpush.bf16.msra.mxu0 0
    %1248 = vmatpush.bf16.msra.mxu0 0
    %1249 = vmatpush.bf16.msra.mxu0 0
    %1250 = vmatpush.bf16.msra.mxu0 0
    %1251 = vmatpush.bf16.msra.mxu0 %v1211
    %1252 = vmatpush.bf16.msra.mxu0 %v1208
    %1253 = vmatmul.bf16.gmra.mxu0 %v1221
    %v1254 = vpop.f32.mrf.mxu0
    %v1255 = vadd.f32 0.0, %v1254
    %v1256 = vpop.f32.mrf.mxu0
    %v1257 = vadd.f32 0.0, %v1256
    %1258 = vmatmul.bf16.gmra.mxu0 %v1224
    %v1259 = vpop.f32.mrf.mxu0
    %v1260 = vadd.f32 0.0, %v1259
    %v1261 = vpop.f32.mrf.mxu0
    %v1262 = vadd.f32 0.0, %v1261
    %1263 = vdwg.mxu0
    %1264 = vmatpush.bf16.msra.mxu0 0
    %1265 = vmatpush.bf16.msra.mxu0 0
    %1266 = vmatpush.bf16.msra.mxu0 0
    %1267 = vmatpush.bf16.msra.mxu0 0
    %1268 = vmatpush.bf16.msra.mxu0 0
    %1269 = vmatpush.bf16.msra.mxu0 0
    %1270 = vmatpush.bf16.msra.mxu0 %v1212
    %1271 = vmatpush.bf16.msra.mxu0 %v1209
    %1272 = vmatmul.bf16.gmra.mxu0 %v1221
    %v1273 = vpop.f32.mrf.mxu0
    %v1274 = vadd.f32 0.0, %v1273
    %v1275 = vpop.f32.mrf.mxu0
    %v1276 = vadd.f32 0.0, %v1275
    %1277 = vmatmul.bf16.gmra.mxu0 %v1224
    %v1278 = vpop.f32.mrf.mxu0
    %v1279 = vadd.f32 0.0, %v1278
    %v1280 = vpop.f32.mrf.mxu0
    %v1281 = vadd.f32 0.0, %v1280
    %1282 = vdwg.mxu0
    %v1283 = vpack.c.bf16 %v1238, %v1236
    %v1284 = vpack.c.bf16 %v1243, %v1241
    %v1285 = vld [vmem:[%s7] sm:$0xf]
    %v1286 = vld [vmem:[%s7 + $0x4] sm:$0xf]
    %v1287 = vld [vmem:[%s7 + $0x8] sm:$0xf]
    %v1288 = vld [vmem:[%s7 + $0xc] sm:$0xf]
    %v1289 = vld [vmem:[%s7 + $0x10] sm:$0xf]
    %v1290 = vld [vmem:[%s7 + $0x14] sm:$0xf]
    %v1291 = vld [vmem:[%s7 + $0x18] sm:$0xf]
    %v1292 = vld [vmem:[%s7 + $0x1c] sm:$0xf]
    %s1293 = scalar_lea.vmem %s7, 32
    %v1294 = vld [vmem:[%s1293] sm:$0xf]
    %v1295 = vld [vmem:[%s1293 + $0x4] sm:$0xf]
    %v1296 = vld [vmem:[%s1293 + $0x8] sm:$0xf]
    %v1297 = vld [vmem:[%s1293 + $0xc] sm:$0xf]
    %v1298 = vld [vmem:[%s1293 + $0x10] sm:$0xf]
    %v1299 = vld [vmem:[%s1293 + $0x14] sm:$0xf]
    %v1300 = vld [vmem:[%s1293 + $0x18] sm:$0xf]
    %v1301 = vld [vmem:[%s1293 + $0x1c] sm:$0xf]
    %v1310 = vunpack.c.l.b16 %v1294
    %v1311 = vunpack.c.l.b16 %v1295
    %v1312 = vunpack.c.l.b16 %v1296
    %v1313 = vunpack.c.l.b16 %v1297
    %v1314 = vunpack.c.l.b16 %v1298
    %v1315 = vunpack.c.l.b16 %v1299
    %v1316 = vunpack.c.l.b16 %v1300
    %v1317 = vunpack.c.l.b16 %v1301
    %v1318 = vpack.c.b16 %v1311, %v1310
    %v1319 = vpack.c.b16 %v1313, %v1312
    %v1320 = vpack.c.b16 %v1315, %v1314
    %v1321 = vpack.c.b16 %v1317, %v1316
    %1324 = vrot.lane.b32.xlu0 %v1283, 110
    %v1325 = vpop.permute.xlu0 %1324
    %1326 = vrot.lane.b32.xlu0 %v1284, 110
    %v1327 = vpop.permute.xlu0 %1326
    %v1331 = vsel %vm1219, %v1318, 0
    %v1334 = vsel %vm1219, %v1319, 0
    %v1337 = vsel %vm1219, %v1320, 0
    %v1340 = vsel %vm1219, %v1321, 0
    %1342 = vmatpush.bf16.msra.mxu0 0
    %1343 = vmatpush.bf16.msra.mxu0 0
    %1344 = vmatpush.bf16.msra.mxu0 0
    %1345 = vmatpush.bf16.msra.mxu0 0
    %1346 = vmatpush.bf16.msra.mxu0 0
    %1347 = vmatpush.bf16.msra.mxu0 0
    %1348 = vmatpush.bf16.msra.mxu0 %v1327
    %1349 = vmatpush.bf16.msra.mxu0 %v1325
    %1350 = vmatmul.bf16.gmra.mxu0 %v1331
    %v1351 = vpop.f32.mrf.mxu0
    %v1352 = vadd.f32 0.0, %v1351
    %v1353 = vpop.f32.mrf.mxu0
    %v1354 = vadd.f32 0.0, %v1353
    %1355 = vmatmul.bf16.gmra.mxu0 %v1334
    %v1356 = vpop.f32.mrf.mxu0
    %v1357 = vadd.f32 0.0, %v1356
    %v1358 = vpop.f32.mrf.mxu0
    %v1359 = vadd.f32 0.0, %v1358
    %1360 = vmatmul.bf16.gmra.mxu0 %v1337
    %v1361 = vpop.f32.mrf.mxu0
    %v1362 = vadd.f32 0.0, %v1361
    %v1363 = vpop.f32.mrf.mxu0
    %v1364 = vadd.f32 0.0, %v1363
    %1365 = vmatmul.bf16.gmra.mxu0 %v1340
    %v1366 = vpop.f32.mrf.mxu0
    %v1367 = vadd.f32 0.0, %v1366
    %v1368 = vpop.f32.mrf.mxu0
    %v1369 = vadd.f32 0.0, %v1368
    %1370 = vdwg.mxu0
    %v1379 = vunpack.c.l.b16 %v1285
    %v1380 = vunpack.c.l.b16 %v1286
    %v1381 = vunpack.c.l.b16 %v1287
    %v1382 = vunpack.c.l.b16 %v1288
    %v1383 = vunpack.c.l.b16 %v1289
    %v1384 = vunpack.c.l.b16 %v1290
    %v1385 = vunpack.c.l.b16 %v1291
    %v1386 = vunpack.c.l.b16 %v1292
    %v1387 = vpack.c.b16 %v1380, %v1379
    %v1388 = vpack.c.b16 %v1382, %v1381
    %v1389 = vpack.c.b16 %v1384, %v1383
    %v1390 = vpack.c.b16 %v1386, %v1385
    %v1392 = vsel %vm1219, %v1387, 0
    %v1395 = vsel %vm1219, %v1388, 0
    %v1398 = vsel %vm1219, %v1389, 0
    %v1401 = vsel %vm1219, %v1390, 0
    %1403 = vmatpush.bf16.msra.mxu0 0
    %1404 = vmatpush.bf16.msra.mxu0 0
    %1405 = vmatpush.bf16.msra.mxu0 0
    %1406 = vmatpush.bf16.msra.mxu0 0
    %1407 = vmatpush.bf16.msra.mxu0 0
    %1408 = vmatpush.bf16.msra.mxu0 0
    %1409 = vmatpush.bf16.msra.mxu0 %v1284
    %1410 = vmatpush.bf16.msra.mxu0 %v1283
    %1411 = vmatmul.bf16.gmra.mxu0 %v1392
    %v1412 = vpop.f32.mrf.mxu0
    %v1413 = vadd.f32 %v1352, %v1412
    %v1414 = vpop.f32.mrf.mxu0
    %v1415 = vadd.f32 %v1354, %v1414
    %1416 = vmatmul.bf16.gmra.mxu0 %v1395
    %v1417 = vpop.f32.mrf.mxu0
    %v1418 = vadd.f32 %v1357, %v1417
    %v1419 = vpop.f32.mrf.mxu0
    %v1420 = vadd.f32 %v1359, %v1419
    %1421 = vmatmul.bf16.gmra.mxu0 %v1398
    %v1422 = vpop.f32.mrf.mxu0
    %v1423 = vadd.f32 %v1362, %v1422
    %v1424 = vpop.f32.mrf.mxu0
    %v1425 = vadd.f32 %v1364, %v1424
    %1426 = vmatmul.bf16.gmra.mxu0 %v1401
    %v1427 = vpop.f32.mrf.mxu0
    %v1428 = vadd.f32 %v1367, %v1427
    %v1429 = vpop.f32.mrf.mxu0
    %v1430 = vadd.f32 %v1369, %v1429
    %1431 = vdwg.mxu0
    %s1432 = scalar_lea.vmem %s7, 64
    %v1433 = vld [vmem:[%s1432] sm:$0xf]
    %v1434 = vld [vmem:[%s1432 + $0x4] sm:$0xf]
    %v1435 = vld [vmem:[%s1432 + $0x8] sm:$0xf]
    %v1436 = vld [vmem:[%s1432 + $0xc] sm:$0xf]
    %v1437 = vld [vmem:[%s1432 + $0x10] sm:$0xf]
    %v1438 = vld [vmem:[%s1432 + $0x14] sm:$0xf]
    %v1439 = vld [vmem:[%s1432 + $0x18] sm:$0xf]
    %v1440 = vld [vmem:[%s1432 + $0x1c] sm:$0xf]
    %v1449 = vunpack.c.l.b16 %v1433
    %v1450 = vunpack.c.l.b16 %v1434
    %v1451 = vunpack.c.l.b16 %v1435
    %v1452 = vunpack.c.l.b16 %v1436
    %v1453 = vunpack.c.l.b16 %v1437
    %v1454 = vunpack.c.l.b16 %v1438
    %v1455 = vunpack.c.l.b16 %v1439
    %v1456 = vunpack.c.l.b16 %v1440
    %v1457 = vpack.c.b16 %v1450, %v1449
    %v1458 = vpack.c.b16 %v1452, %v1451
    %v1459 = vpack.c.b16 %v1454, %v1453
    %v1460 = vpack.c.b16 %v1456, %v1455
    %1461 = vrot.lane.b32.xlu0 %v1283, 92
    %v1462 = vpop.permute.xlu0 %1461
    %1463 = vrot.lane.b32.xlu0 %v1284, 92
    %v1464 = vpop.permute.xlu0 %1463
    %v1468 = vsel %vm1219, %v1457, 0
    %v1471 = vsel %vm1219, %v1458, 0
    %v1474 = vsel %vm1219, %v1459, 0
    %v1477 = vsel %vm1219, %v1460, 0
    %1479 = vmatpush.bf16.msra.mxu0 0
    %1480 = vmatpush.bf16.msra.mxu0 0
    %1481 = vmatpush.bf16.msra.mxu0 0
    %1482 = vmatpush.bf16.msra.mxu0 0
    %1483 = vmatpush.bf16.msra.mxu0 0
    %1484 = vmatpush.bf16.msra.mxu0 0
    %1485 = vmatpush.bf16.msra.mxu0 %v1464
    %1486 = vmatpush.bf16.msra.mxu0 %v1462
    %1487 = vmatmul.bf16.gmra.mxu0 %v1468
    %v1488 = vpop.f32.mrf.mxu0
    %v1489 = vadd.f32 0.0, %v1488
    %v1490 = vpop.f32.mrf.mxu0
    %v1491 = vadd.f32 0.0, %v1490
    %1492 = vmatmul.bf16.gmra.mxu0 %v1471
    %v1493 = vpop.f32.mrf.mxu0
    %v1494 = vadd.f32 0.0, %v1493
    %v1495 = vpop.f32.mrf.mxu0
    %v1496 = vadd.f32 0.0, %v1495
    %1497 = vmatmul.bf16.gmra.mxu0 %v1474
    %v1498 = vpop.f32.mrf.mxu0
    %v1499 = vadd.f32 0.0, %v1498
    %v1500 = vpop.f32.mrf.mxu0
    %v1501 = vadd.f32 0.0, %v1500
    %1502 = vmatmul.bf16.gmra.mxu0 %v1477
    %v1503 = vpop.f32.mrf.mxu0
    %v1504 = vadd.f32 0.0, %v1503
    %v1505 = vpop.f32.mrf.mxu0
    %v1506 = vadd.f32 0.0, %v1505
    %1507 = vdwg.mxu0
    %v1508 = vadd.f32 %v1413, %v1489
    %v1509 = vadd.f32 %v1415, %v1491
    %v1510 = vadd.f32 %v1418, %v1494
    %v1511 = vadd.f32 %v1420, %v1496
    %v1512 = vadd.f32 %v1423, %v1499
    %v1513 = vadd.f32 %v1425, %v1501
    %v1514 = vadd.f32 %v1428, %v1504
    %v1515 = vadd.f32 %v1430, %v1506
    %s1516 = scalar_lea.vmem %s7, 96
    %v1517 = vld [vmem:[%s1516] sm:$0xf]
    %v1518 = vld [vmem:[%s1516 + $0x4] sm:$0xf]
    %v1519 = vld [vmem:[%s1516 + $0x8] sm:$0xf]
    %v1520 = vld [vmem:[%s1516 + $0xc] sm:$0xf]
    %v1521 = vld [vmem:[%s1516 + $0x10] sm:$0xf]
    %v1522 = vld [vmem:[%s1516 + $0x14] sm:$0xf]
    %v1523 = vld [vmem:[%s1516 + $0x18] sm:$0xf]
    %v1524 = vld [vmem:[%s1516 + $0x1c] sm:$0xf]
    %v1533 = vunpack.c.l.b16 %v1517
    %v1534 = vunpack.c.l.b16 %v1518
    %v1535 = vunpack.c.l.b16 %v1519
    %v1536 = vunpack.c.l.b16 %v1520
    %v1537 = vunpack.c.l.b16 %v1521
    %v1538 = vunpack.c.l.b16 %v1522
    %v1539 = vunpack.c.l.b16 %v1523
    %v1540 = vunpack.c.l.b16 %v1524
    %v1541 = vpack.c.b16 %v1534, %v1533
    %v1542 = vpack.c.b16 %v1536, %v1535
    %v1543 = vpack.c.b16 %v1538, %v1537
    %v1544 = vpack.c.b16 %v1540, %v1539
    %1545 = vrot.lane.b32.xlu0 %v1283, 74
    %v1546 = vpop.permute.xlu0 %1545
    %1547 = vrot.lane.b32.xlu0 %v1284, 74
    %v1548 = vpop.permute.xlu0 %1547
    %v1552 = vsel %vm1219, %v1541, 0
    %v1555 = vsel %vm1219, %v1542, 0
    %v1558 = vsel %vm1219, %v1543, 0
    %v1561 = vsel %vm1219, %v1544, 0
    %1563 = vmatpush.bf16.msra.mxu0 0
    %1564 = vmatpush.bf16.msra.mxu0 0
    %1565 = vmatpush.bf16.msra.mxu0 0
    %1566 = vmatpush.bf16.msra.mxu0 0
    %1567 = vmatpush.bf16.msra.mxu0 0
    %1568 = vmatpush.bf16.msra.mxu0 0
    %1569 = vmatpush.bf16.msra.mxu0 %v1548
    %1570 = vmatpush.bf16.msra.mxu0 %v1546
    %1571 = vmatmul.bf16.gmra.mxu0 %v1552
    %v1572 = vpop.f32.mrf.mxu0
    %v1573 = vadd.f32 0.0, %v1572
    %v1574 = vpop.f32.mrf.mxu0
    %v1575 = vadd.f32 0.0, %v1574
    %1576 = vmatmul.bf16.gmra.mxu0 %v1555
    %v1577 = vpop.f32.mrf.mxu0
    %v1578 = vadd.f32 0.0, %v1577
    %v1579 = vpop.f32.mrf.mxu0
    %v1580 = vadd.f32 0.0, %v1579
    %1581 = vmatmul.bf16.gmra.mxu0 %v1558
    %v1582 = vpop.f32.mrf.mxu0
    %v1583 = vadd.f32 0.0, %v1582
    %v1584 = vpop.f32.mrf.mxu0
    %v1585 = vadd.f32 0.0, %v1584
    %1586 = vmatmul.bf16.gmra.mxu0 %v1561
    %v1587 = vpop.f32.mrf.mxu0
    %v1588 = vadd.f32 0.0, %v1587
    %v1589 = vpop.f32.mrf.mxu0
    %v1590 = vadd.f32 0.0, %v1589
    %1591 = vdwg.mxu0
    %v1592 = vadd.f32 %v1508, %v1573
    %v1593 = vadd.f32 %v1509, %v1575
    %v1594 = vadd.f32 %v1510, %v1578
    %v1595 = vadd.f32 %v1511, %v1580
    %v1596 = vadd.f32 %v1512, %v1583
    %v1597 = vadd.f32 %v1513, %v1585
    %v1598 = vadd.f32 %v1514, %v1588
    %v1599 = vadd.f32 %v1515, %v1590
    %s1600 = scalar_lea.vmem %s7, 128
    %v1601 = vld [vmem:[%s1600] sm:$0xf]
    %v1602 = vld [vmem:[%s1600 + $0x4] sm:$0xf]
    %v1603 = vld [vmem:[%s1600 + $0x8] sm:$0xf]
    %v1604 = vld [vmem:[%s1600 + $0xc] sm:$0xf]
    %v1605 = vld [vmem:[%s1600 + $0x10] sm:$0xf]
    %v1606 = vld [vmem:[%s1600 + $0x14] sm:$0xf]
    %v1607 = vld [vmem:[%s1600 + $0x18] sm:$0xf]
    %v1608 = vld [vmem:[%s1600 + $0x1c] sm:$0xf]
    %v1617 = vunpack.c.l.b16 %v1601
    %v1618 = vunpack.c.l.b16 %v1602
    %v1619 = vunpack.c.l.b16 %v1603
    %v1620 = vunpack.c.l.b16 %v1604
    %v1621 = vunpack.c.l.b16 %v1605
    %v1622 = vunpack.c.l.b16 %v1606
    %v1623 = vunpack.c.l.b16 %v1607
    %v1624 = vunpack.c.l.b16 %v1608
    %v1625 = vpack.c.b16 %v1618, %v1617
    %v1626 = vpack.c.b16 %v1620, %v1619
    %v1627 = vpack.c.b16 %v1622, %v1621
    %v1628 = vpack.c.b16 %v1624, %v1623
    %1629 = vrot.lane.b32.xlu0 %v1283, 56
    %v1630 = vpop.permute.xlu0 %1629
    %1631 = vrot.lane.b32.xlu0 %v1284, 56
    %v1632 = vpop.permute.xlu0 %1631
    %v1636 = vsel %vm1219, %v1625, 0
    %v1639 = vsel %vm1219, %v1626, 0
    %v1642 = vsel %vm1219, %v1627, 0
    %v1645 = vsel %vm1219, %v1628, 0
    %1647 = vmatpush.bf16.msra.mxu0 0
    %1648 = vmatpush.bf16.msra.mxu0 0
    %1649 = vmatpush.bf16.msra.mxu0 0
    %1650 = vmatpush.bf16.msra.mxu0 0
    %1651 = vmatpush.bf16.msra.mxu0 0
    %1652 = vmatpush.bf16.msra.mxu0 0
    %1653 = vmatpush.bf16.msra.mxu0 %v1632
    %1654 = vmatpush.bf16.msra.mxu0 %v1630
    %1655 = vmatmul.bf16.gmra.mxu0 %v1636
    %v1656 = vpop.f32.mrf.mxu0
    %v1657 = vadd.f32 0.0, %v1656
    %v1658 = vpop.f32.mrf.mxu0
    %v1659 = vadd.f32 0.0, %v1658
    %1660 = vmatmul.bf16.gmra.mxu0 %v1639
    %v1661 = vpop.f32.mrf.mxu0
    %v1662 = vadd.f32 0.0, %v1661
    %v1663 = vpop.f32.mrf.mxu0
    %v1664 = vadd.f32 0.0, %v1663
    %1665 = vmatmul.bf16.gmra.mxu0 %v1642
    %v1666 = vpop.f32.mrf.mxu0
    %v1667 = vadd.f32 0.0, %v1666
    %v1668 = vpop.f32.mrf.mxu0
    %v1669 = vadd.f32 0.0, %v1668
    %1670 = vmatmul.bf16.gmra.mxu0 %v1645
    %v1671 = vpop.f32.mrf.mxu0
    %v1672 = vadd.f32 0.0, %v1671
    %v1673 = vpop.f32.mrf.mxu0
    %v1674 = vadd.f32 0.0, %v1673
    %1675 = vdwg.mxu0
    %v1676 = vadd.f32 %v1592, %v1657
    %v1677 = vadd.f32 %v1593, %v1659
    %v1678 = vadd.f32 %v1594, %v1662
    %v1679 = vadd.f32 %v1595, %v1664
    %v1680 = vadd.f32 %v1596, %v1667
    %v1681 = vadd.f32 %v1597, %v1669
    %v1682 = vadd.f32 %v1598, %v1672
    %v1683 = vadd.f32 %v1599, %v1674
    %s1684 = scalar_lea.vmem %s7, 160
    %v1685 = vld [vmem:[%s1684] sm:$0xf]
    %v1686 = vld [vmem:[%s1684 + $0x4] sm:$0xf]
    %v1687 = vld [vmem:[%s1684 + $0x8] sm:$0xf]
    %v1688 = vld [vmem:[%s1684 + $0xc] sm:$0xf]
    %v1689 = vld [vmem:[%s1684 + $0x10] sm:$0xf]
    %v1690 = vld [vmem:[%s1684 + $0x14] sm:$0xf]
    %v1691 = vld [vmem:[%s1684 + $0x18] sm:$0xf]
    %v1692 = vld [vmem:[%s1684 + $0x1c] sm:$0xf]
    %v1701 = vunpack.c.l.b16 %v1685
    %v1702 = vunpack.c.l.b16 %v1686
    %v1703 = vunpack.c.l.b16 %v1687
    %v1704 = vunpack.c.l.b16 %v1688
    %v1705 = vunpack.c.l.b16 %v1689
    %v1706 = vunpack.c.l.b16 %v1690
    %v1707 = vunpack.c.l.b16 %v1691
    %v1708 = vunpack.c.l.b16 %v1692
    %v1709 = vpack.c.b16 %v1702, %v1701
    %v1710 = vpack.c.b16 %v1704, %v1703
    %v1711 = vpack.c.b16 %v1706, %v1705
    %v1712 = vpack.c.b16 %v1708, %v1707
    %1713 = vrot.lane.b32.xlu0 %v1283, 38
    %v1714 = vpop.permute.xlu0 %1713
    %1715 = vrot.lane.b32.xlu0 %v1284, 38
    %v1716 = vpop.permute.xlu0 %1715
    %v1720 = vsel %vm1219, %v1709, 0
    %v1723 = vsel %vm1219, %v1710, 0
    %v1726 = vsel %vm1219, %v1711, 0
    %v1729 = vsel %vm1219, %v1712, 0
    %1731 = vmatpush.bf16.msra.mxu0 0
    %1732 = vmatpush.bf16.msra.mxu0 0
    %1733 = vmatpush.bf16.msra.mxu0 0
    %1734 = vmatpush.bf16.msra.mxu0 0
    %1735 = vmatpush.bf16.msra.mxu0 0
    %1736 = vmatpush.bf16.msra.mxu0 0
    %1737 = vmatpush.bf16.msra.mxu0 %v1716
    %1738 = vmatpush.bf16.msra.mxu0 %v1714
    %1739 = vmatmul.bf16.gmra.mxu0 %v1720
    %v1740 = vpop.f32.mrf.mxu0
    %v1741 = vadd.f32 0.0, %v1740
    %v1742 = vpop.f32.mrf.mxu0
    %v1743 = vadd.f32 0.0, %v1742
    %1744 = vmatmul.bf16.gmra.mxu0 %v1723
    %v1745 = vpop.f32.mrf.mxu0
    %v1746 = vadd.f32 0.0, %v1745
    %v1747 = vpop.f32.mrf.mxu0
    %v1748 = vadd.f32 0.0, %v1747
    %1749 = vmatmul.bf16.gmra.mxu0 %v1726
    %v1750 = vpop.f32.mrf.mxu0
    %v1751 = vadd.f32 0.0, %v1750
    %v1752 = vpop.f32.mrf.mxu0
    %v1753 = vadd.f32 0.0, %v1752
    %1754 = vmatmul.bf16.gmra.mxu0 %v1729
    %v1755 = vpop.f32.mrf.mxu0
    %v1756 = vadd.f32 0.0, %v1755
    %v1757 = vpop.f32.mrf.mxu0
    %v1758 = vadd.f32 0.0, %v1757
    %1759 = vdwg.mxu0
    %v1760 = vadd.f32 %v1676, %v1741
    %v1761 = vadd.f32 %v1677, %v1743
    %v1762 = vadd.f32 %v1678, %v1746
    %v1763 = vadd.f32 %v1679, %v1748
    %v1764 = vadd.f32 %v1680, %v1751
    %v1765 = vadd.f32 %v1681, %v1753
    %v1766 = vadd.f32 %v1682, %v1756
    %v1767 = vadd.f32 %v1683, %v1758
    %s1768 = scalar_lea.vmem %s7, 192
    %v1769 = vld [vmem:[%s1768] sm:$0xf]
    %v1770 = vld [vmem:[%s1768 + $0x4] sm:$0xf]
    %v1771 = vld [vmem:[%s1768 + $0x8] sm:$0xf]
    %v1772 = vld [vmem:[%s1768 + $0xc] sm:$0xf]
    %v1773 = vld [vmem:[%s1768 + $0x10] sm:$0xf]
    %v1774 = vld [vmem:[%s1768 + $0x14] sm:$0xf]
    %v1775 = vld [vmem:[%s1768 + $0x18] sm:$0xf]
    %v1776 = vld [vmem:[%s1768 + $0x1c] sm:$0xf]
    %v1785 = vunpack.c.l.b16 %v1769
    %v1786 = vunpack.c.l.b16 %v1770
    %v1787 = vunpack.c.l.b16 %v1771
    %v1788 = vunpack.c.l.b16 %v1772
    %v1789 = vunpack.c.l.b16 %v1773
    %v1790 = vunpack.c.l.b16 %v1774
    %v1791 = vunpack.c.l.b16 %v1775
    %v1792 = vunpack.c.l.b16 %v1776
    %v1793 = vpack.c.b16 %v1786, %v1785
    %v1794 = vpack.c.b16 %v1788, %v1787
    %v1795 = vpack.c.b16 %v1790, %v1789
    %v1796 = vpack.c.b16 %v1792, %v1791
    %1797 = vrot.lane.b32.xlu0 %v1283, 20
    %v1798 = vpop.permute.xlu0 %1797
    %1799 = vrot.lane.b32.xlu0 %v1284, 20
    %v1800 = vpop.permute.xlu0 %1799
    %v1804 = vsel %vm1219, %v1793, 0
    %v1807 = vsel %vm1219, %v1794, 0
    %v1810 = vsel %vm1219, %v1795, 0
    %v1813 = vsel %vm1219, %v1796, 0
    %1815 = vmatpush.bf16.msra.mxu0 0
    %1816 = vmatpush.bf16.msra.mxu0 0
    %1817 = vmatpush.bf16.msra.mxu0 0
    %1818 = vmatpush.bf16.msra.mxu0 0
    %1819 = vmatpush.bf16.msra.mxu0 0
    %1820 = vmatpush.bf16.msra.mxu0 0
    %1821 = vmatpush.bf16.msra.mxu0 %v1800
    %1822 = vmatpush.bf16.msra.mxu0 %v1798
    %1823 = vmatmul.bf16.gmra.mxu0 %v1804
    %v1824 = vpop.f32.mrf.mxu0
    %v1825 = vadd.f32 0.0, %v1824
    %v1826 = vpop.f32.mrf.mxu0
    %v1827 = vadd.f32 0.0, %v1826
    %1828 = vmatmul.bf16.gmra.mxu0 %v1807
    %v1829 = vpop.f32.mrf.mxu0
    %v1830 = vadd.f32 0.0, %v1829
    %v1831 = vpop.f32.mrf.mxu0
    %v1832 = vadd.f32 0.0, %v1831
    %1833 = vmatmul.bf16.gmra.mxu0 %v1810
    %v1834 = vpop.f32.mrf.mxu0
    %v1835 = vadd.f32 0.0, %v1834
    %v1836 = vpop.f32.mrf.mxu0
    %v1837 = vadd.f32 0.0, %v1836
    %1838 = vmatmul.bf16.gmra.mxu0 %v1813
    %v1839 = vpop.f32.mrf.mxu0
    %v1840 = vadd.f32 0.0, %v1839
    %v1841 = vpop.f32.mrf.mxu0
    %v1842 = vadd.f32 0.0, %v1841
    %1843 = vdwg.mxu0
    %v1844 = vadd.f32 %v1760, %v1825
    %v1845 = vadd.f32 %v1761, %v1827
    %v1846 = vadd.f32 %v1762, %v1830
    %v1847 = vadd.f32 %v1763, %v1832
    %v1848 = vadd.f32 %v1764, %v1835
    %v1849 = vadd.f32 %v1765, %v1837
    %v1850 = vadd.f32 %v1766, %v1840
    %v1851 = vadd.f32 %v1767, %v1842
    %v1852 = vpack.c.bf16 %v1257, %v1255
    %v1853 = vpack.c.bf16 %v1262, %v1260
    %s1854 = scalar_lea.vmem %s7, 224
    %v1855 = vld [vmem:[%s1854] sm:$0xf]
    %v1856 = vld [vmem:[%s1854 + $0x4] sm:$0xf]
    %v1857 = vld [vmem:[%s1854 + $0x8] sm:$0xf]
    %v1858 = vld [vmem:[%s1854 + $0xc] sm:$0xf]
    %v1859 = vld [vmem:[%s1854 + $0x10] sm:$0xf]
    %v1860 = vld [vmem:[%s1854 + $0x14] sm:$0xf]
    %v1861 = vld [vmem:[%s1854 + $0x18] sm:$0xf]
    %v1862 = vld [vmem:[%s1854 + $0x1c] sm:$0xf]
    %v1871 = vunpack.c.l.b16 %v1855
    %v1872 = vunpack.c.l.b16 %v1856
    %v1873 = vunpack.c.l.b16 %v1857
    %v1874 = vunpack.c.l.b16 %v1858
    %v1875 = vunpack.c.l.b16 %v1859
    %v1876 = vunpack.c.l.b16 %v1860
    %v1877 = vunpack.c.l.b16 %v1861
    %v1878 = vunpack.c.l.b16 %v1862
    %v1879 = vpack.c.b16 %v1872, %v1871
    %v1880 = vpack.c.b16 %v1874, %v1873
    %v1881 = vpack.c.b16 %v1876, %v1875
    %v1882 = vpack.c.b16 %v1878, %v1877
    %1885 = vrot.lane.b32.xlu0 %v1283, 2
    %v1886 = vpop.permute.xlu0 %1885
    %1887 = vrot.lane.b32.xlu0 %v1852, 2
    %v1888 = vpop.permute.xlu0 %1887
    %1889 = vrot.lane.b32.xlu0 %v1284, 2
    %v1890 = vpop.permute.xlu0 %1889
    %1891 = vrot.lane.b32.xlu0 %v1853, 2
    %v1892 = vpop.permute.xlu0 %1891
    %vm1893 = vcmask 15360
    %v1894 = vsel %vm1893, %v1886, %v1888
    %v1895 = vsel %vm1893, %v1890, %v1892
    %v1899 = vsel %vm1219, %v1879, 0
    %v1902 = vsel %vm1219, %v1880, 0
    %v1905 = vsel %vm1219, %v1881, 0
    %v1908 = vsel %vm1219, %v1882, 0
    %1910 = vmatpush.bf16.msra.mxu0 0
    %1911 = vmatpush.bf16.msra.mxu0 0
    %1912 = vmatpush.bf16.msra.mxu0 0
    %1913 = vmatpush.bf16.msra.mxu0 0
    %1914 = vmatpush.bf16.msra.mxu0 0
    %1915 = vmatpush.bf16.msra.mxu0 0
    %1916 = vmatpush.bf16.msra.mxu0 %v1895
    %1917 = vmatpush.bf16.msra.mxu0 %v1894
    %1918 = vmatmul.bf16.gmra.mxu0 %v1899
    %v1919 = vpop.f32.mrf.mxu0
    %v1920 = vadd.f32 0.0, %v1919
    %v1921 = vpop.f32.mrf.mxu0
    %v1922 = vadd.f32 0.0, %v1921
    %1923 = vmatmul.bf16.gmra.mxu0 %v1902
    %v1924 = vpop.f32.mrf.mxu0
    %v1925 = vadd.f32 0.0, %v1924
    %v1926 = vpop.f32.mrf.mxu0
    %v1927 = vadd.f32 0.0, %v1926
    %1928 = vmatmul.bf16.gmra.mxu0 %v1905
    %v1929 = vpop.f32.mrf.mxu0
    %v1930 = vadd.f32 0.0, %v1929
    %v1931 = vpop.f32.mrf.mxu0
    %v1932 = vadd.f32 0.0, %v1931
    %1933 = vmatmul.bf16.gmra.mxu0 %v1908
    %v1934 = vpop.f32.mrf.mxu0
    %v1935 = vadd.f32 0.0, %v1934
    %v1936 = vpop.f32.mrf.mxu0
    %v1937 = vadd.f32 0.0, %v1936
    %1938 = vdwg.mxu0
    %v1939 = vadd.f32 %v1844, %v1920
    %v1940 = vadd.f32 %v1845, %v1922
    %v1941 = vadd.f32 %v1846, %v1925
    %v1942 = vadd.f32 %v1847, %v1927
    %v1943 = vadd.f32 %v1848, %v1930
    %v1944 = vadd.f32 %v1849, %v1932
    %v1945 = vadd.f32 %v1850, %v1935
    %v1946 = vadd.f32 %v1851, %v1937
    %s1947 = scalar_lea.vmem %s7, 256
    %v1948 = vld [vmem:[%s1947] sm:$0xf]
    %v1949 = vld [vmem:[%s1947 + $0x4] sm:$0xf]
    %v1950 = vld [vmem:[%s1947 + $0x8] sm:$0xf]
    %v1951 = vld [vmem:[%s1947 + $0xc] sm:$0xf]
    %v1952 = vld [vmem:[%s1947 + $0x10] sm:$0xf]
    %v1953 = vld [vmem:[%s1947 + $0x14] sm:$0xf]
    %v1954 = vld [vmem:[%s1947 + $0x18] sm:$0xf]
    %v1955 = vld [vmem:[%s1947 + $0x1c] sm:$0xf]
    %v1964 = vunpack.c.l.b16 %v1948
    %v1965 = vunpack.c.l.b16 %v1949
    %v1966 = vunpack.c.l.b16 %v1950
    %v1967 = vunpack.c.l.b16 %v1951
    %v1968 = vunpack.c.l.b16 %v1952
    %v1969 = vunpack.c.l.b16 %v1953
    %v1970 = vunpack.c.l.b16 %v1954
    %v1971 = vunpack.c.l.b16 %v1955
    %v1972 = vpack.c.b16 %v1965, %v1964
    %v1973 = vpack.c.b16 %v1967, %v1966
    %v1974 = vpack.c.b16 %v1969, %v1968
    %v1975 = vpack.c.b16 %v1971, %v1970
    %1976 = vrot.lane.b32.xlu0 %v1852, 112
    %v1977 = vpop.permute.xlu0 %1976
    %1978 = vrot.lane.b32.xlu0 %v1853, 112
    %v1979 = vpop.permute.xlu0 %1978
    %v1983 = vsel %vm1219, %v1972, 0
    %v1986 = vsel %vm1219, %v1973, 0
    %v1989 = vsel %vm1219, %v1974, 0
    %v1992 = vsel %vm1219, %v1975, 0
    %1994 = vmatpush.bf16.msra.mxu0 0
    %1995 = vmatpush.bf16.msra.mxu0 0
    %1996 = vmatpush.bf16.msra.mxu0 0
    %1997 = vmatpush.bf16.msra.mxu0 0
    %1998 = vmatpush.bf16.msra.mxu0 0
    %1999 = vmatpush.bf16.msra.mxu0 0
    %2000 = vmatpush.bf16.msra.mxu0 %v1979
    %2001 = vmatpush.bf16.msra.mxu0 %v1977
    %2002 = vmatmul.bf16.gmra.mxu0 %v1983
    %v2003 = vpop.f32.mrf.mxu0
    %v2004 = vadd.f32 0.0, %v2003
    %v2005 = vpop.f32.mrf.mxu0
    %v2006 = vadd.f32 0.0, %v2005
    %2007 = vmatmul.bf16.gmra.mxu0 %v1986
    %v2008 = vpop.f32.mrf.mxu0
    %v2009 = vadd.f32 0.0, %v2008
    %v2010 = vpop.f32.mrf.mxu0
    %v2011 = vadd.f32 0.0, %v2010
    %2012 = vmatmul.bf16.gmra.mxu0 %v1989
    %v2013 = vpop.f32.mrf.mxu0
    %v2014 = vadd.f32 0.0, %v2013
    %v2015 = vpop.f32.mrf.mxu0
    %v2016 = vadd.f32 0.0, %v2015
    %2017 = vmatmul.bf16.gmra.mxu0 %v1992
    %v2018 = vpop.f32.mrf.mxu0
    %v2019 = vadd.f32 0.0, %v2018
    %v2020 = vpop.f32.mrf.mxu0
    %v2021 = vadd.f32 0.0, %v2020
    %2022 = vdwg.mxu0
    %v2023 = vadd.f32 %v1939, %v2004
    %v2024 = vadd.f32 %v1940, %v2006
    %v2025 = vadd.f32 %v1941, %v2009
    %v2026 = vadd.f32 %v1942, %v2011
    %v2027 = vadd.f32 %v1943, %v2014
    %v2028 = vadd.f32 %v1944, %v2016
    %v2029 = vadd.f32 %v1945, %v2019
    %v2030 = vadd.f32 %v1946, %v2021
    %s2031 = scalar_lea.vmem %s7, 288
    %v2032 = vld [vmem:[%s2031] sm:$0xf]
    %v2033 = vld [vmem:[%s2031 + $0x4] sm:$0xf]
    %v2034 = vld [vmem:[%s2031 + $0x8] sm:$0xf]
    %v2035 = vld [vmem:[%s2031 + $0xc] sm:$0xf]
    %v2036 = vld [vmem:[%s2031 + $0x10] sm:$0xf]
    %v2037 = vld [vmem:[%s2031 + $0x14] sm:$0xf]
    %v2038 = vld [vmem:[%s2031 + $0x18] sm:$0xf]
    %v2039 = vld [vmem:[%s2031 + $0x1c] sm:$0xf]
    %v2048 = vunpack.c.l.b16 %v2032
    %v2049 = vunpack.c.l.b16 %v2033
    %v2050 = vunpack.c.l.b16 %v2034
    %v2051 = vunpack.c.l.b16 %v2035
    %v2052 = vunpack.c.l.b16 %v2036
    %v2053 = vunpack.c.l.b16 %v2037
    %v2054 = vunpack.c.l.b16 %v2038
    %v2055 = vunpack.c.l.b16 %v2039
    %v2056 = vpack.c.b16 %v2049, %v2048
    %v2057 = vpack.c.b16 %v2051, %v2050
    %v2058 = vpack.c.b16 %v2053, %v2052
    %v2059 = vpack.c.b16 %v2055, %v2054
    %2060 = vrot.lane.b32.xlu0 %v1852, 94
    %v2061 = vpop.permute.xlu0 %2060
    %2062 = vrot.lane.b32.xlu0 %v1853, 94
    %v2063 = vpop.permute.xlu0 %2062
    %v2067 = vsel %vm1219, %v2056, 0
    %v2070 = vsel %vm1219, %v2057, 0
    %v2073 = vsel %vm1219, %v2058, 0
    %v2076 = vsel %vm1219, %v2059, 0
    %2078 = vmatpush.bf16.msra.mxu0 0
    %2079 = vmatpush.bf16.msra.mxu0 0
    %2080 = vmatpush.bf16.msra.mxu0 0
    %2081 = vmatpush.bf16.msra.mxu0 0
    %2082 = vmatpush.bf16.msra.mxu0 0
    %2083 = vmatpush.bf16.msra.mxu0 0
    %2084 = vmatpush.bf16.msra.mxu0 %v2063
    %2085 = vmatpush.bf16.msra.mxu0 %v2061
    %2086 = vmatmul.bf16.gmra.mxu0 %v2067
    %v2087 = vpop.f32.mrf.mxu0
    %v2088 = vadd.f32 0.0, %v2087
    %v2089 = vpop.f32.mrf.mxu0
    %v2090 = vadd.f32 0.0, %v2089
    %2091 = vmatmul.bf16.gmra.mxu0 %v2070
    %v2092 = vpop.f32.mrf.mxu0
    %v2093 = vadd.f32 0.0, %v2092
    %v2094 = vpop.f32.mrf.mxu0
    %v2095 = vadd.f32 0.0, %v2094
    %2096 = vmatmul.bf16.gmra.mxu0 %v2073
    %v2097 = vpop.f32.mrf.mxu0
    %v2098 = vadd.f32 0.0, %v2097
    %v2099 = vpop.f32.mrf.mxu0
    %v2100 = vadd.f32 0.0, %v2099
    %2101 = vmatmul.bf16.gmra.mxu0 %v2076
    %v2102 = vpop.f32.mrf.mxu0
    %v2103 = vadd.f32 0.0, %v2102
    %v2104 = vpop.f32.mrf.mxu0
    %v2105 = vadd.f32 0.0, %v2104
    %2106 = vdwg.mxu0
    %v2107 = vadd.f32 %v2023, %v2088
    %v2108 = vadd.f32 %v2024, %v2090
    %v2109 = vadd.f32 %v2025, %v2093
    %v2110 = vadd.f32 %v2026, %v2095
    %v2111 = vadd.f32 %v2027, %v2098
    %v2112 = vadd.f32 %v2028, %v2100
    %v2113 = vadd.f32 %v2029, %v2103
    %v2114 = vadd.f32 %v2030, %v2105
    %s2115 = scalar_lea.vmem %s7, 320
    %v2116 = vld [vmem:[%s2115] sm:$0xf]
    %v2117 = vld [vmem:[%s2115 + $0x4] sm:$0xf]
    %v2118 = vld [vmem:[%s2115 + $0x8] sm:$0xf]
    %v2119 = vld [vmem:[%s2115 + $0xc] sm:$0xf]
    %v2120 = vld [vmem:[%s2115 + $0x10] sm:$0xf]
    %v2121 = vld [vmem:[%s2115 + $0x14] sm:$0xf]
    %v2122 = vld [vmem:[%s2115 + $0x18] sm:$0xf]
    %v2123 = vld [vmem:[%s2115 + $0x1c] sm:$0xf]
    %v2132 = vunpack.c.l.b16 %v2116
    %v2133 = vunpack.c.l.b16 %v2117
    %v2134 = vunpack.c.l.b16 %v2118
    %v2135 = vunpack.c.l.b16 %v2119
    %v2136 = vunpack.c.l.b16 %v2120
    %v2137 = vunpack.c.l.b16 %v2121
    %v2138 = vunpack.c.l.b16 %v2122
    %v2139 = vunpack.c.l.b16 %v2123
    %v2140 = vpack.c.b16 %v2133, %v2132
    %v2141 = vpack.c.b16 %v2135, %v2134
    %v2142 = vpack.c.b16 %v2137, %v2136
    %v2143 = vpack.c.b16 %v2139, %v2138
    %2144 = vrot.lane.b32.xlu0 %v1852, 76
    %v2145 = vpop.permute.xlu0 %2144
    %2146 = vrot.lane.b32.xlu0 %v1853, 76
    %v2147 = vpop.permute.xlu0 %2146
    %v2151 = vsel %vm1219, %v2140, 0
    %v2154 = vsel %vm1219, %v2141, 0
    %v2157 = vsel %vm1219, %v2142, 0
    %v2160 = vsel %vm1219, %v2143, 0
    %2162 = vmatpush.bf16.msra.mxu0 0
    %2163 = vmatpush.bf16.msra.mxu0 0
    %2164 = vmatpush.bf16.msra.mxu0 0
    %2165 = vmatpush.bf16.msra.mxu0 0
    %2166 = vmatpush.bf16.msra.mxu0 0
    %2167 = vmatpush.bf16.msra.mxu0 0
    %2168 = vmatpush.bf16.msra.mxu0 %v2147
    %2169 = vmatpush.bf16.msra.mxu0 %v2145
    %2170 = vmatmul.bf16.gmra.mxu0 %v2151
    %v2171 = vpop.f32.mrf.mxu0
    %v2172 = vadd.f32 0.0, %v2171
    %v2173 = vpop.f32.mrf.mxu0
    %v2174 = vadd.f32 0.0, %v2173
    %2175 = vmatmul.bf16.gmra.mxu0 %v2154
    %v2176 = vpop.f32.mrf.mxu0
    %v2177 = vadd.f32 0.0, %v2176
    %v2178 = vpop.f32.mrf.mxu0
    %v2179 = vadd.f32 0.0, %v2178
    %2180 = vmatmul.bf16.gmra.mxu0 %v2157
    %v2181 = vpop.f32.mrf.mxu0
    %v2182 = vadd.f32 0.0, %v2181
    %v2183 = vpop.f32.mrf.mxu0
    %v2184 = vadd.f32 0.0, %v2183
    %2185 = vmatmul.bf16.gmra.mxu0 %v2160
    %v2186 = vpop.f32.mrf.mxu0
    %v2187 = vadd.f32 0.0, %v2186
    %v2188 = vpop.f32.mrf.mxu0
    %v2189 = vadd.f32 0.0, %v2188
    %2190 = vdwg.mxu0
    %v2191 = vadd.f32 %v2107, %v2172
    %v2192 = vadd.f32 %v2108, %v2174
    %v2193 = vadd.f32 %v2109, %v2177
    %v2194 = vadd.f32 %v2110, %v2179
    %v2195 = vadd.f32 %v2111, %v2182
    %v2196 = vadd.f32 %v2112, %v2184
    %v2197 = vadd.f32 %v2113, %v2187
    %v2198 = vadd.f32 %v2114, %v2189
    %s2199 = scalar_lea.vmem %s7, 352
    %v2200 = vld [vmem:[%s2199] sm:$0xf]
    %v2201 = vld [vmem:[%s2199 + $0x4] sm:$0xf]
    %v2202 = vld [vmem:[%s2199 + $0x8] sm:$0xf]
    %v2203 = vld [vmem:[%s2199 + $0xc] sm:$0xf]
    %v2204 = vld [vmem:[%s2199 + $0x10] sm:$0xf]
    %v2205 = vld [vmem:[%s2199 + $0x14] sm:$0xf]
    %v2206 = vld [vmem:[%s2199 + $0x18] sm:$0xf]
    %v2207 = vld [vmem:[%s2199 + $0x1c] sm:$0xf]
    %v2216 = vunpack.c.l.b16 %v2200
    %v2217 = vunpack.c.l.b16 %v2201
    %v2218 = vunpack.c.l.b16 %v2202
    %v2219 = vunpack.c.l.b16 %v2203
    %v2220 = vunpack.c.l.b16 %v2204
    %v2221 = vunpack.c.l.b16 %v2205
    %v2222 = vunpack.c.l.b16 %v2206
    %v2223 = vunpack.c.l.b16 %v2207
    %v2224 = vpack.c.b16 %v2217, %v2216
    %v2225 = vpack.c.b16 %v2219, %v2218
    %v2226 = vpack.c.b16 %v2221, %v2220
    %v2227 = vpack.c.b16 %v2223, %v2222
    %2228 = vrot.lane.b32.xlu0 %v1852, 58
    %v2229 = vpop.permute.xlu0 %2228
    %2230 = vrot.lane.b32.xlu0 %v1853, 58
    %v2231 = vpop.permute.xlu0 %2230
    %v2235 = vsel %vm1219, %v2224, 0
    %v2238 = vsel %vm1219, %v2225, 0
    %v2241 = vsel %vm1219, %v2226, 0
    %v2244 = vsel %vm1219, %v2227, 0
    %2246 = vmatpush.bf16.msra.mxu0 0
    %2247 = vmatpush.bf16.msra.mxu0 0
    %2248 = vmatpush.bf16.msra.mxu0 0
    %2249 = vmatpush.bf16.msra.mxu0 0
    %2250 = vmatpush.bf16.msra.mxu0 0
    %2251 = vmatpush.bf16.msra.mxu0 0
    %2252 = vmatpush.bf16.msra.mxu0 %v2231
    %2253 = vmatpush.bf16.msra.mxu0 %v2229
    %2254 = vmatmul.bf16.gmra.mxu0 %v2235
    %v2255 = vpop.f32.mrf.mxu0
    %v2256 = vadd.f32 0.0, %v2255
    %v2257 = vpop.f32.mrf.mxu0
    %v2258 = vadd.f32 0.0, %v2257
    %2259 = vmatmul.bf16.gmra.mxu0 %v2238
    %v2260 = vpop.f32.mrf.mxu0
    %v2261 = vadd.f32 0.0, %v2260
    %v2262 = vpop.f32.mrf.mxu0
    %v2263 = vadd.f32 0.0, %v2262
    %2264 = vmatmul.bf16.gmra.mxu0 %v2241
    %v2265 = vpop.f32.mrf.mxu0
    %v2266 = vadd.f32 0.0, %v2265
    %v2267 = vpop.f32.mrf.mxu0
    %v2268 = vadd.f32 0.0, %v2267
    %2269 = vmatmul.bf16.gmra.mxu0 %v2244
    %v2270 = vpop.f32.mrf.mxu0
    %v2271 = vadd.f32 0.0, %v2270
    %v2272 = vpop.f32.mrf.mxu0
    %v2273 = vadd.f32 0.0, %v2272
    %2274 = vdwg.mxu0
    %v2275 = vadd.f32 %v2191, %v2256
    %v2276 = vadd.f32 %v2192, %v2258
    %v2277 = vadd.f32 %v2193, %v2261
    %v2278 = vadd.f32 %v2194, %v2263
    %v2279 = vadd.f32 %v2195, %v2266
    %v2280 = vadd.f32 %v2196, %v2268
    %v2281 = vadd.f32 %v2197, %v2271
    %v2282 = vadd.f32 %v2198, %v2273
    %s2283 = scalar_lea.vmem %s7, 384
    %v2284 = vld [vmem:[%s2283] sm:$0xf]
    %v2285 = vld [vmem:[%s2283 + $0x4] sm:$0xf]
    %v2286 = vld [vmem:[%s2283 + $0x8] sm:$0xf]
    %v2287 = vld [vmem:[%s2283 + $0xc] sm:$0xf]
    %v2288 = vld [vmem:[%s2283 + $0x10] sm:$0xf]
    %v2289 = vld [vmem:[%s2283 + $0x14] sm:$0xf]
    %v2290 = vld [vmem:[%s2283 + $0x18] sm:$0xf]
    %v2291 = vld [vmem:[%s2283 + $0x1c] sm:$0xf]
    %v2300 = vunpack.c.l.b16 %v2284
    %v2301 = vunpack.c.l.b16 %v2285
    %v2302 = vunpack.c.l.b16 %v2286
    %v2303 = vunpack.c.l.b16 %v2287
    %v2304 = vunpack.c.l.b16 %v2288
    %v2305 = vunpack.c.l.b16 %v2289
    %v2306 = vunpack.c.l.b16 %v2290
    %v2307 = vunpack.c.l.b16 %v2291
    %v2308 = vpack.c.b16 %v2301, %v2300
    %v2309 = vpack.c.b16 %v2303, %v2302
    %v2310 = vpack.c.b16 %v2305, %v2304
    %v2311 = vpack.c.b16 %v2307, %v2306
    %2312 = vrot.lane.b32.xlu0 %v1852, 40
    %v2313 = vpop.permute.xlu0 %2312
    %2314 = vrot.lane.b32.xlu0 %v1853, 40
    %v2315 = vpop.permute.xlu0 %2314
    %v2319 = vsel %vm1219, %v2308, 0
    %v2322 = vsel %vm1219, %v2309, 0
    %v2325 = vsel %vm1219, %v2310, 0
    %v2328 = vsel %vm1219, %v2311, 0
    %2330 = vmatpush.bf16.msra.mxu0 0
    %2331 = vmatpush.bf16.msra.mxu0 0
    %2332 = vmatpush.bf16.msra.mxu0 0
    %2333 = vmatpush.bf16.msra.mxu0 0
    %2334 = vmatpush.bf16.msra.mxu0 0
    %2335 = vmatpush.bf16.msra.mxu0 0
    %2336 = vmatpush.bf16.msra.mxu0 %v2315
    %2337 = vmatpush.bf16.msra.mxu0 %v2313
    %2338 = vmatmul.bf16.gmra.mxu0 %v2319
    %v2339 = vpop.f32.mrf.mxu0
    %v2340 = vadd.f32 0.0, %v2339
    %v2341 = vpop.f32.mrf.mxu0
    %v2342 = vadd.f32 0.0, %v2341
    %2343 = vmatmul.bf16.gmra.mxu0 %v2322
    %v2344 = vpop.f32.mrf.mxu0
    %v2345 = vadd.f32 0.0, %v2344
    %v2346 = vpop.f32.mrf.mxu0
    %v2347 = vadd.f32 0.0, %v2346
    %2348 = vmatmul.bf16.gmra.mxu0 %v2325
    %v2349 = vpop.f32.mrf.mxu0
    %v2350 = vadd.f32 0.0, %v2349
    %v2351 = vpop.f32.mrf.mxu0
    %v2352 = vadd.f32 0.0, %v2351
    %2353 = vmatmul.bf16.gmra.mxu0 %v2328
    %v2354 = vpop.f32.mrf.mxu0
    %v2355 = vadd.f32 0.0, %v2354
    %v2356 = vpop.f32.mrf.mxu0
    %v2357 = vadd.f32 0.0, %v2356
    %2358 = vdwg.mxu0
    %v2359 = vadd.f32 %v2275, %v2340
    %v2360 = vadd.f32 %v2276, %v2342
    %v2361 = vadd.f32 %v2277, %v2345
    %v2362 = vadd.f32 %v2278, %v2347
    %v2363 = vadd.f32 %v2279, %v2350
    %v2364 = vadd.f32 %v2280, %v2352
    %v2365 = vadd.f32 %v2281, %v2355
    %v2366 = vadd.f32 %v2282, %v2357
    %s2367 = scalar_lea.vmem %s7, 416
    %v2368 = vld [vmem:[%s2367] sm:$0xf]
    %v2369 = vld [vmem:[%s2367 + $0x4] sm:$0xf]
    %v2370 = vld [vmem:[%s2367 + $0x8] sm:$0xf]
    %v2371 = vld [vmem:[%s2367 + $0xc] sm:$0xf]
    %v2372 = vld [vmem:[%s2367 + $0x10] sm:$0xf]
    %v2373 = vld [vmem:[%s2367 + $0x14] sm:$0xf]
    %v2374 = vld [vmem:[%s2367 + $0x18] sm:$0xf]
    %v2375 = vld [vmem:[%s2367 + $0x1c] sm:$0xf]
    %v2384 = vunpack.c.l.b16 %v2368
    %v2385 = vunpack.c.l.b16 %v2369
    %v2386 = vunpack.c.l.b16 %v2370
    %v2387 = vunpack.c.l.b16 %v2371
    %v2388 = vunpack.c.l.b16 %v2372
    %v2389 = vunpack.c.l.b16 %v2373
    %v2390 = vunpack.c.l.b16 %v2374
    %v2391 = vunpack.c.l.b16 %v2375
    %v2392 = vpack.c.b16 %v2385, %v2384
    %v2393 = vpack.c.b16 %v2387, %v2386
    %v2394 = vpack.c.b16 %v2389, %v2388
    %v2395 = vpack.c.b16 %v2391, %v2390
    %2396 = vrot.lane.b32.xlu0 %v1852, 22
    %v2397 = vpop.permute.xlu0 %2396
    %2398 = vrot.lane.b32.xlu0 %v1853, 22
    %v2399 = vpop.permute.xlu0 %2398
    %v2403 = vsel %vm1219, %v2392, 0
    %v2406 = vsel %vm1219, %v2393, 0
    %v2409 = vsel %vm1219, %v2394, 0
    %v2412 = vsel %vm1219, %v2395, 0
    %2414 = vmatpush.bf16.msra.mxu0 0
    %2415 = vmatpush.bf16.msra.mxu0 0
    %2416 = vmatpush.bf16.msra.mxu0 0
    %2417 = vmatpush.bf16.msra.mxu0 0
    %2418 = vmatpush.bf16.msra.mxu0 0
    %2419 = vmatpush.bf16.msra.mxu0 0
    %2420 = vmatpush.bf16.msra.mxu0 %v2399
    %2421 = vmatpush.bf16.msra.mxu0 %v2397
    %2422 = vmatmul.bf16.gmra.mxu0 %v2403
    %v2423 = vpop.f32.mrf.mxu0
    %v2424 = vadd.f32 0.0, %v2423
    %v2425 = vpop.f32.mrf.mxu0
    %v2426 = vadd.f32 0.0, %v2425
    %2427 = vmatmul.bf16.gmra.mxu0 %v2406
    %v2428 = vpop.f32.mrf.mxu0
    %v2429 = vadd.f32 0.0, %v2428
    %v2430 = vpop.f32.mrf.mxu0
    %v2431 = vadd.f32 0.0, %v2430
    %2432 = vmatmul.bf16.gmra.mxu0 %v2409
    %v2433 = vpop.f32.mrf.mxu0
    %v2434 = vadd.f32 0.0, %v2433
    %v2435 = vpop.f32.mrf.mxu0
    %v2436 = vadd.f32 0.0, %v2435
    %2437 = vmatmul.bf16.gmra.mxu0 %v2412
    %v2438 = vpop.f32.mrf.mxu0
    %v2439 = vadd.f32 0.0, %v2438
    %v2440 = vpop.f32.mrf.mxu0
    %v2441 = vadd.f32 0.0, %v2440
    %2442 = vdwg.mxu0
    %v2443 = vadd.f32 %v2359, %v2424
    %v2444 = vadd.f32 %v2360, %v2426
    %v2445 = vadd.f32 %v2361, %v2429
    %v2446 = vadd.f32 %v2362, %v2431
    %v2447 = vadd.f32 %v2363, %v2434
    %v2448 = vadd.f32 %v2364, %v2436
    %v2449 = vadd.f32 %v2365, %v2439
    %v2450 = vadd.f32 %v2366, %v2441
    %v2451 = vpack.c.bf16 %v1276, %v1274
    %v2452 = vpack.c.bf16 %v1281, %v1279
    %s2453 = scalar_lea.vmem %s7, 448
    %v2454 = vld [vmem:[%s2453] sm:$0xf]
    %v2455 = vld [vmem:[%s2453 + $0x4] sm:$0xf]
    %v2456 = vld [vmem:[%s2453 + $0x8] sm:$0xf]
    %v2457 = vld [vmem:[%s2453 + $0xc] sm:$0xf]
    %v2458 = vld [vmem:[%s2453 + $0x10] sm:$0xf]
    %v2459 = vld [vmem:[%s2453 + $0x14] sm:$0xf]
    %v2460 = vld [vmem:[%s2453 + $0x18] sm:$0xf]
    %v2461 = vld [vmem:[%s2453 + $0x1c] sm:$0xf]
    %v2470 = vunpack.c.l.b16 %v2454
    %v2471 = vunpack.c.l.b16 %v2455
    %v2472 = vunpack.c.l.b16 %v2456
    %v2473 = vunpack.c.l.b16 %v2457
    %v2474 = vunpack.c.l.b16 %v2458
    %v2475 = vunpack.c.l.b16 %v2459
    %v2476 = vunpack.c.l.b16 %v2460
    %v2477 = vunpack.c.l.b16 %v2461
    %v2478 = vpack.c.b16 %v2471, %v2470
    %v2479 = vpack.c.b16 %v2473, %v2472
    %v2480 = vpack.c.b16 %v2475, %v2474
    %v2481 = vpack.c.b16 %v2477, %v2476
    %2484 = vrot.lane.b32.xlu0 %v1852, 4
    %v2485 = vpop.permute.xlu0 %2484
    %2486 = vrot.lane.b32.xlu0 %v2451, 4
    %v2487 = vpop.permute.xlu0 %2486
    %2488 = vrot.lane.b32.xlu0 %v1853, 4
    %v2489 = vpop.permute.xlu0 %2488
    %2490 = vrot.lane.b32.xlu0 %v2452, 4
    %v2491 = vpop.permute.xlu0 %2490
    %vm2492 = vcmask 31744
    %v2493 = vsel %vm2492, %v2485, %v2487
    %v2494 = vsel %vm2492, %v2489, %v2491
    %v2498 = vsel %vm1219, %v2478, 0
    %v2501 = vsel %vm1219, %v2479, 0
    %v2504 = vsel %vm1219, %v2480, 0
    %v2507 = vsel %vm1219, %v2481, 0
    %2509 = vmatpush.bf16.msra.mxu0 0
    %2510 = vmatpush.bf16.msra.mxu0 0
    %2511 = vmatpush.bf16.msra.mxu0 0
    %2512 = vmatpush.bf16.msra.mxu0 0
    %2513 = vmatpush.bf16.msra.mxu0 0
    %2514 = vmatpush.bf16.msra.mxu0 0
    %2515 = vmatpush.bf16.msra.mxu0 %v2494
    %2516 = vmatpush.bf16.msra.mxu0 %v2493
    %2517 = vmatmul.bf16.gmra.mxu0 %v2498
    %v2518 = vpop.f32.mrf.mxu0
    %v2519 = vadd.f32 0.0, %v2518
    %v2520 = vpop.f32.mrf.mxu0
    %v2521 = vadd.f32 0.0, %v2520
    %2522 = vmatmul.bf16.gmra.mxu0 %v2501
    %v2523 = vpop.f32.mrf.mxu0
    %v2524 = vadd.f32 0.0, %v2523
    %v2525 = vpop.f32.mrf.mxu0
    %v2526 = vadd.f32 0.0, %v2525
    %2527 = vmatmul.bf16.gmra.mxu0 %v2504
    %v2528 = vpop.f32.mrf.mxu0
    %v2529 = vadd.f32 0.0, %v2528
    %v2530 = vpop.f32.mrf.mxu0
    %v2531 = vadd.f32 0.0, %v2530
    %2532 = vmatmul.bf16.gmra.mxu0 %v2507
    %v2533 = vpop.f32.mrf.mxu0
    %v2534 = vadd.f32 0.0, %v2533
    %v2535 = vpop.f32.mrf.mxu0
    %v2536 = vadd.f32 0.0, %v2535
    %2537 = vdwg.mxu0
    %v2538 = vadd.f32 %v2443, %v2519
    %v2539 = vadd.f32 %v2444, %v2521
    %v2540 = vadd.f32 %v2445, %v2524
    %v2541 = vadd.f32 %v2446, %v2526
    %v2542 = vadd.f32 %v2447, %v2529
    %v2543 = vadd.f32 %v2448, %v2531
    %v2544 = vadd.f32 %v2449, %v2534
    %v2545 = vadd.f32 %v2450, %v2536
    %s2546 = scalar_lea.vmem %s7, 480
    %v2547 = vld [vmem:[%s2546] sm:$0xf]
    %v2548 = vld [vmem:[%s2546 + $0x4] sm:$0xf]
    %v2549 = vld [vmem:[%s2546 + $0x8] sm:$0xf]
    %v2550 = vld [vmem:[%s2546 + $0xc] sm:$0xf]
    %v2551 = vld [vmem:[%s2546 + $0x10] sm:$0xf]
    %v2552 = vld [vmem:[%s2546 + $0x14] sm:$0xf]
    %v2553 = vld [vmem:[%s2546 + $0x18] sm:$0xf]
    %v2554 = vld [vmem:[%s2546 + $0x1c] sm:$0xf]
    %v2563 = vunpack.c.l.b16 %v2547
    %v2564 = vunpack.c.l.b16 %v2548
    %v2565 = vunpack.c.l.b16 %v2549
    %v2566 = vunpack.c.l.b16 %v2550
    %v2567 = vunpack.c.l.b16 %v2551
    %v2568 = vunpack.c.l.b16 %v2552
    %v2569 = vunpack.c.l.b16 %v2553
    %v2570 = vunpack.c.l.b16 %v2554
    %v2571 = vpack.c.b16 %v2564, %v2563
    %v2572 = vpack.c.b16 %v2566, %v2565
    %v2573 = vpack.c.b16 %v2568, %v2567
    %v2574 = vpack.c.b16 %v2570, %v2569
    %2575 = vrot.lane.b32.xlu0 %v2451, 114
    %v2576 = vpop.permute.xlu0 %2575
    %2577 = vrot.lane.b32.xlu0 %v2452, 114
    %v2578 = vpop.permute.xlu0 %2577
    %v2582 = vsel %vm1219, %v2571, 0
    %v2585 = vsel %vm1219, %v2572, 0
    %v2588 = vsel %vm1219, %v2573, 0
    %v2591 = vsel %vm1219, %v2574, 0
    %2593 = vmatpush.bf16.msra.mxu0 0
    %2594 = vmatpush.bf16.msra.mxu0 0
    %2595 = vmatpush.bf16.msra.mxu0 0
    %2596 = vmatpush.bf16.msra.mxu0 0
    %2597 = vmatpush.bf16.msra.mxu0 0
    %2598 = vmatpush.bf16.msra.mxu0 0
    %2599 = vmatpush.bf16.msra.mxu0 %v2578
    %2600 = vmatpush.bf16.msra.mxu0 %v2576
    %2601 = vmatmul.bf16.gmra.mxu0 %v2582
    %v2602 = vpop.f32.mrf.mxu0
    %v2603 = vadd.f32 0.0, %v2602
    %v2604 = vpop.f32.mrf.mxu0
    %v2605 = vadd.f32 0.0, %v2604
    %2606 = vmatmul.bf16.gmra.mxu0 %v2585
    %v2607 = vpop.f32.mrf.mxu0
    %v2608 = vadd.f32 0.0, %v2607
    %v2609 = vpop.f32.mrf.mxu0
    %v2610 = vadd.f32 0.0, %v2609
    %2611 = vmatmul.bf16.gmra.mxu0 %v2588
    %v2612 = vpop.f32.mrf.mxu0
    %v2613 = vadd.f32 0.0, %v2612
    %v2614 = vpop.f32.mrf.mxu0
    %v2615 = vadd.f32 0.0, %v2614
    %2616 = vmatmul.bf16.gmra.mxu0 %v2591
    %v2617 = vpop.f32.mrf.mxu0
    %v2618 = vadd.f32 0.0, %v2617
    %v2619 = vpop.f32.mrf.mxu0
    %v2620 = vadd.f32 0.0, %v2619
    %2621 = vdwg.mxu0
    %v2622 = vadd.f32 %v2538, %v2603
    %v2623 = vadd.f32 %v2539, %v2605
    %v2624 = vadd.f32 %v2540, %v2608
    %v2625 = vadd.f32 %v2541, %v2610
    %v2626 = vadd.f32 %v2542, %v2613
    %v2627 = vadd.f32 %v2543, %v2615
    %v2628 = vadd.f32 %v2544, %v2618
    %v2629 = vadd.f32 %v2545, %v2620
    %v2630 = vld [vmem:[%s8] sm:$0xff]
    %v2631 = vld [vmem:[%s8 + $0x8] sm:$0xff]
    %v2632 = vld [vmem:[%s8 + $0x10] sm:$0xff]
    %v2633 = vld [vmem:[%s8 + $0x18] sm:$0xff]
    %v2634 = vld [vmem:[%s8 + $0x20] sm:$0xff]
    %v2635 = vld [vmem:[%s8 + $0x28] sm:$0xff]
    %v2636 = vld [vmem:[%s8 + $0x30] sm:$0xff]
    %v2637 = vld [vmem:[%s8 + $0x38] sm:$0xff]
    %2639 = vset.pattern.permute.xlu0 0
    %2640 = vperm.xlu0 %2639, %v2630
    %v2641 = vpop.permute.xlu0 %2640
    %2644 = vset.pattern.permute.xlu0 0
    %2645 = vperm.xlu0 %2644, %v2631
    %v2646 = vpop.permute.xlu0 %2645
    %2649 = vset.pattern.permute.xlu0 0
    %2650 = vperm.xlu0 %2649, %v2632
    %v2651 = vpop.permute.xlu0 %2650
    %2654 = vset.pattern.permute.xlu0 0
    %2655 = vperm.xlu0 %2654, %v2633
    %v2656 = vpop.permute.xlu0 %2655
    %2659 = vset.pattern.permute.xlu0 0
    %2660 = vperm.xlu0 %2659, %v2634
    %v2661 = vpop.permute.xlu0 %2660
    %2664 = vset.pattern.permute.xlu0 0
    %2665 = vperm.xlu0 %2664, %v2635
    %v2666 = vpop.permute.xlu0 %2665
    %2669 = vset.pattern.permute.xlu0 0
    %2670 = vperm.xlu0 %2669, %v2636
    %v2671 = vpop.permute.xlu0 %2670
    %2674 = vset.pattern.permute.xlu0 0
    %2675 = vperm.xlu0 %2674, %v2637
    %v2676 = vpop.permute.xlu0 %2675
    %v2678 = vadd.f32 %v2622, %v2641
    %v2679 = vadd.f32 %v2623, %v2646
    %v2680 = vadd.f32 %v2624, %v2651
    %v2681 = vadd.f32 %v2625, %v2656
    %v2682 = vadd.f32 %v2626, %v2661
    %v2683 = vadd.f32 %v2627, %v2666
    %v2684 = vadd.f32 %v2628, %v2671
    %v2685 = vadd.f32 %v2629, %v2676
    %vm2686 = vcmp.ge.f32.partialorder %v2678, 0.0
    %vm2687 = vcmp.ge.f32.partialorder %v2679, 0.0
    %vm2688 = vcmp.ge.f32.partialorder %v2680, 0.0
    %vm2689 = vcmp.ge.f32.partialorder %v2681, 0.0
    %vm2690 = vcmp.ge.f32.partialorder %v2682, 0.0
    %vm2691 = vcmp.ge.f32.partialorder %v2683, 0.0
    %vm2692 = vcmp.ge.f32.partialorder %v2684, 0.0
    %vm2693 = vcmp.ge.f32.partialorder %v2685, 0.0
    %v2694 = vmul.f32 %v2678, 0.2
    %v2695 = vmul.f32 %v2679, 0.2
    %v2696 = vmul.f32 %v2680, 0.2
    %v2697 = vmul.f32 %v2681, 0.2
    %v2698 = vmul.f32 %v2682, 0.2
    %v2699 = vmul.f32 %v2683, 0.2
    %v2700 = vmul.f32 %v2684, 0.2
    %v2701 = vmul.f32 %v2685, 0.2
    %v2702 = vsel %vm2686, %v2678, %v2694
    %v2703 = vsel %vm2687, %v2679, %v2695
    %v2704 = vsel %vm2688, %v2680, %v2696
    %v2705 = vsel %vm2689, %v2681, %v2697
    %v2706 = vsel %vm2690, %v2682, %v2698
    %v2707 = vsel %vm2691, %v2683, %v2699
    %v2708 = vsel %vm2692, %v2684, %v2700
    %v2709 = vsel %vm2693, %v2685, %v2701
    %v2710 = vpack.c.bf16 %v2703, %v2702
    %v2711 = vpack.c.bf16 %v2705, %v2704
    %v2712 = vpack.c.bf16 %v2707, %v2706
    %v2713 = vpack.c.bf16 %v2709, %v2708
    %v2714 = vld [vmem:[%s9] sm:$0xf]
    %v2715 = vld [vmem:[%s9 + $0x4] sm:$0xf]
    %v2716 = vld [vmem:[%s9 + $0x8] sm:$0x1]
    %v2720 = vunpack.c.l.b16 %v2714
    %v2721 = vunpack.c.l.b16 %v2715
    %v2722 = vunpack.c.l.b16 %v2716
    %v2723 = vpack.c.b16 %v2721, %v2720
    %v2724 = vpack.c.b16 %v2722, %v2722
    %vm2726 = vcmask 146432
    %v2728 = vsel %vm2726, %v2710, 0
    %v2731 = vsel %vm2726, %v2711, 0
    %v2734 = vsel %vm2726, %v2712, 0
    %v2737 = vsel %vm2726, %v2713, 0
    %vm2739 = vcmask 1040384
    %v2741 = vsel %vm2739, %v2724, 0
    %2743 = vmatpush.bf16.msra.mxu0 0
    %2744 = vmatpush.bf16.msra.mxu0 0
    %2745 = vmatpush.bf16.msra.mxu0 0
    %2746 = vmatpush.bf16.msra.mxu0 0
    %2747 = vmatpush.bf16.msra.mxu0 0
    %2748 = vmatpush.bf16.msra.mxu0 0
    %2749 = vmatpush.bf16.msra.mxu0 %v2741
    %2750 = vmatpush.bf16.msra.mxu0 %v2723
    %2751 = vmatmul.bf16.gmra.mxu0 %v2728
    %v2752 = vpop.f32.mrf.mxu0
    %v2753 = vadd.f32 0.0, %v2752
    %v2754 = vpop.f32.mrf.mxu0
    %v2755 = vadd.f32 0.0, %v2754
    %2756 = vmatmul.bf16.gmra.mxu0 %v2731
    %v2757 = vpop.f32.mrf.mxu0
    %v2758 = vadd.f32 0.0, %v2757
    %v2759 = vpop.f32.mrf.mxu0
    %v2760 = vadd.f32 0.0, %v2759
    %2761 = vmatmul.bf16.gmra.mxu0 %v2734
    %v2762 = vpop.f32.mrf.mxu0
    %v2763 = vadd.f32 0.0, %v2762
    %v2764 = vpop.f32.mrf.mxu0
    %v2765 = vadd.f32 0.0, %v2764
    %2766 = vmatmul.bf16.gmra.mxu0 %v2737
    %v2767 = vpop.f32.mrf.mxu0
    %v2768 = vadd.f32 0.0, %v2767
    %v2769 = vpop.f32.mrf.mxu0
    %v2770 = vadd.f32 0.0, %v2769
    %2771 = vdwg.mxu0
    %v2772 = vpack.c.bf16 %v2755, %v2753
    %v2773 = vpack.c.bf16 %v2760, %v2758
    %v2774 = vpack.c.bf16 %v2765, %v2763
    %v2775 = vpack.c.bf16 %v2770, %v2768
    %v2776 = vld [vmem:[%s10] sm:$0x1]
    %s2777 = scalar_lea.vmem %s10, 1
    %v2778 = vld [vmem:[%s2777] sm:$0x1]
    %2783 = vrot.lane.b32.xlu0 %v2772, 120
    %v2784 = vpop.permute.xlu0 %2783
    %2785 = vrot.lane.b32.xlu0 %v2773, 120
    %v2786 = vpop.permute.xlu0 %2785
    %2787 = vrot.lane.b32.xlu0 %v2774, 120
    %v2788 = vpop.permute.xlu0 %2787
    %2789 = vrot.lane.b32.xlu0 %v2775, 120
    %v2790 = vpop.permute.xlu0 %2789
    %vm2795 = vcmask 523264
    %v2797 = vsel %vm2795, %v2778, 0
    %2799 = vmatpush.bf16.msra.mxu0 0
    %2800 = vmatpush.bf16.msra.mxu0 0
    %2801 = vmatpush.bf16.msra.mxu0 0
    %2802 = vmatpush.bf16.msra.mxu0 0
    %2803 = vmatpush.bf16.msra.mxu0 %v2790
    %2804 = vmatpush.bf16.msra.mxu0 %v2788
    %2805 = vmatpush.bf16.msra.mxu0 %v2786
    %2806 = vmatpush.bf16.msra.mxu0 %v2784
    %2807 = vmatmul.bf16.gmra.mxu0 %v2797
    %v2808 = vpop.f32.mrf.mxu0
    %v2809 = vadd.f32 0.0, %v2808
    %v2810 = vpop.f32.mrf.mxu0
    %2811 = vdwg.mxu0
    %v2813 = vsel %vm2795, %v2776, 0
    %2815 = vmatpush.bf16.msra.mxu0 0
    %2816 = vmatpush.bf16.msra.mxu0 0
    %2817 = vmatpush.bf16.msra.mxu0 0
    %2818 = vmatpush.bf16.msra.mxu0 0
    %2819 = vmatpush.bf16.msra.mxu0 %v2775
    %2820 = vmatpush.bf16.msra.mxu0 %v2774
    %2821 = vmatpush.bf16.msra.mxu0 %v2773
    %2822 = vmatpush.bf16.msra.mxu0 %v2772
    %2823 = vmatmul.bf16.gmra.mxu0 %v2813
    %v2824 = vpop.f32.mrf.mxu0
    %v2825 = vadd.f32 %v2809, %v2824
    %v2826 = vpop.f32.mrf.mxu0
    %2827 = vdwg.mxu0
    %s2828 = scalar_lea.vmem %s10, 2
    %v2829 = vld [vmem:[%s2828] sm:$0x1]
    %2830 = vrot.lane.b32.xlu0 %v2772, 112
    %v2831 = vpop.permute.xlu0 %2830
    %2832 = vrot.lane.b32.xlu0 %v2773, 112
    %v2833 = vpop.permute.xlu0 %2832
    %2834 = vrot.lane.b32.xlu0 %v2774, 112
    %v2835 = vpop.permute.xlu0 %2834
    %2836 = vrot.lane.b32.xlu0 %v2775, 112
    %v2837 = vpop.permute.xlu0 %2836
    %v2843 = vsel %vm2795, %v2829, 0
    %2845 = vmatpush.bf16.msra.mxu0 0
    %2846 = vmatpush.bf16.msra.mxu0 0
    %2847 = vmatpush.bf16.msra.mxu0 0
    %2848 = vmatpush.bf16.msra.mxu0 0
    %2849 = vmatpush.bf16.msra.mxu0 %v2837
    %2850 = vmatpush.bf16.msra.mxu0 %v2835
    %2851 = vmatpush.bf16.msra.mxu0 %v2833
    %2852 = vmatpush.bf16.msra.mxu0 %v2831
    %2853 = vmatmul.bf16.gmra.mxu0 %v2843
    %v2854 = vpop.f32.mrf.mxu0
    %v2855 = vadd.f32 0.0, %v2854
    %v2856 = vpop.f32.mrf.mxu0
    %2857 = vdwg.mxu0
    %v2858 = vadd.f32 %v2825, %v2855
    %s2859 = scalar_lea.vmem %s10, 3
    %v2860 = vld [vmem:[%s2859] sm:$0x1]
    %2861 = vrot.lane.b32.xlu0 %v2772, 104
    %v2862 = vpop.permute.xlu0 %2861
    %2863 = vrot.lane.b32.xlu0 %v2773, 104
    %v2864 = vpop.permute.xlu0 %2863
    %2865 = vrot.lane.b32.xlu0 %v2774, 104
    %v2866 = vpop.permute.xlu0 %2865
    %2867 = vrot.lane.b32.xlu0 %v2775, 104
    %v2868 = vpop.permute.xlu0 %2867
    %v2874 = vsel %vm2795, %v2860, 0
    %2876 = vmatpush.bf16.msra.mxu0 0
    %2877 = vmatpush.bf16.msra.mxu0 0
    %2878 = vmatpush.bf16.msra.mxu0 0
    %2879 = vmatpush.bf16.msra.mxu0 0
    %2880 = vmatpush.bf16.msra.mxu0 %v2868
    %2881 = vmatpush.bf16.msra.mxu0 %v2866
    %2882 = vmatpush.bf16.msra.mxu0 %v2864
    %2883 = vmatpush.bf16.msra.mxu0 %v2862
    %2884 = vmatmul.bf16.gmra.mxu0 %v2874
    %v2885 = vpop.f32.mrf.mxu0
    %v2886 = vadd.f32 0.0, %v2885
    %v2887 = vpop.f32.mrf.mxu0
    %2888 = vdwg.mxu0
    %v2889 = vadd.f32 %v2858, %v2886
    %s2890 = scalar_lea.vmem %s10, 4
    %v2891 = vld [vmem:[%s2890] sm:$0x1]
    %2892 = vrot.lane.b32.xlu0 %v2772, 96
    %v2893 = vpop.permute.xlu0 %2892
    %2894 = vrot.lane.b32.xlu0 %v2773, 96
    %v2895 = vpop.permute.xlu0 %2894
    %2896 = vrot.lane.b32.xlu0 %v2774, 96
    %v2897 = vpop.permute.xlu0 %2896
    %2898 = vrot.lane.b32.xlu0 %v2775, 96
    %v2899 = vpop.permute.xlu0 %2898
    %v2905 = vsel %vm2795, %v2891, 0
    %2907 = vmatpush.bf16.msra.mxu0 0
    %2908 = vmatpush.bf16.msra.mxu0 0
    %2909 = vmatpush.bf16.msra.mxu0 0
    %2910 = vmatpush.bf16.msra.mxu0 0
    %2911 = vmatpush.bf16.msra.mxu0 %v2899
    %2912 = vmatpush.bf16.msra.mxu0 %v2897
    %2913 = vmatpush.bf16.msra.mxu0 %v2895
    %2914 = vmatpush.bf16.msra.mxu0 %v2893
    %2915 = vmatmul.bf16.gmra.mxu0 %v2905
    %v2916 = vpop.f32.mrf.mxu0
    %v2917 = vadd.f32 0.0, %v2916
    %v2918 = vpop.f32.mrf.mxu0
    %2919 = vdwg.mxu0
    %v2920 = vadd.f32 %v2889, %v2917
    %s2921 = scalar_lea.vmem %s10, 5
    %v2922 = vld [vmem:[%s2921] sm:$0x1]
    %2923 = vrot.lane.b32.xlu0 %v2772, 88
    %v2924 = vpop.permute.xlu0 %2923
    %2925 = vrot.lane.b32.xlu0 %v2773, 88
    %v2926 = vpop.permute.xlu0 %2925
    %2927 = vrot.lane.b32.xlu0 %v2774, 88
    %v2928 = vpop.permute.xlu0 %2927
    %2929 = vrot.lane.b32.xlu0 %v2775, 88
    %v2930 = vpop.permute.xlu0 %2929
    %v2936 = vsel %vm2795, %v2922, 0
    %2938 = vmatpush.bf16.msra.mxu0 0
    %2939 = vmatpush.bf16.msra.mxu0 0
    %2940 = vmatpush.bf16.msra.mxu0 0
    %2941 = vmatpush.bf16.msra.mxu0 0
    %2942 = vmatpush.bf16.msra.mxu0 %v2930
    %2943 = vmatpush.bf16.msra.mxu0 %v2928
    %2944 = vmatpush.bf16.msra.mxu0 %v2926
    %2945 = vmatpush.bf16.msra.mxu0 %v2924
    %2946 = vmatmul.bf16.gmra.mxu0 %v2936
    %v2947 = vpop.f32.mrf.mxu0
    %v2948 = vadd.f32 0.0, %v2947
    %v2949 = vpop.f32.mrf.mxu0
    %2950 = vdwg.mxu0
    %v2951 = vadd.f32 %v2920, %v2948
    %s2952 = scalar_lea.vmem %s10, 6
    %v2953 = vld [vmem:[%s2952] sm:$0x1]
    %2954 = vrot.lane.b32.xlu0 %v2772, 80
    %v2955 = vpop.permute.xlu0 %2954
    %2956 = vrot.lane.b32.xlu0 %v2773, 80
    %v2957 = vpop.permute.xlu0 %2956
    %2958 = vrot.lane.b32.xlu0 %v2774, 80
    %v2959 = vpop.permute.xlu0 %2958
    %2960 = vrot.lane.b32.xlu0 %v2775, 80
    %v2961 = vpop.permute.xlu0 %2960
    %v2967 = vsel %vm2795, %v2953, 0
    %2969 = vmatpush.bf16.msra.mxu0 0
    %2970 = vmatpush.bf16.msra.mxu0 0
    %2971 = vmatpush.bf16.msra.mxu0 0
    %2972 = vmatpush.bf16.msra.mxu0 0
    %2973 = vmatpush.bf16.msra.mxu0 %v2961
    %2974 = vmatpush.bf16.msra.mxu0 %v2959
    %2975 = vmatpush.bf16.msra.mxu0 %v2957
    %2976 = vmatpush.bf16.msra.mxu0 %v2955
    %2977 = vmatmul.bf16.gmra.mxu0 %v2967
    %v2978 = vpop.f32.mrf.mxu0
    %v2979 = vadd.f32 0.0, %v2978
    %v2980 = vpop.f32.mrf.mxu0
    %2981 = vdwg.mxu0
    %v2982 = vadd.f32 %v2951, %v2979
    %s2983 = scalar_lea.vmem %s10, 7
    %v2984 = vld [vmem:[%s2983] sm:$0x1]
    %2985 = vrot.lane.b32.xlu0 %v2772, 72
    %v2986 = vpop.permute.xlu0 %2985
    %2987 = vrot.lane.b32.xlu0 %v2773, 72
    %v2988 = vpop.permute.xlu0 %2987
    %2989 = vrot.lane.b32.xlu0 %v2774, 72
    %v2990 = vpop.permute.xlu0 %2989
    %2991 = vrot.lane.b32.xlu0 %v2775, 72
    %v2992 = vpop.permute.xlu0 %2991
    %v2998 = vsel %vm2795, %v2984, 0
    %3000 = vmatpush.bf16.msra.mxu0 0
    %3001 = vmatpush.bf16.msra.mxu0 0
    %3002 = vmatpush.bf16.msra.mxu0 0
    %3003 = vmatpush.bf16.msra.mxu0 0
    %3004 = vmatpush.bf16.msra.mxu0 %v2992
    %3005 = vmatpush.bf16.msra.mxu0 %v2990
    %3006 = vmatpush.bf16.msra.mxu0 %v2988
    %3007 = vmatpush.bf16.msra.mxu0 %v2986
    %3008 = vmatmul.bf16.gmra.mxu0 %v2998
    %v3009 = vpop.f32.mrf.mxu0
    %v3010 = vadd.f32 0.0, %v3009
    %v3011 = vpop.f32.mrf.mxu0
    %3012 = vdwg.mxu0
    %v3013 = vadd.f32 %v2982, %v3010
    %s3014 = scalar_lea.vmem %s10, 8
    %v3015 = vld [vmem:[%s3014] sm:$0x1]
    %3016 = vrot.lane.b32.xlu0 %v2772, 64
    %v3017 = vpop.permute.xlu0 %3016
    %3018 = vrot.lane.b32.xlu0 %v2773, 64
    %v3019 = vpop.permute.xlu0 %3018
    %3020 = vrot.lane.b32.xlu0 %v2774, 64
    %v3021 = vpop.permute.xlu0 %3020
    %3022 = vrot.lane.b32.xlu0 %v2775, 64
    %v3023 = vpop.permute.xlu0 %3022
    %v3029 = vsel %vm2795, %v3015, 0
    %3031 = vmatpush.bf16.msra.mxu0 0
    %3032 = vmatpush.bf16.msra.mxu0 0
    %3033 = vmatpush.bf16.msra.mxu0 0
    %3034 = vmatpush.bf16.msra.mxu0 0
    %3035 = vmatpush.bf16.msra.mxu0 %v3023
    %3036 = vmatpush.bf16.msra.mxu0 %v3021
    %3037 = vmatpush.bf16.msra.mxu0 %v3019
    %3038 = vmatpush.bf16.msra.mxu0 %v3017
    %3039 = vmatmul.bf16.gmra.mxu0 %v3029
    %v3040 = vpop.f32.mrf.mxu0
    %v3041 = vadd.f32 0.0, %v3040
    %v3042 = vpop.f32.mrf.mxu0
    %3043 = vdwg.mxu0
    %v3044 = vadd.f32 %v3013, %v3041
    %s3045 = scalar_lea.vmem %s10, 9
    %v3046 = vld [vmem:[%s3045] sm:$0x1]
    %3047 = vrot.lane.b32.xlu0 %v2772, 56
    %v3048 = vpop.permute.xlu0 %3047
    %3049 = vrot.lane.b32.xlu0 %v2773, 56
    %v3050 = vpop.permute.xlu0 %3049
    %3051 = vrot.lane.b32.xlu0 %v2774, 56
    %v3052 = vpop.permute.xlu0 %3051
    %3053 = vrot.lane.b32.xlu0 %v2775, 56
    %v3054 = vpop.permute.xlu0 %3053
    %v3060 = vsel %vm2795, %v3046, 0
    %3062 = vmatpush.bf16.msra.mxu0 0
    %3063 = vmatpush.bf16.msra.mxu0 0
    %3064 = vmatpush.bf16.msra.mxu0 0
    %3065 = vmatpush.bf16.msra.mxu0 0
    %3066 = vmatpush.bf16.msra.mxu0 %v3054
    %3067 = vmatpush.bf16.msra.mxu0 %v3052
    %3068 = vmatpush.bf16.msra.mxu0 %v3050
    %3069 = vmatpush.bf16.msra.mxu0 %v3048
    %3070 = vmatmul.bf16.gmra.mxu0 %v3060
    %v3071 = vpop.f32.mrf.mxu0
    %v3072 = vadd.f32 0.0, %v3071
    %v3073 = vpop.f32.mrf.mxu0
    %3074 = vdwg.mxu0
    %v3075 = vadd.f32 %v3044, %v3072
    %s3076 = scalar_lea.vmem %s10, 10
    %v3077 = vld [vmem:[%s3076] sm:$0x1]
    %3078 = vrot.lane.b32.xlu0 %v2772, 48
    %v3079 = vpop.permute.xlu0 %3078
    %3080 = vrot.lane.b32.xlu0 %v2773, 48
    %v3081 = vpop.permute.xlu0 %3080
    %3082 = vrot.lane.b32.xlu0 %v2774, 48
    %v3083 = vpop.permute.xlu0 %3082
    %3084 = vrot.lane.b32.xlu0 %v2775, 48
    %v3085 = vpop.permute.xlu0 %3084
    %v3091 = vsel %vm2795, %v3077, 0
    %3093 = vmatpush.bf16.msra.mxu0 0
    %3094 = vmatpush.bf16.msra.mxu0 0
    %3095 = vmatpush.bf16.msra.mxu0 0
    %3096 = vmatpush.bf16.msra.mxu0 0
    %3097 = vmatpush.bf16.msra.mxu0 %v3085
    %3098 = vmatpush.bf16.msra.mxu0 %v3083
    %3099 = vmatpush.bf16.msra.mxu0 %v3081
    %3100 = vmatpush.bf16.msra.mxu0 %v3079
    %3101 = vmatmul.bf16.gmra.mxu0 %v3091
    %v3102 = vpop.f32.mrf.mxu0
    %v3103 = vadd.f32 0.0, %v3102
    %v3104 = vpop.f32.mrf.mxu0
    %3105 = vdwg.mxu0
    %v3106 = vadd.f32 %v3075, %v3103
    %s3107 = scalar_lea.vmem %s10, 11
    %v3108 = vld [vmem:[%s3107] sm:$0x1]
    %3109 = vrot.lane.b32.xlu0 %v2772, 40
    %v3110 = vpop.permute.xlu0 %3109
    %3111 = vrot.lane.b32.xlu0 %v2773, 40
    %v3112 = vpop.permute.xlu0 %3111
    %3113 = vrot.lane.b32.xlu0 %v2774, 40
    %v3114 = vpop.permute.xlu0 %3113
    %3115 = vrot.lane.b32.xlu0 %v2775, 40
    %v3116 = vpop.permute.xlu0 %3115
    %v3122 = vsel %vm2795, %v3108, 0
    %3124 = vmatpush.bf16.msra.mxu0 0
    %3125 = vmatpush.bf16.msra.mxu0 0
    %3126 = vmatpush.bf16.msra.mxu0 0
    %3127 = vmatpush.bf16.msra.mxu0 0
    %3128 = vmatpush.bf16.msra.mxu0 %v3116
    %3129 = vmatpush.bf16.msra.mxu0 %v3114
    %3130 = vmatpush.bf16.msra.mxu0 %v3112
    %3131 = vmatpush.bf16.msra.mxu0 %v3110
    %3132 = vmatmul.bf16.gmra.mxu0 %v3122
    %v3133 = vpop.f32.mrf.mxu0
    %v3134 = vadd.f32 0.0, %v3133
    %v3135 = vpop.f32.mrf.mxu0
    %3136 = vdwg.mxu0
    %v3137 = vadd.f32 %v3106, %v3134
    %s3138 = scalar_lea.vmem %s10, 12
    %v3139 = vld [vmem:[%s3138] sm:$0x1]
    %3140 = vrot.lane.b32.xlu0 %v2772, 32
    %v3141 = vpop.permute.xlu0 %3140
    %3142 = vrot.lane.b32.xlu0 %v2773, 32
    %v3143 = vpop.permute.xlu0 %3142
    %3144 = vrot.lane.b32.xlu0 %v2774, 32
    %v3145 = vpop.permute.xlu0 %3144
    %3146 = vrot.lane.b32.xlu0 %v2775, 32
    %v3147 = vpop.permute.xlu0 %3146
    %v3153 = vsel %vm2795, %v3139, 0
    %3155 = vmatpush.bf16.msra.mxu0 0
    %3156 = vmatpush.bf16.msra.mxu0 0
    %3157 = vmatpush.bf16.msra.mxu0 0
    %3158 = vmatpush.bf16.msra.mxu0 0
    %3159 = vmatpush.bf16.msra.mxu0 %v3147
    %3160 = vmatpush.bf16.msra.mxu0 %v3145
    %3161 = vmatpush.bf16.msra.mxu0 %v3143
    %3162 = vmatpush.bf16.msra.mxu0 %v3141
    %3163 = vmatmul.bf16.gmra.mxu0 %v3153
    %v3164 = vpop.f32.mrf.mxu0
    %v3165 = vadd.f32 0.0, %v3164
    %v3166 = vpop.f32.mrf.mxu0
    %3167 = vdwg.mxu0
    %v3168 = vadd.f32 %v3137, %v3165
    %s3169 = scalar_lea.vmem %s10, 13
    %v3170 = vld [vmem:[%s3169] sm:$0x1]
    %3171 = vrot.lane.b32.xlu0 %v2772, 24
    %v3172 = vpop.permute.xlu0 %3171
    %3173 = vrot.lane.b32.xlu0 %v2773, 24
    %v3174 = vpop.permute.xlu0 %3173
    %3175 = vrot.lane.b32.xlu0 %v2774, 24
    %v3176 = vpop.permute.xlu0 %3175
    %3177 = vrot.lane.b32.xlu0 %v2775, 24
    %v3178 = vpop.permute.xlu0 %3177
    %v3184 = vsel %vm2795, %v3170, 0
    %3186 = vmatpush.bf16.msra.mxu0 0
    %3187 = vmatpush.bf16.msra.mxu0 0
    %3188 = vmatpush.bf16.msra.mxu0 0
    %3189 = vmatpush.bf16.msra.mxu0 0
    %3190 = vmatpush.bf16.msra.mxu0 %v3178
    %3191 = vmatpush.bf16.msra.mxu0 %v3176
    %3192 = vmatpush.bf16.msra.mxu0 %v3174
    %3193 = vmatpush.bf16.msra.mxu0 %v3172
    %3194 = vmatmul.bf16.gmra.mxu0 %v3184
    %v3195 = vpop.f32.mrf.mxu0
    %v3196 = vadd.f32 0.0, %v3195
    %v3197 = vpop.f32.mrf.mxu0
    %3198 = vdwg.mxu0
    %v3199 = vadd.f32 %v3168, %v3196
    %s3200 = scalar_lea.vmem %s10, 14
    %v3201 = vld [vmem:[%s3200] sm:$0x1]
    %3202 = vrot.lane.b32.xlu0 %v2772, 16
    %v3203 = vpop.permute.xlu0 %3202
    %3204 = vrot.lane.b32.xlu0 %v2773, 16
    %v3205 = vpop.permute.xlu0 %3204
    %3206 = vrot.lane.b32.xlu0 %v2774, 16
    %v3207 = vpop.permute.xlu0 %3206
    %3208 = vrot.lane.b32.xlu0 %v2775, 16
    %v3209 = vpop.permute.xlu0 %3208
    %v3215 = vsel %vm2795, %v3201, 0
    %3217 = vmatpush.bf16.msra.mxu0 0
    %3218 = vmatpush.bf16.msra.mxu0 0
    %3219 = vmatpush.bf16.msra.mxu0 0
    %3220 = vmatpush.bf16.msra.mxu0 0
    %3221 = vmatpush.bf16.msra.mxu0 %v3209
    %3222 = vmatpush.bf16.msra.mxu0 %v3207
    %3223 = vmatpush.bf16.msra.mxu0 %v3205
    %3224 = vmatpush.bf16.msra.mxu0 %v3203
    %3225 = vmatmul.bf16.gmra.mxu0 %v3215
    %v3226 = vpop.f32.mrf.mxu0
    %v3227 = vadd.f32 0.0, %v3226
    %v3228 = vpop.f32.mrf.mxu0
    %3229 = vdwg.mxu0
    %v3230 = vadd.f32 %v3199, %v3227
    %s3231 = scalar_lea.vmem %s10, 15
    %v3232 = vld [vmem:[%s3231] sm:$0x1]
    %3233 = vrot.lane.b32.xlu0 %v2772, 8
    %v3234 = vpop.permute.xlu0 %3233
    %3235 = vrot.lane.b32.xlu0 %v2773, 8
    %v3236 = vpop.permute.xlu0 %3235
    %3237 = vrot.lane.b32.xlu0 %v2774, 8
    %v3238 = vpop.permute.xlu0 %3237
    %3239 = vrot.lane.b32.xlu0 %v2775, 8
    %v3240 = vpop.permute.xlu0 %3239
    %v3246 = vsel %vm2795, %v3232, 0
    %3248 = vmatpush.bf16.msra.mxu0 0
    %3249 = vmatpush.bf16.msra.mxu0 0
    %3250 = vmatpush.bf16.msra.mxu0 0
    %3251 = vmatpush.bf16.msra.mxu0 0
    %3252 = vmatpush.bf16.msra.mxu0 %v3240
    %3253 = vmatpush.bf16.msra.mxu0 %v3238
    %3254 = vmatpush.bf16.msra.mxu0 %v3236
    %3255 = vmatpush.bf16.msra.mxu0 %v3234
    %3256 = vmatmul.bf16.gmra.mxu0 %v3246
    %v3257 = vpop.f32.mrf.mxu0
    %v3258 = vadd.f32 0.0, %v3257
    %v3259 = vpop.f32.mrf.mxu0
    %3260 = vdwg.mxu0
    %v3261 = vadd.f32 %v3230, %v3258
    %vm3262 = vcmask 57344
    %v3263 = vsel %vm3262, %v3261, 0.0
    %3264 = vadd.xlane.f32.xlu0 %v3263
    %v3265 = vpop.xlane.xlu0 %3264
    %v3266 = vrot.slane %v3265, 4
    %v3267 = vadd.f32 %v3265, %v3266
    %v3268 = vrot.slane %v3267, 2
    %v3269 = vadd.f32 %v3267, %v3268
    %v3270 = vrot.slane %v3269, 1
    %v3271 = vadd.f32 %v3269, %v3270
    %s3272 = vtos %v3271
    %s3273 = smul.f32 %s3272, 0.125
    %s3274 = sld [smem:[#allocation2]]
    %s3275 = sadd.f32 %s3273, %s3274
    %s3276 = ssub.f32 0.0, %s3275
    %s3277 = scalar_lea.smem [#allocation3], 0
    %3278 = sst [smem:[%s3277]] %s3276
    // Predicated region
    $region50: #{_lambda_.1} parent=1 // pred_check
      _
    $region51: #{_lambda_.1} parent=1 // pred_check_branch
      %3280 = sbr.rel (0) target = $region53
    $region52: #{_lambda_.1} parent=1 // pred_region
      %3282 = vsyncadd [#allocation4], 0
      %s3284 = sshll.u32 %s12, 4
      %s3285 = int_to_ptr.hbm [resolvable:$true] %s3284
      %3287 = dma.smem_to_hbm [#allocation3], 16, %s3285, [#allocation4]
    $region53: #{_lambda_.1} parent=1 // pred_fallthru
      _
    // Predicated region
    $region54: #{_lambda_.1} parent=1 // pred_check
      _
    $region55: #{_lambda_.1} parent=1 // pred_check_branch
      %3289 = sbr.rel (0) target = $region57
    $region56: #{_lambda_.1} parent=1 // pred_region
      %3291 = dma.done [#allocation4], 16
    $region57: #{_lambda_.1} parent=1 // pred_fallthru
      _
    %3292 = sfence
    %3293 = vsyncpa [#allocation4], 1

</llo_original>
